<compile_context>
chip_gen: v6e
topology: v6e:2x2x1
jax: 0.10.0
libtpu: 0.0.40
codegen_flags: <defaults>
</compile_context>

<pallas_src>
import numpy as np
import jax
import jax.numpy as jnp
from jax import lax
from jax.experimental import pallas as pl
from jax.experimental.pallas import tpu as pltpu


def _round_up(x, m):
    return ((x + m - 1) // m) * m


# ----------------------------------------------------------------------------
# Flattened-slab geometry.
#
# A channel is stored as a length-L lane vector s with
#   s[BASE + i*Wp + j] = img[i, j]   for valid (i, j), 0 elsewhere,
# where Wp = W + 2.  The two garbage columns per row and the 128-lane zero
# head/tail act as the 3x3 zero padding, so the conv output at flat position
# m = i*Wp + j is  sum_t w_t * s[m + OFF_t]  with static lane offsets
#   OFF_t = BASE - Wp - 1 + di*Wp + dj.
# Outputs are produced over the (H, Wp) grid (length Mp, a multiple of 128,
# lane-dense unmasked stores); garbage positions are masked with `valid`.
# ----------------------------------------------------------------------------
def _geom(H, W):
    Wp = W + 2
    Mo = H * Wp
    Mp = _round_up(Mo, 128)
    base = _round_up(Wp + 1, 128)
    L = _round_up(base + Mp + Wp + 1, 128)
    offs = tuple(base - Wp - 1 + di * Wp + dj for di in range(3) for dj in range(3))
    return dict(H=H, W=W, Wp=Wp, Mo=Mo, Mp=Mp, BASE=base, L=L, OFF=offs)


def _to_slab(x_nchw, geom, out_c, dtype):
    """NCHW image -> (B, out_c, L) slab (garbage columns / borders zeroed)."""
    B, C, H, W = x_nchw.shape
    xw = jnp.pad(x_nchw, ((0, 0), (0, 0), (0, 0), (0, geom["Wp"] - W)))
    flat = xw.reshape(B, C, geom["Mo"])
    slab = jnp.pad(flat, ((0, 0), (0, out_c - C),
                          (geom["BASE"], geom["L"] - geom["BASE"] - geom["Mo"])))
    return slab.astype(dtype)


def _from_lanes(y, geom, C):
    """(B, C, Mp) lane-dense output -> NCHW."""
    B = y.shape[0]
    img = y[:, :, :geom["Mo"]].reshape(B, C, geom["H"], geom["Wp"])
    return img[:, :, :, :geom["W"]]


def _pack_w(w, cin_pad):
    """(3,3,Cin,Cout) -> (Cout, 9*cin_pad) bf16; K index = tap*cin_pad + cin."""
    kh, kw, cin, cout = w.shape
    wt = jnp.transpose(w, (0, 1, 3, 2)).reshape(kh * kw, cout, cin)
    wt = jnp.pad(wt, ((0, 0), (0, 0), (0, cin_pad - cin)))
    wt = jnp.transpose(wt, (1, 0, 2)).reshape(cout, kh * kw * cin_pad)
    return wt.astype(jnp.bfloat16)


# ----------------------------------------------------------------------------
# Fused forward kernel (per batch element)
# ----------------------------------------------------------------------------
# TODO(synk): image_gradient/image_laplacian sources are not provided; Sobel-x,
# Sobel-y and a 4-neighbour Laplacian on the unweighted channel mean (|.|) are
# used (luma-weighted grayscale may differ from the reference).
_SOBEL_X = (-1., 0., 1., -2., 0., 2., -1., 0., 1.)
_SOBEL_Y = (-1., -2., -1., 0., 0., 0., 1., 2., 1.)
_LAPLACE = (0., 1., 0., 1., -4., 1., 0., 1., 0.)


def _make_fused_kernel(geom):
    Mp, L, Wp, BASE, OFF = geom["Mp"], geom["L"], geom["Wp"], geom["BASE"], geom["OFF"]
    HEAD, TAIL = BASE, L - BASE - Mp

    def kernel(xin_ref, gt_ref, msk_ref,
               wa_ref, wb_ref, we_ref, wf1_ref, wf2_ref, wg_ref,
               ba_ref, bb_ref, be_ref, bf_ref, bg_ref,
               img_ref, ep_ref, eg_ref, s_ref,
               sa_ref, sb_ref, su_ref, se_ref, sf_ref):
        valid = msk_ref[0:1, :]                      # (1, Mp) f32
        row_even = msk_ref[1:2, :] > 0.5
        col_even = msk_ref[2:3, :] > 0.5

        def pad_lanes(payload, dtype):
            c = payload.shape[0]
            return jnp.concatenate(
                [jnp.zeros((c, HEAD), dtype), payload.astype(dtype),
                 jnp.zeros((c, TAIL), dtype)], axis=1)

        def to_slab(y, dst_ref):
            # single full-width lane-aligned store (head|payload|tail, each 128k lanes)
            dst_ref[...] = pad_lanes(y * valid, dst_ref.dtype)

        def tap_rhs(slab_ref):
            # stack the 9 statically tap-shifted slabs on the contraction axis
            return jnp.concatenate([slab_ref[:, o:o + Mp] for o in OFF], axis=0)

        def conv(groups, b_ref, act):
            acc = None
            for slab_ref, w_ref in groups:
                d = jnp.dot(w_ref[...], tap_rhs(slab_ref),
                            preferred_element_type=jnp.float32)
                acc = d if acc is None else acc + d
            y = acc + b_ref[...]                      # (Cout, Mp) + (Cout, 1)
            if act == "relu":
                y = jnp.maximum(y, 0.0)
            elif act == "tanh":
                y = jnp.tanh(y)
            return y

        # ----------------- encoder (sharp path) -----------------
        # enc_a on fused concat(past, cur) (channels pre-stacked in the slab)
        to_slab(conv([(xin_ref, wa_ref)], ba_ref, "relu"), sa_ref)       # sharp_scale
        # enc_b at stride 1; stride-2 decimation is fused with the upsample below
        to_slab(conv([(sa_ref, wb_ref)], bb_ref, "relu"), sb_ref)

        # fused: nearest-2x upsample of the even-sampled enc_b output
        #   up[i, j] = y[2*(i//2), 2*(j//2)]  (parity select over 4 shifted reads)
        s00 = sb_ref[:, BASE:BASE + Mp]
        s01 = sb_ref[:, BASE - 1:BASE - 1 + Mp]
        s10 = sb_ref[:, BASE - Wp:BASE - Wp + Mp]
        s11 = sb_ref[:, BASE - Wp - 1:BASE - Wp - 1 + Mp]
        up = jnp.where(row_even, jnp.where(col_even, s00, s01),
                       jnp.where(col_even, s10, s11))
        to_slab(up, su_ref)

        # ----------------- decoder -----------------
        to_slab(conv([(su_ref, we_ref)], be_ref, "relu"), se_ref)
        # skip concat fused as a second matmul group
        to_slab(conv([(se_ref, wf1_ref), (sa_ref, wf2_ref)], bf_ref, "relu"), sf_ref)
        pred = conv([(sf_ref, wg_ref)], bg_ref, "tanh") * valid          # (C, Mp) f32
        img_ref[...] = pred

        # ----------------- fused edge / loss stage -----------------
        gt = gt_ref[...]                                                  # (C, L) f32
        gray_p = pad_lanes(jnp.sum(pred, axis=0, keepdims=True) * (1.0 / 3.0),
                           jnp.float32)                                   # (1, L)
        gray_g = jnp.sum(gt, axis=0, keepdims=True) * (1.0 / 3.0)         # (1, L)

        def stencil(g):
            gx = gy = lp = None
            for t, o in enumerate(OFF):
                slab = g[:, o:o + Mp]
                if _SOBEL_X[t]:
                    gx = _SOBEL_X[t] * slab if gx is None else gx + _SOBEL_X[t] * slab
                if _SOBEL_Y[t]:
                    gy = _SOBEL_Y[t] * slab if gy is None else gy + _SOBEL_Y[t] * slab
                if _LAPLACE[t]:
                    lp = _LAPLACE[t] * slab if lp is None else lp + _LAPLACE[t] * slab
            return jnp.abs(gx), jnp.abs(gy), jnp.abs(lp)

        pgx, pgy, plp = stencil(gray_p)
        tgx, tgy, tlp = stencil(gray_g)

        Pgx = jnp.where(pgx > 0.1, 0.99, pgx + 1e-4)
        Pgy = jnp.where(pgy > 0.1, 0.99, pgy + 1e-4)
        Plp = jnp.where(plp > 0.1, 0.99, plp + 1e-4)
        Tgx = jnp.where(tgx > 0.1, 1.0, 0.0)
        Tgy = jnp.where(tgy > 0.1, 1.0, 0.0)
        Tlp = jnp.where(tlp > 0.1, 1.0, 0.0)

        ep_ref[...] = (Pgx + Pgy + Plp) * valid
        eg_ref[...] = (Tgx + Tgy + Tlp) * valid

        # BCE with a single log per term (T is exactly 0/1)
        def bce_sum(P, T):
            return -jnp.sum(valid * jnp.log(jnp.where(T > 0.5, P, 1.0 - P)))

        gt_v = gt[:, BASE:BASE + Mp]                  # (C, Mp); zeros at invalid lanes
        diff = pred - gt_v
        vals = (bce_sum(Pgx, Tgx), bce_sum(Pgy, Tgy), bce_sum(Plp, Tlp),
                jnp.sum(diff * diff),                 # MSE sum
                jnp.sum(pred), jnp.sum(gt_v),         # SSIM statistics
                jnp.sum(pred * pred), jnp.sum(gt_v * gt_v), jnp.sum(pred * gt_v))
        lane = lax.broadcasted_iota(jnp.int32, (1, 128), 1)
        out = jnp.zeros((1, 128), jnp.float32)
        for k, v in enumerate(vals):
            out = out + jnp.where(lane == k, v, 0.0)
        s_ref[...] = out

    return kernel


def _run_fused(params, past, cur, gt):
    B, C, H, W = cur.shape
    geom = _geom(H, W)
    Mp, L = geom["Mp"], geom["L"]
    ch = params["enc_a"]["w"].shape[-1]
    cenc = params["enc_b"]["w"].shape[-1]
    cin0_pad = _round_up(2 * C, 8)

    xin = _to_slab(jnp.concatenate([past, cur], axis=1), geom, cin0_pad, jnp.bfloat16)
    gt_slab = _to_slab(gt, geom, C, jnp.float32)

    idx = np.arange(Mp)
    row, col = idx // geom["Wp"], idx % geom["Wp"]
    masks = jnp.asarray(np.stack([(idx < geom["Mo"]) & (col < W),
                                  (row % 2) == 0,
                                  (col % 2) == 0]).astype(np.float32))   # (3, Mp)

    wa = _pack_w(params["enc_a"]["w"], cin0_pad)
    wb = _pack_w(params["enc_b"]["w"], ch)
    we = _pack_w(params["dec_e"]["w"], cenc)
    wf = params["dec_f"]["w"]
    wf1 = _pack_w(wf[:, :, :ch, :], ch)
    wf2 = _pack_w(wf[:, :, ch:, :], ch)
    wg = _pack_w(params["dec_g"]["w"], ch)

    def b_(p):
        return p["b"].reshape(-1, 1).astype(jnp.float32)
    ba, bb, be, bf, bg = (b_(params["enc_a"]), b_(params["enc_b"]),
                          b_(params["dec_e"]), b_(params["dec_f"]),
                          b_(params["dec_g"]))

    def bcast2(a):
        return pl.BlockSpec(a.shape, lambda b: (0, 0))

    in_specs = [
        pl.BlockSpec((None, cin0_pad, L), lambda b: (b, 0, 0)),
        pl.BlockSpec((None, C, L), lambda b: (b, 0, 0)),
        bcast2(masks),
        bcast2(wa), bcast2(wb), bcast2(we), bcast2(wf1), bcast2(wf2), bcast2(wg),
        bcast2(ba), bcast2(bb), bcast2(be), bcast2(bf), bcast2(bg),
    ]
    out_shape = (jax.ShapeDtypeStruct((B, C, Mp), jnp.float32),
                 jax.ShapeDtypeStruct((B, 1, Mp), jnp.float32),
                 jax.ShapeDtypeStruct((B, 1, Mp), jnp.float32),
                 jax.ShapeDtypeStruct((B, 1, 128), jnp.float32))
    out_specs = (pl.BlockSpec((None, C, Mp), lambda b: (b, 0, 0)),
                 pl.BlockSpec((None, 1, Mp), lambda b: (b, 0, 0)),
                 pl.BlockSpec((None, 1, Mp), lambda b: (b, 0, 0)),
                 pl.BlockSpec((None, 1, 128), lambda b: (b, 0, 0)))
    scratch = [pltpu.VMEM((ch, L), jnp.bfloat16),     # sharp_scale slab
               pltpu.VMEM((cenc, L), jnp.bfloat16),   # enc_b (stride-1) slab
               pltpu.VMEM((cenc, L), jnp.bfloat16),   # upsampled slab
               pltpu.VMEM((ch, L), jnp.bfloat16),     # dec_e slab
               pltpu.VMEM((ch, L), jnp.bfloat16)]     # dec_f slab

    img, ep, eg, sums = pl.pallas_call(
        _make_fused_kernel(geom),
        out_shape=out_shape,
        grid=(B,),
        in_specs=in_specs,
        out_specs=out_specs,
        scratch_shapes=scratch,
        compiler_params=pltpu.CompilerParams(
            dimension_semantics=("parallel",)),
    )(xin, gt_slab, masks, wa, wb, we, wf1, wf2, wg, ba, bb, be, bf, bg)

    current_sharp = _from_lanes(img, geom, C)
    edge_p = _from_lanes(ep, geom, 1)
    edge_t = _from_lanes(eg, geom, 1)
    total = jnp.sum(sums[:, 0, :], axis=0)            # (128,) partial sums
    return current_sharp, edge_p, edge_t, total


# ----------------------------------------------------------------------------
# Parameter init (deterministic)
# ----------------------------------------------------------------------------
def _conv_params(key, kh, kw, cin, cout):
    w_key, b_key = jax.random.split(key)
    scale = 1.0 / jnp.sqrt(kh * kw * cin)
    w = jax.random.uniform(w_key, (kh, kw, cin, cout), jnp.float32, -scale, scale)
    b = jax.random.uniform(b_key, (cout,), jnp.float32, -scale, scale)
    return {"w": w, "b": b}


def init_params(key, c_enc=16, img_ch=3, ksize=3):
    keys = jax.random.split(key, 7)
    ch = c_enc // 2
    return {
        # Deblurring_net_encoder (sharp + blur paths)
        "enc_a": _conv_params(keys[0], ksize, ksize, 2 * img_ch, ch),
        "enc_b": _conv_params(keys[1], ksize, ksize, ch, c_enc),
        "enc_c": _conv_params(keys[2], ksize, ksize, img_ch, ch),
        "enc_d": _conv_params(keys[3], ksize, ksize, ch, c_enc),
        # Refinement_Decoder
        "dec_e": _conv_params(keys[4], ksize, ksize, c_enc, ch),
        "dec_f": _conv_params(keys[5], ksize, ksize, 2 * ch, ch),
        "dec_g": _conv_params(keys[6], ksize, ksize, ch, img_ch),
    }


# ----------------------------------------------------------------------------
# Blur_decoder forward ('train_image_deblurring')
# ----------------------------------------------------------------------------
def blur_decoder_forward(params, sharp_image, past_blur_image, current_blur_image,
                         mode="train_image_deblurring"):
    if mode != "train_image_deblurring":
        # TODO(synk): 'train_sequence'/'train_image_pred' need Positional_encoding
        # and Feature_predictor whose source is not provided.
        raise NotImplementedError(mode)

    # TODO(synk): torchvision uint8 histogram equalization of the GT has no Pallas
    # equivalent; identity used (the 255*(0.5x+0.5) round-trip alone is identity).
    sharp2 = sharp_image

    # NOTE: the blur-feature path (enc_c/enc_d) is dead in this mode (its outputs
    # are never used), so it is skipped -- XLA would DCE it anyway.
    current_sharp, edge_p, edge_t, total = _run_fused(
        params, past_blur_image, current_blur_image, sharp2)

    B, C, H, W = current_sharp.shape
    n_edge = B * H * W
    n_img = B * C * H * W
    grad_x_loss = total[0] / n_edge
    grad_y_loss = total[1] / n_edge
    laplacian_loss = total[2] / n_edge

    recon_loss = total[3] / n_img
    # TODO(synk): PSNR module source not provided; peak-to-peak 2 ([-1,1]) assumed.
    psnr = 10.0 * jnp.log10(4.0 / jnp.maximum(recon_loss, 1e-12))

    # TODO(synk): reference SSIM uses an 11x11 gaussian window; global-statistic
    # SSIM computed from the fused kernel's sums is used instead.
    mu_a = total[4] / n_img
    mu_b = total[5] / n_img
    var_a = total[6] / n_img - mu_a * mu_a
    var_b = total[7] / n_img - mu_b * mu_b
    cov = total[8] / n_img - mu_a * mu_b
    c1, c2 = 0.01 ** 2, 0.03 ** 2
    ssim = ((2 * mu_a * mu_b + c1) * (2 * cov + c2)) / (
        (mu_a * mu_a + mu_b * mu_b + c1) * (var_a + var_b + c2))

    edge_map = jnp.repeat(edge_p, 3, axis=1)
    edge_map_gt = jnp.repeat(edge_t, 3, axis=1)

    generation = [
        {0: current_sharp},
        {0: sharp_image},
        {0: edge_map / 1.5 - 1.0},
        {0: edge_map_gt / 1.5 - 1.0},
        {0: current_blur_image},
    ]
    aux = {"grad_x_loss": grad_x_loss, "grad_y_loss": grad_y_loss,
           "laplacian_loss": laplacian_loss}
    return generation, recon_loss, [psnr, ssim], aux


# ----------------------------------------------------------------------------
# Pure-JAX references for self-checking
# ----------------------------------------------------------------------------
def _ref_forward_xla(params, past, cur):
    def conv(x, w, b, act):
        y = lax.conv_general_dilated(
            x.astype(jnp.bfloat16).astype(jnp.float32),
            w.astype(jnp.bfloat16).astype(jnp.float32),
            (1, 1), ((1, 1), (1, 1)),
            dimension_numbers=("NCHW", "HWIO", "NCHW"))
        y = y + b.reshape(1, -1, 1, 1)
        if act == "relu":
            return jnp.maximum(y, 0.0)
        if act == "tanh":
            return jnp.tanh(y)
        return y

    sharp_scale = conv(jnp.concatenate([past, cur], axis=1),
                       params["enc_a"]["w"], params["enc_a"]["b"], "relu")
    feat_s1 = conv(sharp_scale, params["enc_b"]["w"], params["enc_b"]["b"], "relu")
    feat = feat_s1[:, :, ::2, ::2]
    up = jnp.repeat(jnp.repeat(feat, 2, axis=2), 2, axis=3)
    h = conv(up, params["dec_e"]["w"], params["dec_e"]["b"], "relu")
    h = conv(jnp.concatenate([h, sharp_scale], axis=1),
             params["dec_f"]["w"], params["dec_f"]["b"], "relu")
    return conv(h, params["dec_g"]["w"], params["dec_g"]["b"], "tanh")


def _ref_losses(pred, gt):
    B, C, H, W = pred.shape
    sx = np.array([[-1, 0, 1], [-2, 0, 2], [-1, 0, 1]], np.float32)
    sy = np.array([[-1, -2, -1], [0, 0, 0], [1, 2, 1]], np.float32)
    lpk = np.array([[0, 1, 0], [1, -4, 1], [0, 1, 0]], np.float32)

    def stencil(x, k):
        g = jnp.mean(x, axis=1, keepdims=True)
        gp = jnp.pad(g, ((0, 0), (0, 0), (1, 1), (1, 1)))
        out = 0.0
        for di in range(3):
            for dj in range(3):
                out = out + float(k[di, dj]) * gp[:, :, di:di + H, dj:dj + W]
        return jnp.abs(out)

    def bce(P, T):
        return -jnp.mean(T * jnp.log(P) + (1.0 - T) * jnp.log(1.0 - P))

    out = {}
    for name, k in (("gx", sx), ("gy", sy), ("lp", lpk)):
        p, t = stencil(pred, k), stencil(gt, k)
        P = jnp.where(p > 0.1, 0.99, p + 1e-4)
        T = jnp.where(t > 0.1, 1.0, 0.0)
        out[name] = bce(P, T)
    out["mse"] = jnp.mean((pred - gt) ** 2)
    return out


# ----------------------------------------------------------------------------
# main
# ----------------------------------------------------------------------------
if __name__ == "__main__":
    key = jax.random.PRNGKey(0)
    pkey, k1, k2, k3 = jax.random.split(key, 4)

    B, C, H, W = 2, 3, 16, 16
    C_ENC = 16

    params = init_params(pkey, c_enc=C_ENC, img_ch=C, ksize=3)
    sharp_image = jnp.tanh(jax.random.normal(k1, (B, C, H, W), jnp.float32))
    past_blur_image = jnp.tanh(jax.random.normal(k2, (B, C, H, W), jnp.float32))
    current_blur_image = jnp.tanh(jax.random.normal(k3, (B, C, H, W), jnp.float32))

    fwd = jax.jit(lambda p, s, pb, cb: blur_decoder_forward(
        p, s, pb, cb, mode="train_image_deblurring"))
    generation, loss, metric, aux = fwd(params, sharp_image,
                                        past_blur_image, current_blur_image)

    current_sharp = jax.block_until_ready(generation[0][0])
    loss = jax.block_until_ready(loss)
    jax.block_until_ready(metric[0])
    jax.block_until_ready(metric[1])
    jax.block_until_ready(aux["grad_x_loss"])

    # self-check 1: fused Pallas conv chain vs XLA reference (same bf16 operands)
    ref_img = _ref_forward_xla(params, past_blur_image, current_blur_image)
    img_err = float(jnp.max(jnp.abs(current_sharp - ref_img)))
    assert img_err < 5e-2, f"conv chain mismatch: {img_err}"

    # self-check 2: fused loss stage vs pure-JAX reference on the Pallas image
    ref = _ref_losses(current_sharp, sharp_image)
    assert abs(float(aux["grad_x_loss"]) - float(ref["gx"])) < 1e-3
    assert abs(float(aux["grad_y_loss"]) - float(ref["gy"])) < 1e-3
    assert abs(float(aux["laplacian_loss"]) - float(ref["lp"])) < 1e-3
    assert abs(float(loss) - float(ref["mse"])) < 1e-4

    assert generation[0][0].shape == (B, C, H, W)
    assert generation[2][0].shape == (B, C, H, W)
    assert generation[3][0].shape == (B, C, H, W)
    assert bool(jnp.isfinite(loss))
    assert bool(jnp.isfinite(metric[0])) and bool(jnp.isfinite(metric[1]))

    print("KERNEL_OK")
</pallas_src>

<mosaic_0001>
module attributes {stable_mosaic.version = 11 : i64} {
  func.func @kernel(%arg0: i32, %arg1: memref<1x8x640xbf16, #tpu.memory_space<vmem>>, %arg2: memref<1x3x640xf32, #tpu.memory_space<vmem>>, %arg3: memref<3x384xf32, #tpu.memory_space<vmem>>, %arg4: memref<8x72xbf16, #tpu.memory_space<vmem>>, %arg5: memref<16x72xbf16, #tpu.memory_space<vmem>>, %arg6: memref<8x144xbf16, #tpu.memory_space<vmem>>, %arg7: memref<8x72xbf16, #tpu.memory_space<vmem>>, %arg8: memref<8x72xbf16, #tpu.memory_space<vmem>>, %arg9: memref<3x72xbf16, #tpu.memory_space<vmem>>, %arg10: memref<8x1xf32, #tpu.memory_space<vmem>>, %arg11: memref<16x1xf32, #tpu.memory_space<vmem>>, %arg12: memref<8x1xf32, #tpu.memory_space<vmem>>, %arg13: memref<8x1xf32, #tpu.memory_space<vmem>>, %arg14: memref<3x1xf32, #tpu.memory_space<vmem>>, %arg15: memref<1x3x384xf32, #tpu.memory_space<vmem>>, %arg16: memref<1x1x384xf32, #tpu.memory_space<vmem>>, %arg17: memref<1x1x384xf32, #tpu.memory_space<vmem>>, %arg18: memref<1x1x128xf32, #tpu.memory_space<vmem>>, %arg19: memref<8x640xbf16, #tpu.memory_space<vmem>>, %arg20: memref<16x640xbf16, #tpu.memory_space<vmem>>, %arg21: memref<16x640xbf16, #tpu.memory_space<vmem>>, %arg22: memref<8x640xbf16, #tpu.memory_space<vmem>>, %arg23: memref<8x640xbf16, #tpu.memory_space<vmem>>) attributes {dimension_semantics = [#tpu.dimension_semantics<parallel>], iteration_bounds = array<i64: 2>, scalar_prefetch = 0 : i64, scratch_operands = 5 : i64, tpu.core_type = #tpu.core_type<tc>, window_params = [{transform_indices = @transform_0, window_bounds = array<i64: 1, 8, 640>}, {transform_indices = @transform_1, window_bounds = array<i64: 1, 3, 640>}, {pipeline_mode = #tpu.pipeline_mode<synchronous>, transform_indices = @transform_2, window_bounds = array<i64: 3, 384>}, {pipeline_mode = #tpu.pipeline_mode<synchronous>, transform_indices = @transform_3, window_bounds = array<i64: 8, 72>}, {pipeline_mode = #tpu.pipeline_mode<synchronous>, transform_indices = @transform_4, window_bounds = array<i64: 16, 72>}, {pipeline_mode = #tpu.pipeline_mode<synchronous>, transform_indices = @transform_5, window_bounds = array<i64: 8, 144>}, {pipeline_mode = #tpu.pipeline_mode<synchronous>, transform_indices = @transform_6, window_bounds = array<i64: 8, 72>}, {pipeline_mode = #tpu.pipeline_mode<synchronous>, transform_indices = @transform_7, window_bounds = array<i64: 8, 72>}, {pipeline_mode = #tpu.pipeline_mode<synchronous>, transform_indices = @transform_8, window_bounds = array<i64: 3, 72>}, {pipeline_mode = #tpu.pipeline_mode<synchronous>, transform_indices = @transform_9, window_bounds = array<i64: 8, 1>}, {pipeline_mode = #tpu.pipeline_mode<synchronous>, transform_indices = @transform_10, window_bounds = array<i64: 16, 1>}, {pipeline_mode = #tpu.pipeline_mode<synchronous>, transform_indices = @transform_11, window_bounds = array<i64: 8, 1>}, {pipeline_mode = #tpu.pipeline_mode<synchronous>, transform_indices = @transform_12, window_bounds = array<i64: 8, 1>}, {pipeline_mode = #tpu.pipeline_mode<synchronous>, transform_indices = @transform_13, window_bounds = array<i64: 3, 1>}, {transform_indices = @transform_14, window_bounds = array<i64: 1, 3, 384>}, {transform_indices = @transform_15, window_bounds = array<i64: 1, 1, 384>}, {transform_indices = @transform_16, window_bounds = array<i64: 1, 1, 384>}, {transform_indices = @transform_17, window_bounds = array<i64: 1, 1, 128>}]} {
    %c0 = arith.constant 0 : index
    %c0_0 = arith.constant 0 : index
    %0 = vector.load %arg3[%c0, %c0_0] : memref<3x384xf32, #tpu.memory_space<vmem>>, vector<1x384xf32>
    %c1 = arith.constant 1 : index
    %c0_1 = arith.constant 0 : index
    %1 = vector.load %arg3[%c1, %c0_1] : memref<3x384xf32, #tpu.memory_space<vmem>>, vector<1x384xf32>
    %cst = arith.constant 5.000000e-01 : f32
    %2 = vector.broadcast %cst : f32 to vector<1x384xf32>
    %3 = arith.cmpf ogt, %1, %2 : vector<1x384xf32>
    %c2 = arith.constant 2 : index
    %c0_2 = arith.constant 0 : index
    %4 = vector.load %arg3[%c2, %c0_2] : memref<3x384xf32, #tpu.memory_space<vmem>>, vector<1x384xf32>
    %cst_3 = arith.constant 5.000000e-01 : f32
    %5 = vector.broadcast %cst_3 : f32 to vector<1x384xf32>
    %6 = arith.cmpf ogt, %4, %5 : vector<1x384xf32>
    %c0_4 = arith.constant 0 : index
    %c0_5 = arith.constant 0 : index
    %7 = vector.load %arg4[%c0_4, %c0_5] : memref<8x72xbf16, #tpu.memory_space<vmem>>, vector<8x72xbf16>
    %c0_6 = arith.constant 0 : index
    %c0_7 = arith.constant 0 : index
    %c109 = arith.constant 109 : index
    %8 = vector.load %arg1[%c0_6, %c0_7, %c109] : memref<1x8x640xbf16, #tpu.memory_space<vmem>>, vector<1x8x384xbf16>
    %9 = vector.shape_cast %8 : vector<1x8x384xbf16> to vector<8x384xbf16>
    %c0_8 = arith.constant 0 : index
    %c0_9 = arith.constant 0 : index
    %c110 = arith.constant 110 : index
    %10 = vector.load %arg1[%c0_8, %c0_9, %c110] : memref<1x8x640xbf16, #tpu.memory_space<vmem>>, vector<1x8x384xbf16>
    %11 = vector.shape_cast %10 : vector<1x8x384xbf16> to vector<8x384xbf16>
    %c0_10 = arith.constant 0 : index
    %c0_11 = arith.constant 0 : index
    %c111 = arith.constant 111 : index
    %12 = vector.load %arg1[%c0_10, %c0_11, %c111] : memref<1x8x640xbf16, #tpu.memory_space<vmem>>, vector<1x8x384xbf16>
    %13 = vector.shape_cast %12 : vector<1x8x384xbf16> to vector<8x384xbf16>
    %c0_12 = arith.constant 0 : index
    %c0_13 = arith.constant 0 : index
    %c127 = arith.constant 127 : index
    %14 = vector.load %arg1[%c0_12, %c0_13, %c127] : memref<1x8x640xbf16, #tpu.memory_space<vmem>>, vector<1x8x384xbf16>
    %15 = vector.shape_cast %14 : vector<1x8x384xbf16> to vector<8x384xbf16>
    %c0_14 = arith.constant 0 : index
    %c0_15 = arith.constant 0 : index
    %c128 = arith.constant 128 : index
    %16 = vector.load %arg1[%c0_14, %c0_15, %c128] : memref<1x8x640xbf16, #tpu.memory_space<vmem>>, vector<1x8x384xbf16>
    %17 = vector.shape_cast %16 : vector<1x8x384xbf16> to vector<8x384xbf16>
    %c0_16 = arith.constant 0 : index
    %c0_17 = arith.constant 0 : index
    %c129 = arith.constant 129 : index
    %18 = vector.load %arg1[%c0_16, %c0_17, %c129] : memref<1x8x640xbf16, #tpu.memory_space<vmem>>, vector<1x8x384xbf16>
    %19 = vector.shape_cast %18 : vector<1x8x384xbf16> to vector<8x384xbf16>
    %c0_18 = arith.constant 0 : index
    %c0_19 = arith.constant 0 : index
    %c145 = arith.constant 145 : index
    %20 = vector.load %arg1[%c0_18, %c0_19, %c145] : memref<1x8x640xbf16, #tpu.memory_space<vmem>>, vector<1x8x384xbf16>
    %21 = vector.shape_cast %20 : vector<1x8x384xbf16> to vector<8x384xbf16>
    %c0_20 = arith.constant 0 : index
    %c0_21 = arith.constant 0 : index
    %c146 = arith.constant 146 : index
    %22 = vector.load %arg1[%c0_20, %c0_21, %c146] : memref<1x8x640xbf16, #tpu.memory_space<vmem>>, vector<1x8x384xbf16>
    %23 = vector.shape_cast %22 : vector<1x8x384xbf16> to vector<8x384xbf16>
    %c0_22 = arith.constant 0 : index
    %c0_23 = arith.constant 0 : index
    %c147 = arith.constant 147 : index
    %24 = vector.load %arg1[%c0_22, %c0_23, %c147] : memref<1x8x640xbf16, #tpu.memory_space<vmem>>, vector<1x8x384xbf16>
    %25 = vector.shape_cast %24 : vector<1x8x384xbf16> to vector<8x384xbf16>
    %26 = tpu.concatenate %9, %11, %13, %15, %17, %19, %21, %23, %25 in 0 : vector<8x384xbf16>, vector<8x384xbf16>, vector<8x384xbf16>, vector<8x384xbf16>, vector<8x384xbf16>, vector<8x384xbf16>, vector<8x384xbf16>, vector<8x384xbf16>, vector<8x384xbf16> -> vector<72x384xbf16>
    %cst_24 = arith.constant dense<0.000000e+00> : vector<8x384xf32>
    %27 = tpu.matmul %7, %26, %cst_24 {dimension_numbers = #tpu.dot_dimension_numbers<[1], [0], [0], [1], [0, 0, 1, 1], [], []>} : vector<8x72xbf16>, vector<72x384xbf16>, vector<8x384xf32> -> vector<8x384xf32>
    %c0_25 = arith.constant 0 : index
    %c0_26 = arith.constant 0 : index
    %28 = vector.load %arg10[%c0_25, %c0_26] : memref<8x1xf32, #tpu.memory_space<vmem>>, vector<8x1xf32>
    %29 = vector.broadcast %28 : vector<8x1xf32> to vector<8x384xf32>
    %30 = arith.addf %27, %29 : vector<8x384xf32>
    %cst_27 = arith.constant 0.000000e+00 : f32
    %31 = vector.broadcast %cst_27 : f32 to vector<8x384xf32>
    %32 = arith.maximumf %30, %31 : vector<8x384xf32>
    %33 = vector.broadcast %0 : vector<1x384xf32> to vector<8x384xf32>
    %34 = arith.mulf %32, %33 : vector<8x384xf32>
    %cst_28 = arith.constant 0.000000e+00 : bf16
    %35 = vector.broadcast %cst_28 : bf16 to vector<8x128xbf16>
    %36 = arith.truncf %34 : vector<8x384xf32> to vector<8x384xbf16>
    %cst_29 = arith.constant 0.000000e+00 : bf16
    %37 = vector.broadcast %cst_29 : bf16 to vector<8x128xbf16>
    %38 = tpu.concatenate %35, %36, %37 in 1 : vector<8x128xbf16>, vector<8x384xbf16>, vector<8x128xbf16> -> vector<8x640xbf16>
    %c0_30 = arith.constant 0 : index
    %c0_31 = arith.constant 0 : index
    %39 = vector.load %arg19[%c0_30, %c0_31] : memref<8x640xbf16, #tpu.memory_space<vmem>>, vector<8x640xbf16>
    tpu.vector_store %arg19[%c0_30, %c0_31], %38 {strides = array<i32>} : memref<8x640xbf16, #tpu.memory_space<vmem>>, vector<8x640xbf16>,
    %c0_32 = arith.constant 0 : index
    %c0_33 = arith.constant 0 : index
    %40 = vector.load %arg5[%c0_32, %c0_33] : memref<16x72xbf16, #tpu.memory_space<vmem>>, vector<16x72xbf16>
    %c0_34 = arith.constant 0 : index
    %c109_35 = arith.constant 109 : index
    %41 = vector.load %arg19[%c0_34, %c109_35] : memref<8x640xbf16, #tpu.memory_space<vmem>>, vector<8x384xbf16>
    %c0_36 = arith.constant 0 : index
    %c110_37 = arith.constant 110 : index
    %42 = vector.load %arg19[%c0_36, %c110_37] : memref<8x640xbf16, #tpu.memory_space<vmem>>, vector<8x384xbf16>
    %c0_38 = arith.constant 0 : index
    %c111_39 = arith.constant 111 : index
    %43 = vector.load %arg19[%c0_38, %c111_39] : memref<8x640xbf16, #tpu.memory_space<vmem>>, vector<8x384xbf16>
    %c0_40 = arith.constant 0 : index
    %c127_41 = arith.constant 127 : index
    %44 = vector.load %arg19[%c0_40, %c127_41] : memref<8x640xbf16, #tpu.memory_space<vmem>>, vector<8x384xbf16>
    %c0_42 = arith.constant 0 : index
    %c128_43 = arith.constant 128 : index
    %45 = vector.load %arg19[%c0_42, %c128_43] : memref<8x640xbf16, #tpu.memory_space<vmem>>, vector<8x384xbf16>
    %c0_44 = arith.constant 0 : index
    %c129_45 = arith.constant 129 : index
    %46 = vector.load %arg19[%c0_44, %c129_45] : memref<8x640xbf16, #tpu.memory_space<vmem>>, vector<8x384xbf16>
    %c0_46 = arith.constant 0 : index
    %c145_47 = arith.constant 145 : index
    %47 = vector.load %arg19[%c0_46, %c145_47] : memref<8x640xbf16, #tpu.memory_space<vmem>>, vector<8x384xbf16>
    %c0_48 = arith.constant 0 : index
    %c146_49 = arith.constant 146 : index
    %48 = vector.load %arg19[%c0_48, %c146_49] : memref<8x640xbf16, #tpu.memory_space<vmem>>, vector<8x384xbf16>
    %c0_50 = arith.constant 0 : index
    %c147_51 = arith.constant 147 : index
    %49 = vector.load %arg19[%c0_50, %c147_51] : memref<8x640xbf16, #tpu.memory_space<vmem>>, vector<8x384xbf16>
    %50 = tpu.concatenate %41, %42, %43, %44, %45, %46, %47, %48, %49 in 0 : vector<8x384xbf16>, vector<8x384xbf16>, vector<8x384xbf16>, vector<8x384xbf16>, vector<8x384xbf16>, vector<8x384xbf16>, vector<8x384xbf16>, vector<8x384xbf16>, vector<8x384xbf16> -> vector<72x384xbf16>
    %cst_52 = arith.constant dense<0.000000e+00> : vector<16x384xf32>
    %51 = tpu.matmul %40, %50, %cst_52 {dimension_numbers = #tpu.dot_dimension_numbers<[1], [0], [0], [1], [0, 0, 1, 1], [], []>} : vector<16x72xbf16>, vector<72x384xbf16>, vector<16x384xf32> -> vector<16x384xf32>
    %c0_53 = arith.constant 0 : index
    %c0_54 = arith.constant 0 : index
    %52 = vector.load %arg11[%c0_53, %c0_54] : memref<16x1xf32, #tpu.memory_space<vmem>>, vector<16x1xf32>
    %53 = vector.broadcast %52 : vector<16x1xf32> to vector<16x384xf32>
    %54 = arith.addf %51, %53 : vector<16x384xf32>
    %cst_55 = arith.constant 0.000000e+00 : f32
    %55 = vector.broadcast %cst_55 : f32 to vector<16x384xf32>
    %56 = arith.maximumf %54, %55 : vector<16x384xf32>
    %57 = vector.broadcast %0 : vector<1x384xf32> to vector<16x384xf32>
    %58 = arith.mulf %56, %57 : vector<16x384xf32>
    %cst_56 = arith.constant 0.000000e+00 : bf16
    %59 = vector.broadcast %cst_56 : bf16 to vector<16x128xbf16>
    %60 = arith.truncf %58 : vector<16x384xf32> to vector<16x384xbf16>
    %cst_57 = arith.constant 0.000000e+00 : bf16
    %61 = vector.broadcast %cst_57 : bf16 to vector<16x128xbf16>
    %62 = tpu.concatenate %59, %60, %61 in 1 : vector<16x128xbf16>, vector<16x384xbf16>, vector<16x128xbf16> -> vector<16x640xbf16>
    %c0_58 = arith.constant 0 : index
    %c0_59 = arith.constant 0 : index
    %63 = vector.load %arg20[%c0_58, %c0_59] : memref<16x640xbf16, #tpu.memory_space<vmem>>, vector<16x640xbf16>
    tpu.vector_store %arg20[%c0_58, %c0_59], %62 {strides = array<i32>} : memref<16x640xbf16, #tpu.memory_space<vmem>>, vector<16x640xbf16>,
    %c0_60 = arith.constant 0 : index
    %c128_61 = arith.constant 128 : index
    %64 = vector.load %arg20[%c0_60, %c128_61] : memref<16x640xbf16, #tpu.memory_space<vmem>>, vector<16x384xbf16>
    %c0_62 = arith.constant 0 : index
    %c127_63 = arith.constant 127 : index
    %65 = vector.load %arg20[%c0_62, %c127_63] : memref<16x640xbf16, #tpu.memory_space<vmem>>, vector<16x384xbf16>
    %c0_64 = arith.constant 0 : index
    %c110_65 = arith.constant 110 : index
    %66 = vector.load %arg20[%c0_64, %c110_65] : memref<16x640xbf16, #tpu.memory_space<vmem>>, vector<16x384xbf16>
    %c0_66 = arith.constant 0 : index
    %c109_67 = arith.constant 109 : index
    %67 = vector.load %arg20[%c0_66, %c109_67] : memref<16x640xbf16, #tpu.memory_space<vmem>>, vector<16x384xbf16>
    %68 = vector.shape_cast %6 : vector<1x384xi1> to vector<1x384xi1>
    %69 = vector.broadcast %68 : vector<1x384xi1> to vector<16x384xi1>
    %70 = arith.select %69, %64, %65 : vector<16x384xi1>, vector<16x384xbf16>
    %71 = vector.shape_cast %6 : vector<1x384xi1> to vector<1x384xi1>
    %72 = vector.broadcast %71 : vector<1x384xi1> to vector<16x384xi1>
    %73 = arith.select %72, %66, %67 : vector<16x384xi1>, vector<16x384xbf16>
    %74 = vector.shape_cast %3 : vector<1x384xi1> to vector<1x384xi1>
    %75 = vector.broadcast %74 : vector<1x384xi1> to vector<16x384xi1>
    %76 = arith.select %75, %70, %73 : vector<16x384xi1>, vector<16x384xbf16>
    %77 = arith.extf %76 : vector<16x384xbf16> to vector<16x384xf32>
    %78 = vector.broadcast %0 : vector<1x384xf32> to vector<16x384xf32>
    %79 = arith.mulf %77, %78 : vector<16x384xf32>
    %cst_68 = arith.constant 0.000000e+00 : bf16
    %80 = vector.broadcast %cst_68 : bf16 to vector<16x128xbf16>
    %81 = arith.truncf %79 : vector<16x384xf32> to vector<16x384xbf16>
    %cst_69 = arith.constant 0.000000e+00 : bf16
    %82 = vector.broadcast %cst_69 : bf16 to vector<16x128xbf16>
    %83 = tpu.concatenate %80, %81, %82 in 1 : vector<16x128xbf16>, vector<16x384xbf16>, vector<16x128xbf16> -> vector<16x640xbf16>
    %c0_70 = arith.constant 0 : index
    %c0_71 = arith.constant 0 : index
    %84 = vector.load %arg21[%c0_70, %c0_71] : memref<16x640xbf16, #tpu.memory_space<vmem>>, vector<16x640xbf16>
    tpu.vector_store %arg21[%c0_70, %c0_71], %83 {strides = array<i32>} : memref<16x640xbf16, #tpu.memory_space<vmem>>, vector<16x640xbf16>,
    %c0_72 = arith.constant 0 : index
    %c0_73 = arith.constant 0 : index
    %85 = vector.load %arg6[%c0_72, %c0_73] : memref<8x144xbf16, #tpu.memory_space<vmem>>, vector<8x144xbf16>
    %c0_74 = arith.constant 0 : index
    %c109_75 = arith.constant 109 : index
    %86 = vector.load %arg21[%c0_74, %c109_75] : memref<16x640xbf16, #tpu.memory_space<vmem>>, vector<16x384xbf16>
    %c0_76 = arith.constant 0 : index
    %c110_77 = arith.constant 110 : index
    %87 = vector.load %arg21[%c0_76, %c110_77] : memref<16x640xbf16, #tpu.memory_space<vmem>>, vector<16x384xbf16>
    %c0_78 = arith.constant 0 : index
    %c111_79 = arith.constant 111 : index
    %88 = vector.load %arg21[%c0_78, %c111_79] : memref<16x640xbf16, #tpu.memory_space<vmem>>, vector<16x384xbf16>
    %c0_80 = arith.constant 0 : index
    %c127_81 = arith.constant 127 : index
    %89 = vector.load %arg21[%c0_80, %c127_81] : memref<16x640xbf16, #tpu.memory_space<vmem>>, vector<16x384xbf16>
    %c0_82 = arith.constant 0 : index
    %c128_83 = arith.constant 128 : index
    %90 = vector.load %arg21[%c0_82, %c128_83] : memref<16x640xbf16, #tpu.memory_space<vmem>>, vector<16x384xbf16>
    %c0_84 = arith.constant 0 : index
    %c129_85 = arith.constant 129 : index
    %91 = vector.load %arg21[%c0_84, %c129_85] : memref<16x640xbf16, #tpu.memory_space<vmem>>, vector<16x384xbf16>
    %c0_86 = arith.constant 0 : index
    %c145_87 = arith.constant 145 : index
    %92 = vector.load %arg21[%c0_86, %c145_87] : memref<16x640xbf16, #tpu.memory_space<vmem>>, vector<16x384xbf16>
    %c0_88 = arith.constant 0 : index
    %c146_89 = arith.constant 146 : index
    %93 = vector.load %arg21[%c0_88, %c146_89] : memref<16x640xbf16, #tpu.memory_space<vmem>>, vector<16x384xbf16>
    %c0_90 = arith.constant 0 : index
    %c147_91 = arith.constant 147 : index
    %94 = vector.load %arg21[%c0_90, %c147_91] : memref<16x640xbf16, #tpu.memory_space<vmem>>, vector<16x384xbf16>
    %95 = tpu.concatenate %86, %87, %88, %89, %90, %91, %92, %93, %94 in 0 : vector<16x384xbf16>, vector<16x384xbf16>, vector<16x384xbf16>, vector<16x384xbf16>, vector<16x384xbf16>, vector<16x384xbf16>, vector<16x384xbf16>, vector<16x384xbf16>, vector<16x384xbf16> -> vector<144x384xbf16>
    %cst_92 = arith.constant dense<0.000000e+00> : vector<8x384xf32>
    %96 = tpu.matmul %85, %95, %cst_92 {dimension_numbers = #tpu.dot_dimension_numbers<[1], [0], [0], [1], [0, 0, 1, 1], [], []>} : vector<8x144xbf16>, vector<144x384xbf16>, vector<8x384xf32> -> vector<8x384xf32>
    %c0_93 = arith.constant 0 : index
    %c0_94 = arith.constant 0 : index
    %97 = vector.load %arg12[%c0_93, %c0_94] : memref<8x1xf32, #tpu.memory_space<vmem>>, vector<8x1xf32>
    %98 = vector.broadcast %97 : vector<8x1xf32> to vector<8x384xf32>
    %99 = arith.addf %96, %98 : vector<8x384xf32>
    %cst_95 = arith.constant 0.000000e+00 : f32
    %100 = vector.broadcast %cst_95 : f32 to vector<8x384xf32>
    %101 = arith.maximumf %99, %100 : vector<8x384xf32>
    %102 = vector.broadcast %0 : vector<1x384xf32> to vector<8x384xf32>
    %103 = arith.mulf %101, %102 : vector<8x384xf32>
    %cst_96 = arith.constant 0.000000e+00 : bf16
    %104 = vector.broadcast %cst_96 : bf16 to vector<8x128xbf16>
    %105 = arith.truncf %103 : vector<8x384xf32> to vector<8x384xbf16>
    %cst_97 = arith.constant 0.000000e+00 : bf16
    %106 = vector.broadcast %cst_97 : bf16 to vector<8x128xbf16>
    %107 = tpu.concatenate %104, %105, %106 in 1 : vector<8x128xbf16>, vector<8x384xbf16>, vector<8x128xbf16> -> vector<8x640xbf16>
    %c0_98 = arith.constant 0 : index
    %c0_99 = arith.constant 0 : index
    %108 = vector.load %arg22[%c0_98, %c0_99] : memref<8x640xbf16, #tpu.memory_space<vmem>>, vector<8x640xbf16>
    tpu.vector_store %arg22[%c0_98, %c0_99], %107 {strides = array<i32>} : memref<8x640xbf16, #tpu.memory_space<vmem>>, vector<8x640xbf16>,
    %c0_100 = arith.constant 0 : index
    %c0_101 = arith.constant 0 : index
    %109 = vector.load %arg7[%c0_100, %c0_101] : memref<8x72xbf16, #tpu.memory_space<vmem>>, vector<8x72xbf16>
    %c0_102 = arith.constant 0 : index
    %c109_103 = arith.constant 109 : index
    %110 = vector.load %arg22[%c0_102, %c109_103] : memref<8x640xbf16, #tpu.memory_space<vmem>>, vector<8x384xbf16>
    %c0_104 = arith.constant 0 : index
    %c110_105 = arith.constant 110 : index
    %111 = vector.load %arg22[%c0_104, %c110_105] : memref<8x640xbf16, #tpu.memory_space<vmem>>, vector<8x384xbf16>
    %c0_106 = arith.constant 0 : index
    %c111_107 = arith.constant 111 : index
    %112 = vector.load %arg22[%c0_106, %c111_107] : memref<8x640xbf16, #tpu.memory_space<vmem>>, vector<8x384xbf16>
    %c0_108 = arith.constant 0 : index
    %c127_109 = arith.constant 127 : index
    %113 = vector.load %arg22[%c0_108, %c127_109] : memref<8x640xbf16, #tpu.memory_space<vmem>>, vector<8x384xbf16>
    %c0_110 = arith.constant 0 : index
    %c128_111 = arith.constant 128 : index
    %114 = vector.load %arg22[%c0_110, %c128_111] : memref<8x640xbf16, #tpu.memory_space<vmem>>, vector<8x384xbf16>
    %c0_112 = arith.constant 0 : index
    %c129_113 = arith.constant 129 : index
    %115 = vector.load %arg22[%c0_112, %c129_113] : memref<8x640xbf16, #tpu.memory_space<vmem>>, vector<8x384xbf16>
    %c0_114 = arith.constant 0 : index
    %c145_115 = arith.constant 145 : index
    %116 = vector.load %arg22[%c0_114, %c145_115] : memref<8x640xbf16, #tpu.memory_space<vmem>>, vector<8x384xbf16>
    %c0_116 = arith.constant 0 : index
    %c146_117 = arith.constant 146 : index
    %117 = vector.load %arg22[%c0_116, %c146_117] : memref<8x640xbf16, #tpu.memory_space<vmem>>, vector<8x384xbf16>
    %c0_118 = arith.constant 0 : index
    %c147_119 = arith.constant 147 : index
    %118 = vector.load %arg22[%c0_118, %c147_119] : memref<8x640xbf16, #tpu.memory_space<vmem>>, vector<8x384xbf16>
    %119 = tpu.concatenate %110, %111, %112, %113, %114, %115, %116, %117, %118 in 0 : vector<8x384xbf16>, vector<8x384xbf16>, vector<8x384xbf16>, vector<8x384xbf16>, vector<8x384xbf16>, vector<8x384xbf16>, vector<8x384xbf16>, vector<8x384xbf16>, vector<8x384xbf16> -> vector<72x384xbf16>
    %cst_120 = arith.constant dense<0.000000e+00> : vector<8x384xf32>
    %120 = tpu.matmul %109, %119, %cst_120 {dimension_numbers = #tpu.dot_dimension_numbers<[1], [0], [0], [1], [0, 0, 1, 1], [], []>} : vector<8x72xbf16>, vector<72x384xbf16>, vector<8x384xf32> -> vector<8x384xf32>
    %c0_121 = arith.constant 0 : index
    %c0_122 = arith.constant 0 : index
    %121 = vector.load %arg8[%c0_121, %c0_122] : memref<8x72xbf16, #tpu.memory_space<vmem>>, vector<8x72xbf16>
    %c0_123 = arith.constant 0 : index
    %c109_124 = arith.constant 109 : index
    %122 = vector.load %arg19[%c0_123, %c109_124] : memref<8x640xbf16, #tpu.memory_space<vmem>>, vector<8x384xbf16>
    %c0_125 = arith.constant 0 : index
    %c110_126 = arith.constant 110 : index
    %123 = vector.load %arg19[%c0_125, %c110_126] : memref<8x640xbf16, #tpu.memory_space<vmem>>, vector<8x384xbf16>
    %c0_127 = arith.constant 0 : index
    %c111_128 = arith.constant 111 : index
    %124 = vector.load %arg19[%c0_127, %c111_128] : memref<8x640xbf16, #tpu.memory_space<vmem>>, vector<8x384xbf16>
    %c0_129 = arith.constant 0 : index
    %c127_130 = arith.constant 127 : index
    %125 = vector.load %arg19[%c0_129, %c127_130] : memref<8x640xbf16, #tpu.memory_space<vmem>>, vector<8x384xbf16>
    %c0_131 = arith.constant 0 : index
    %c128_132 = arith.constant 128 : index
    %126 = vector.load %arg19[%c0_131, %c128_132] : memref<8x640xbf16, #tpu.memory_space<vmem>>, vector<8x384xbf16>
    %c0_133 = arith.constant 0 : index
    %c129_134 = arith.constant 129 : index
    %127 = vector.load %arg19[%c0_133, %c129_134] : memref<8x640xbf16, #tpu.memory_space<vmem>>, vector<8x384xbf16>
    %c0_135 = arith.constant 0 : index
    %c145_136 = arith.constant 145 : index
    %128 = vector.load %arg19[%c0_135, %c145_136] : memref<8x640xbf16, #tpu.memory_space<vmem>>, vector<8x384xbf16>
    %c0_137 = arith.constant 0 : index
    %c146_138 = arith.constant 146 : index
    %129 = vector.load %arg19[%c0_137, %c146_138] : memref<8x640xbf16, #tpu.memory_space<vmem>>, vector<8x384xbf16>
    %c0_139 = arith.constant 0 : index
    %c147_140 = arith.constant 147 : index
    %130 = vector.load %arg19[%c0_139, %c147_140] : memref<8x640xbf16, #tpu.memory_space<vmem>>, vector<8x384xbf16>
    %131 = tpu.concatenate %122, %123, %124, %125, %126, %127, %128, %129, %130 in 0 : vector<8x384xbf16>, vector<8x384xbf16>, vector<8x384xbf16>, vector<8x384xbf16>, vector<8x384xbf16>, vector<8x384xbf16>, vector<8x384xbf16>, vector<8x384xbf16>, vector<8x384xbf16> -> vector<72x384xbf16>
    %cst_141 = arith.constant dense<0.000000e+00> : vector<8x384xf32>
    %132 = tpu.matmul %121, %131, %cst_141 {dimension_numbers = #tpu.dot_dimension_numbers<[1], [0], [0], [1], [0, 0, 1, 1], [], []>} : vector<8x72xbf16>, vector<72x384xbf16>, vector<8x384xf32> -> vector<8x384xf32>
    %133 = arith.addf %120, %132 : vector<8x384xf32>
    %c0_142 = arith.constant 0 : index
    %c0_143 = arith.constant 0 : index
    %134 = vector.load %arg13[%c0_142, %c0_143] : memref<8x1xf32, #tpu.memory_space<vmem>>, vector<8x1xf32>
    %135 = vector.broadcast %134 : vector<8x1xf32> to vector<8x384xf32>
    %136 = arith.addf %133, %135 : vector<8x384xf32>
    %cst_144 = arith.constant 0.000000e+00 : f32
    %137 = vector.broadcast %cst_144 : f32 to vector<8x384xf32>
    %138 = arith.maximumf %136, %137 : vector<8x384xf32>
    %139 = vector.broadcast %0 : vector<1x384xf32> to vector<8x384xf32>
    %140 = arith.mulf %138, %139 : vector<8x384xf32>
    %cst_145 = arith.constant 0.000000e+00 : bf16
    %141 = vector.broadcast %cst_145 : bf16 to vector<8x128xbf16>
    %142 = arith.truncf %140 : vector<8x384xf32> to vector<8x384xbf16>
    %cst_146 = arith.constant 0.000000e+00 : bf16
    %143 = vector.broadcast %cst_146 : bf16 to vector<8x128xbf16>
    %144 = tpu.concatenate %141, %142, %143 in 1 : vector<8x128xbf16>, vector<8x384xbf16>, vector<8x128xbf16> -> vector<8x640xbf16>
    %c0_147 = arith.constant 0 : index
    %c0_148 = arith.constant 0 : index
    %145 = vector.load %arg23[%c0_147, %c0_148] : memref<8x640xbf16, #tpu.memory_space<vmem>>, vector<8x640xbf16>
    tpu.vector_store %arg23[%c0_147, %c0_148], %144 {strides = array<i32>} : memref<8x640xbf16, #tpu.memory_space<vmem>>, vector<8x640xbf16>,
    %c0_149 = arith.constant 0 : index
    %c0_150 = arith.constant 0 : index
    %146 = vector.load %arg9[%c0_149, %c0_150] : memref<3x72xbf16, #tpu.memory_space<vmem>>, vector<3x72xbf16>
    %c0_151 = arith.constant 0 : index
    %c109_152 = arith.constant 109 : index
    %147 = vector.load %arg23[%c0_151, %c109_152] : memref<8x640xbf16, #tpu.memory_space<vmem>>, vector<8x384xbf16>
    %c0_153 = arith.constant 0 : index
    %c110_154 = arith.constant 110 : index
    %148 = vector.load %arg23[%c0_153, %c110_154] : memref<8x640xbf16, #tpu.memory_space<vmem>>, vector<8x384xbf16>
    %c0_155 = arith.constant 0 : index
    %c111_156 = arith.constant 111 : index
    %149 = vector.load %arg23[%c0_155, %c111_156] : memref<8x640xbf16, #tpu.memory_space<vmem>>, vector<8x384xbf16>
    %c0_157 = arith.constant 0 : index
    %c127_158 = arith.constant 127 : index
    %150 = vector.load %arg23[%c0_157, %c127_158] : memref<8x640xbf16, #tpu.memory_space<vmem>>, vector<8x384xbf16>
    %c0_159 = arith.constant 0 : index
    %c128_160 = arith.constant 128 : index
    %151 = vector.load %arg23[%c0_159, %c128_160] : memref<8x640xbf16, #tpu.memory_space<vmem>>, vector<8x384xbf16>
    %c0_161 = arith.constant 0 : index
    %c129_162 = arith.constant 129 : index
    %152 = vector.load %arg23[%c0_161, %c129_162] : memref<8x640xbf16, #tpu.memory_space<vmem>>, vector<8x384xbf16>
    %c0_163 = arith.constant 0 : index
    %c145_164 = arith.constant 145 : index
    %153 = vector.load %arg23[%c0_163, %c145_164] : memref<8x640xbf16, #tpu.memory_space<vmem>>, vector<8x384xbf16>
    %c0_165 = arith.constant 0 : index
    %c146_166 = arith.constant 146 : index
    %154 = vector.load %arg23[%c0_165, %c146_166] : memref<8x640xbf16, #tpu.memory_space<vmem>>, vector<8x384xbf16>
    %c0_167 = arith.constant 0 : index
    %c147_168 = arith.constant 147 : index
    %155 = vector.load %arg23[%c0_167, %c147_168] : memref<8x640xbf16, #tpu.memory_space<vmem>>, vector<8x384xbf16>
    %156 = tpu.concatenate %147, %148, %149, %150, %151, %152, %153, %154, %155 in 0 : vector<8x384xbf16>, vector<8x384xbf16>, vector<8x384xbf16>, vector<8x384xbf16>, vector<8x384xbf16>, vector<8x384xbf16>, vector<8x384xbf16>, vector<8x384xbf16>, vector<8x384xbf16> -> vector<72x384xbf16>
    %cst_169 = arith.constant dense<0.000000e+00> : vector<3x384xf32>
    %157 = tpu.matmul %146, %156, %cst_169 {dimension_numbers = #tpu.dot_dimension_numbers<[1], [0], [0], [1], [0, 0, 1, 1], [], []>} : vector<3x72xbf16>, vector<72x384xbf16>, vector<3x384xf32> -> vector<3x384xf32>
    %c0_170 = arith.constant 0 : index
    %c0_171 = arith.constant 0 : index
    %158 = vector.load %arg14[%c0_170, %c0_171] : memref<3x1xf32, #tpu.memory_space<vmem>>, vector<3x1xf32>
    %159 = vector.broadcast %158 : vector<3x1xf32> to vector<3x384xf32>
    %160 = arith.addf %157, %159 : vector<3x384xf32>
    %161 = math.tanh %160 : vector<3x384xf32>
    %162 = vector.broadcast %0 : vector<1x384xf32> to vector<3x384xf32>
    %163 = arith.mulf %161, %162 : vector<3x384xf32>
    %c0_172 = arith.constant 0 : index
    %c0_173 = arith.constant 0 : index
    %c0_174 = arith.constant 0 : index
    %164 = vector.load %arg15[%c0_172, %c0_173, %c0_174] : memref<1x3x384xf32, #tpu.memory_space<vmem>>, vector<1x3x384xf32>
    %165 = vector.shape_cast %164 : vector<1x3x384xf32> to vector<3x384xf32>
    %166 = vector.shape_cast %163 : vector<3x384xf32> to vector<1x3x384xf32>
    tpu.vector_store %arg15[%c0_172, %c0_173, %c0_174], %166 {strides = array<i32>} : memref<1x3x384xf32, #tpu.memory_space<vmem>>, vector<1x3x384xf32>,
    %c0_175 = arith.constant 0 : index
    %c0_176 = arith.constant 0 : index
    %c0_177 = arith.constant 0 : index
    %167 = vector.load %arg2[%c0_175, %c0_176, %c0_177] : memref<1x3x640xf32, #tpu.memory_space<vmem>>, vector<1x3x640xf32>
    %168 = vector.shape_cast %167 : vector<1x3x640xf32> to vector<3x640xf32>
    %cst_178 = arith.constant dense<0.000000e+00> : vector<384xf32>
    %169 = vector.multi_reduction <add>, %163, %cst_178 [0] : vector<3x384xf32> to vector<384xf32>
    %170 = vector.shape_cast %169 : vector<384xf32> to vector<1x384xf32>
    %cst_179 = arith.constant 0.333333343 : f32
    %171 = vector.broadcast %cst_179 : f32 to vector<1x384xf32>
    %172 = arith.mulf %170, %171 : vector<1x384xf32>
    %cst_180 = arith.constant 0.000000e+00 : f32
    %173 = vector.broadcast %cst_180 : f32 to vector<1x128xf32>
    %cst_181 = arith.constant 0.000000e+00 : f32
    %174 = vector.broadcast %cst_181 : f32 to vector<1x128xf32>
    %175 = tpu.concatenate %173, %172, %174 in 1 : vector<1x128xf32>, vector<1x384xf32>, vector<1x128xf32> -> vector<1x640xf32>
    %cst_182 = arith.constant dense<0.000000e+00> : vector<640xf32>
    %176 = vector.multi_reduction <add>, %168, %cst_182 [0] : vector<3x640xf32> to vector<640xf32>
    %177 = vector.shape_cast %176 : vector<640xf32> to vector<1x640xf32>
    %cst_183 = arith.constant 0.333333343 : f32
    %178 = vector.broadcast %cst_183 : f32 to vector<1x640xf32>
    %179 = arith.mulf %177, %178 : vector<1x640xf32>
    %180 = vector.extract_strided_slice %175 {offsets = [0, 109], sizes = [1, 384], strides = [1, 1]} : vector<1x640xf32> to vector<1x384xf32>
    %cst_184 = arith.constant -1.000000e+00 : f32
    %181 = vector.broadcast %cst_184 : f32 to vector<1x384xf32>
    %182 = arith.mulf %181, %180 : vector<1x384xf32>
    %cst_185 = arith.constant -1.000000e+00 : f32
    %183 = vector.broadcast %cst_185 : f32 to vector<1x384xf32>
    %184 = arith.mulf %183, %180 : vector<1x384xf32>
    %185 = vector.extract_strided_slice %175 {offsets = [0, 110], sizes = [1, 384], strides = [1, 1]} : vector<1x640xf32> to vector<1x384xf32>
    %cst_186 = arith.constant -2.000000e+00 : f32
    %186 = vector.broadcast %cst_186 : f32 to vector<1x384xf32>
    %187 = arith.mulf %186, %185 : vector<1x384xf32>
    %188 = arith.addf %184, %187 : vector<1x384xf32>
    %cst_187 = arith.constant 1.000000e+00 : f32
    %189 = vector.broadcast %cst_187 : f32 to vector<1x384xf32>
    %190 = arith.mulf %189, %185 : vector<1x384xf32>
    %191 = vector.extract_strided_slice %175 {offsets = [0, 111], sizes = [1, 384], strides = [1, 1]} : vector<1x640xf32> to vector<1x384xf32>
    %cst_188 = arith.constant 1.000000e+00 : f32
    %192 = vector.broadcast %cst_188 : f32 to vector<1x384xf32>
    %193 = arith.mulf %192, %191 : vector<1x384xf32>
    %194 = arith.addf %182, %193 : vector<1x384xf32>
    %cst_189 = arith.constant -1.000000e+00 : f32
    %195 = vector.broadcast %cst_189 : f32 to vector<1x384xf32>
    %196 = arith.mulf %195, %191 : vector<1x384xf32>
    %197 = arith.addf %188, %196 : vector<1x384xf32>
    %198 = vector.extract_strided_slice %175 {offsets = [0, 127], sizes = [1, 384], strides = [1, 1]} : vector<1x640xf32> to vector<1x384xf32>
    %cst_190 = arith.constant -2.000000e+00 : f32
    %199 = vector.broadcast %cst_190 : f32 to vector<1x384xf32>
    %200 = arith.mulf %199, %198 : vector<1x384xf32>
    %201 = arith.addf %194, %200 : vector<1x384xf32>
    %cst_191 = arith.constant 1.000000e+00 : f32
    %202 = vector.broadcast %cst_191 : f32 to vector<1x384xf32>
    %203 = arith.mulf %202, %198 : vector<1x384xf32>
    %204 = arith.addf %190, %203 : vector<1x384xf32>
    %205 = vector.extract_strided_slice %175 {offsets = [0, 128], sizes = [1, 384], strides = [1, 1]} : vector<1x640xf32> to vector<1x384xf32>
    %cst_192 = arith.constant -4.000000e+00 : f32
    %206 = vector.broadcast %cst_192 : f32 to vector<1x384xf32>
    %207 = arith.mulf %206, %205 : vector<1x384xf32>
    %208 = arith.addf %204, %207 : vector<1x384xf32>
    %209 = vector.extract_strided_slice %175 {offsets = [0, 129], sizes = [1, 384], strides = [1, 1]} : vector<1x640xf32> to vector<1x384xf32>
    %cst_193 = arith.constant 2.000000e+00 : f32
    %210 = vector.broadcast %cst_193 : f32 to vector<1x384xf32>
    %211 = arith.mulf %210, %209 : vector<1x384xf32>
    %212 = arith.addf %201, %211 : vector<1x384xf32>
    %cst_194 = arith.constant 1.000000e+00 : f32
    %213 = vector.broadcast %cst_194 : f32 to vector<1x384xf32>
    %214 = arith.mulf %213, %209 : vector<1x384xf32>
    %215 = arith.addf %208, %214 : vector<1x384xf32>
    %216 = vector.extract_strided_slice %175 {offsets = [0, 145], sizes = [1, 384], strides = [1, 1]} : vector<1x640xf32> to vector<1x384xf32>
    %cst_195 = arith.constant -1.000000e+00 : f32
    %217 = vector.broadcast %cst_195 : f32 to vector<1x384xf32>
    %218 = arith.mulf %217, %216 : vector<1x384xf32>
    %219 = arith.addf %212, %218 : vector<1x384xf32>
    %cst_196 = arith.constant 1.000000e+00 : f32
    %220 = vector.broadcast %cst_196 : f32 to vector<1x384xf32>
    %221 = arith.mulf %220, %216 : vector<1x384xf32>
    %222 = arith.addf %197, %221 : vector<1x384xf32>
    %223 = vector.extract_strided_slice %175 {offsets = [0, 146], sizes = [1, 384], strides = [1, 1]} : vector<1x640xf32> to vector<1x384xf32>
    %cst_197 = arith.constant 2.000000e+00 : f32
    %224 = vector.broadcast %cst_197 : f32 to vector<1x384xf32>
    %225 = arith.mulf %224, %223 : vector<1x384xf32>
    %226 = arith.addf %222, %225 : vector<1x384xf32>
    %cst_198 = arith.constant 1.000000e+00 : f32
    %227 = vector.broadcast %cst_198 : f32 to vector<1x384xf32>
    %228 = arith.mulf %227, %223 : vector<1x384xf32>
    %229 = arith.addf %215, %228 : vector<1x384xf32>
    %230 = vector.extract_strided_slice %175 {offsets = [0, 147], sizes = [1, 384], strides = [1, 1]} : vector<1x640xf32> to vector<1x384xf32>
    %cst_199 = arith.constant 1.000000e+00 : f32
    %231 = vector.broadcast %cst_199 : f32 to vector<1x384xf32>
    %232 = arith.mulf %231, %230 : vector<1x384xf32>
    %233 = arith.addf %219, %232 : vector<1x384xf32>
    %cst_200 = arith.constant 1.000000e+00 : f32
    %234 = vector.broadcast %cst_200 : f32 to vector<1x384xf32>
    %235 = arith.mulf %234, %230 : vector<1x384xf32>
    %236 = arith.addf %226, %235 : vector<1x384xf32>
    %237 = math.absf %233 : vector<1x384xf32>
    %238 = math.absf %236 : vector<1x384xf32>
    %239 = math.absf %229 : vector<1x384xf32>
    %240 = vector.extract_strided_slice %179 {offsets = [0, 109], sizes = [1, 384], strides = [1, 1]} : vector<1x640xf32> to vector<1x384xf32>
    %cst_201 = arith.constant -1.000000e+00 : f32
    %241 = vector.broadcast %cst_201 : f32 to vector<1x384xf32>
    %242 = arith.mulf %241, %240 : vector<1x384xf32>
    %cst_202 = arith.constant -1.000000e+00 : f32
    %243 = vector.broadcast %cst_202 : f32 to vector<1x384xf32>
    %244 = arith.mulf %243, %240 : vector<1x384xf32>
    %245 = vector.extract_strided_slice %179 {offsets = [0, 110], sizes = [1, 384], strides = [1, 1]} : vector<1x640xf32> to vector<1x384xf32>
    %cst_203 = arith.constant -2.000000e+00 : f32
    %246 = vector.broadcast %cst_203 : f32 to vector<1x384xf32>
    %247 = arith.mulf %246, %245 : vector<1x384xf32>
    %248 = arith.addf %244, %247 : vector<1x384xf32>
    %cst_204 = arith.constant 1.000000e+00 : f32
    %249 = vector.broadcast %cst_204 : f32 to vector<1x384xf32>
    %250 = arith.mulf %249, %245 : vector<1x384xf32>
    %251 = vector.extract_strided_slice %179 {offsets = [0, 111], sizes = [1, 384], strides = [1, 1]} : vector<1x640xf32> to vector<1x384xf32>
    %cst_205 = arith.constant 1.000000e+00 : f32
    %252 = vector.broadcast %cst_205 : f32 to vector<1x384xf32>
    %253 = arith.mulf %252, %251 : vector<1x384xf32>
    %254 = arith.addf %242, %253 : vector<1x384xf32>
    %cst_206 = arith.constant -1.000000e+00 : f32
    %255 = vector.broadcast %cst_206 : f32 to vector<1x384xf32>
    %256 = arith.mulf %255, %251 : vector<1x384xf32>
    %257 = arith.addf %248, %256 : vector<1x384xf32>
    %258 = vector.extract_strided_slice %179 {offsets = [0, 127], sizes = [1, 384], strides = [1, 1]} : vector<1x640xf32> to vector<1x384xf32>
    %cst_207 = arith.constant -2.000000e+00 : f32
    %259 = vector.broadcast %cst_207 : f32 to vector<1x384xf32>
    %260 = arith.mulf %259, %258 : vector<1x384xf32>
    %261 = arith.addf %254, %260 : vector<1x384xf32>
    %cst_208 = arith.constant 1.000000e+00 : f32
    %262 = vector.broadcast %cst_208 : f32 to vector<1x384xf32>
    %263 = arith.mulf %262, %258 : vector<1x384xf32>
    %264 = arith.addf %250, %263 : vector<1x384xf32>
    %265 = vector.extract_strided_slice %179 {offsets = [0, 128], sizes = [1, 384], strides = [1, 1]} : vector<1x640xf32> to vector<1x384xf32>
    %cst_209 = arith.constant -4.000000e+00 : f32
    %266 = vector.broadcast %cst_209 : f32 to vector<1x384xf32>
    %267 = arith.mulf %266, %265 : vector<1x384xf32>
    %268 = arith.addf %264, %267 : vector<1x384xf32>
    %269 = vector.extract_strided_slice %179 {offsets = [0, 129], sizes = [1, 384], strides = [1, 1]} : vector<1x640xf32> to vector<1x384xf32>
    %cst_210 = arith.constant 2.000000e+00 : f32
    %270 = vector.broadcast %cst_210 : f32 to vector<1x384xf32>
    %271 = arith.mulf %270, %269 : vector<1x384xf32>
    %272 = arith.addf %261, %271 : vector<1x384xf32>
    %cst_211 = arith.constant 1.000000e+00 : f32
    %273 = vector.broadcast %cst_211 : f32 to vector<1x384xf32>
    %274 = arith.mulf %273, %269 : vector<1x384xf32>
    %275 = arith.addf %268, %274 : vector<1x384xf32>
    %276 = vector.extract_strided_slice %179 {offsets = [0, 145], sizes = [1, 384], strides = [1, 1]} : vector<1x640xf32> to vector<1x384xf32>
    %cst_212 = arith.constant -1.000000e+00 : f32
    %277 = vector.broadcast %cst_212 : f32 to vector<1x384xf32>
    %278 = arith.mulf %277, %276 : vector<1x384xf32>
    %279 = arith.addf %272, %278 : vector<1x384xf32>
    %cst_213 = arith.constant 1.000000e+00 : f32
    %280 = vector.broadcast %cst_213 : f32 to vector<1x384xf32>
    %281 = arith.mulf %280, %276 : vector<1x384xf32>
    %282 = arith.addf %257, %281 : vector<1x384xf32>
    %283 = vector.extract_strided_slice %179 {offsets = [0, 146], sizes = [1, 384], strides = [1, 1]} : vector<1x640xf32> to vector<1x384xf32>
    %cst_214 = arith.constant 2.000000e+00 : f32
    %284 = vector.broadcast %cst_214 : f32 to vector<1x384xf32>
    %285 = arith.mulf %284, %283 : vector<1x384xf32>
    %286 = arith.addf %282, %285 : vector<1x384xf32>
    %cst_215 = arith.constant 1.000000e+00 : f32
    %287 = vector.broadcast %cst_215 : f32 to vector<1x384xf32>
    %288 = arith.mulf %287, %283 : vector<1x384xf32>
    %289 = arith.addf %275, %288 : vector<1x384xf32>
    %290 = vector.extract_strided_slice %179 {offsets = [0, 147], sizes = [1, 384], strides = [1, 1]} : vector<1x640xf32> to vector<1x384xf32>
    %cst_216 = arith.constant 1.000000e+00 : f32
    %291 = vector.broadcast %cst_216 : f32 to vector<1x384xf32>
    %292 = arith.mulf %291, %290 : vector<1x384xf32>
    %293 = arith.addf %279, %292 : vector<1x384xf32>
    %cst_217 = arith.constant 1.000000e+00 : f32
    %294 = vector.broadcast %cst_217 : f32 to vector<1x384xf32>
    %295 = arith.mulf %294, %290 : vector<1x384xf32>
    %296 = arith.addf %286, %295 : vector<1x384xf32>
    %297 = math.absf %293 : vector<1x384xf32>
    %298 = math.absf %296 : vector<1x384xf32>
    %299 = math.absf %289 : vector<1x384xf32>
    %cst_218 = arith.constant 1.000000e-01 : f32
    %300 = vector.broadcast %cst_218 : f32 to vector<1x384xf32>
    %301 = arith.cmpf ogt, %237, %300 : vector<1x384xf32>
    %cst_219 = arith.constant 9.99999974E-5 : f32
    %302 = vector.broadcast %cst_219 : f32 to vector<1x384xf32>
    %303 = arith.addf %237, %302 : vector<1x384xf32>
    %cst_220 = arith.constant 9.900000e-01 : f32
    %304 = vector.broadcast %cst_220 : f32 to vector<1x384xf32>
    %305 = arith.select %301, %304, %303 : vector<1x384xi1>, vector<1x384xf32>
    %cst_221 = arith.constant 1.000000e-01 : f32
    %306 = vector.broadcast %cst_221 : f32 to vector<1x384xf32>
    %307 = arith.cmpf ogt, %238, %306 : vector<1x384xf32>
    %cst_222 = arith.constant 9.99999974E-5 : f32
    %308 = vector.broadcast %cst_222 : f32 to vector<1x384xf32>
    %309 = arith.addf %238, %308 : vector<1x384xf32>
    %cst_223 = arith.constant 9.900000e-01 : f32
    %310 = vector.broadcast %cst_223 : f32 to vector<1x384xf32>
    %311 = arith.select %307, %310, %309 : vector<1x384xi1>, vector<1x384xf32>
    %cst_224 = arith.constant 1.000000e-01 : f32
    %312 = vector.broadcast %cst_224 : f32 to vector<1x384xf32>
    %313 = arith.cmpf ogt, %239, %312 : vector<1x384xf32>
    %cst_225 = arith.constant 9.99999974E-5 : f32
    %314 = vector.broadcast %cst_225 : f32 to vector<1x384xf32>
    %315 = arith.addf %239, %314 : vector<1x384xf32>
    %cst_226 = arith.constant 9.900000e-01 : f32
    %316 = vector.broadcast %cst_226 : f32 to vector<1x384xf32>
    %317 = arith.select %313, %316, %315 : vector<1x384xi1>, vector<1x384xf32>
    %cst_227 = arith.constant 1.000000e-01 : f32
    %318 = vector.broadcast %cst_227 : f32 to vector<1x384xf32>
    %319 = arith.cmpf ogt, %297, %318 : vector<1x384xf32>
    %cst_228 = arith.constant 1.000000e+00 : f32
    %cst_229 = arith.constant 0.000000e+00 : f32
    %320 = vector.broadcast %cst_228 : f32 to vector<1x384xf32>
    %321 = vector.broadcast %cst_229 : f32 to vector<1x384xf32>
    %322 = arith.select %319, %320, %321 : vector<1x384xi1>, vector<1x384xf32>
    %cst_230 = arith.constant 1.000000e-01 : f32
    %323 = vector.broadcast %cst_230 : f32 to vector<1x384xf32>
    %324 = arith.cmpf ogt, %298, %323 : vector<1x384xf32>
    %cst_231 = arith.constant 1.000000e+00 : f32
    %cst_232 = arith.constant 0.000000e+00 : f32
    %325 = vector.broadcast %cst_231 : f32 to vector<1x384xf32>
    %326 = vector.broadcast %cst_232 : f32 to vector<1x384xf32>
    %327 = arith.select %324, %325, %326 : vector<1x384xi1>, vector<1x384xf32>
    %cst_233 = arith.constant 1.000000e-01 : f32
    %328 = vector.broadcast %cst_233 : f32 to vector<1x384xf32>
    %329 = arith.cmpf ogt, %299, %328 : vector<1x384xf32>
    %cst_234 = arith.constant 1.000000e+00 : f32
    %cst_235 = arith.constant 0.000000e+00 : f32
    %330 = vector.broadcast %cst_234 : f32 to vector<1x384xf32>
    %331 = vector.broadcast %cst_235 : f32 to vector<1x384xf32>
    %332 = arith.select %329, %330, %331 : vector<1x384xi1>, vector<1x384xf32>
    %333 = arith.addf %305, %311 : vector<1x384xf32>
    %334 = arith.addf %333, %317 : vector<1x384xf32>
    %335 = arith.mulf %334, %0 : vector<1x384xf32>
    %c0_236 = arith.constant 0 : index
    %c0_237 = arith.constant 0 : index
    %c0_238 = arith.constant 0 : index
    %336 = vector.load %arg16[%c0_236, %c0_237, %c0_238] : memref<1x1x384xf32, #tpu.memory_space<vmem>>, vector<1x1x384xf32>
    %337 = vector.shape_cast %336 : vector<1x1x384xf32> to vector<1x384xf32>
    %338 = vector.shape_cast %335 : vector<1x384xf32> to vector<1x1x384xf32>
    tpu.vector_store %arg16[%c0_236, %c0_237, %c0_238], %338 {strides = array<i32>} : memref<1x1x384xf32, #tpu.memory_space<vmem>>, vector<1x1x384xf32>,
    %339 = arith.addf %322, %327 : vector<1x384xf32>
    %340 = arith.addf %339, %332 : vector<1x384xf32>
    %341 = arith.mulf %340, %0 : vector<1x384xf32>
    %c0_239 = arith.constant 0 : index
    %c0_240 = arith.constant 0 : index
    %c0_241 = arith.constant 0 : index
    %342 = vector.load %arg17[%c0_239, %c0_240, %c0_241] : memref<1x1x384xf32, #tpu.memory_space<vmem>>, vector<1x1x384xf32>
    %343 = vector.shape_cast %342 : vector<1x1x384xf32> to vector<1x384xf32>
    %344 = vector.shape_cast %341 : vector<1x384xf32> to vector<1x1x384xf32>
    tpu.vector_store %arg17[%c0_239, %c0_240, %c0_241], %344 {strides = array<i32>} : memref<1x1x384xf32, #tpu.memory_space<vmem>>, vector<1x1x384xf32>,
    %345 = vector.extract_strided_slice %168 {offsets = [0, 128], sizes = [3, 384], strides = [1, 1]} : vector<3x640xf32> to vector<3x384xf32>
    %346 = arith.subf %163, %345 : vector<3x384xf32>
    %cst_242 = arith.constant 5.000000e-01 : f32
    %347 = vector.broadcast %cst_242 : f32 to vector<1x384xf32>
    %348 = arith.cmpf ogt, %322, %347 : vector<1x384xf32>
    %cst_243 = arith.constant 1.000000e+00 : f32
    %349 = vector.broadcast %cst_243 : f32 to vector<1x384xf32>
    %350 = arith.subf %349, %305 : vector<1x384xf32>
    %351 = arith.select %348, %305, %350 : vector<1x384xi1>, vector<1x384xf32>
    %352 = math.log %351 : vector<1x384xf32>
    %353 = arith.mulf %0, %352 : vector<1x384xf32>
    %354 = vector.shape_cast %353 : vector<1x384xf32> to vector<1x1x384xf32>
    %cst_244 = arith.constant dense<0.000000e+00> : vector<1xf32>
    %355 = vector.multi_reduction <add>, %354, %cst_244 [1, 2] : vector<1x1x384xf32> to vector<1xf32>
    %356 = vector.shape_cast %355 : vector<1xf32> to vector<1x1x1xf32>
    %357 = vector.extract %356[0, 0, 0] : f32 from vector<1x1x1xf32>
    %cst_245 = arith.constant 0.000000e+00 : f32
    %358 = arith.subf %cst_245, %357 : f32
    %cst_246 = arith.constant 5.000000e-01 : f32
    %359 = vector.broadcast %cst_246 : f32 to vector<1x384xf32>
    %360 = arith.cmpf ogt, %327, %359 : vector<1x384xf32>
    %cst_247 = arith.constant 1.000000e+00 : f32
    %361 = vector.broadcast %cst_247 : f32 to vector<1x384xf32>
    %362 = arith.subf %361, %311 : vector<1x384xf32>
    %363 = arith.select %360, %311, %362 : vector<1x384xi1>, vector<1x384xf32>
    %364 = math.log %363 : vector<1x384xf32>
    %365 = arith.mulf %0, %364 : vector<1x384xf32>
    %366 = vector.shape_cast %365 : vector<1x384xf32> to vector<1x1x384xf32>
    %cst_248 = arith.constant dense<0.000000e+00> : vector<1xf32>
    %367 = vector.multi_reduction <add>, %366, %cst_248 [1, 2] : vector<1x1x384xf32> to vector<1xf32>
    %368 = vector.shape_cast %367 : vector<1xf32> to vector<1x1x1xf32>
    %369 = vector.extract %368[0, 0, 0] : f32 from vector<1x1x1xf32>
    %cst_249 = arith.constant 0.000000e+00 : f32
    %370 = arith.subf %cst_249, %369 : f32
    %cst_250 = arith.constant 5.000000e-01 : f32
    %371 = vector.broadcast %cst_250 : f32 to vector<1x384xf32>
    %372 = arith.cmpf ogt, %332, %371 : vector<1x384xf32>
    %cst_251 = arith.constant 1.000000e+00 : f32
    %373 = vector.broadcast %cst_251 : f32 to vector<1x384xf32>
    %374 = arith.subf %373, %317 : vector<1x384xf32>
    %375 = arith.select %372, %317, %374 : vector<1x384xi1>, vector<1x384xf32>
    %376 = math.log %375 : vector<1x384xf32>
    %377 = arith.mulf %0, %376 : vector<1x384xf32>
    %378 = vector.shape_cast %377 : vector<1x384xf32> to vector<1x1x384xf32>
    %cst_252 = arith.constant dense<0.000000e+00> : vector<1xf32>
    %379 = vector.multi_reduction <add>, %378, %cst_252 [1, 2] : vector<1x1x384xf32> to vector<1xf32>
    %380 = vector.shape_cast %379 : vector<1xf32> to vector<1x1x1xf32>
    %381 = vector.extract %380[0, 0, 0] : f32 from vector<1x1x1xf32>
    %cst_253 = arith.constant 0.000000e+00 : f32
    %382 = arith.subf %cst_253, %381 : f32
    %383 = arith.mulf %346, %346 : vector<3x384xf32>
    %384 = vector.shape_cast %383 : vector<3x384xf32> to vector<1x3x384xf32>
    %cst_254 = arith.constant dense<0.000000e+00> : vector<1xf32>
    %385 = vector.multi_reduction <add>, %384, %cst_254 [1, 2] : vector<1x3x384xf32> to vector<1xf32>
    %386 = vector.shape_cast %385 : vector<1xf32> to vector<1x1x1xf32>
    %387 = vector.extract %386[0, 0, 0] : f32 from vector<1x1x1xf32>
    %388 = vector.shape_cast %163 : vector<3x384xf32> to vector<1x3x384xf32>
    %cst_255 = arith.constant dense<0.000000e+00> : vector<1xf32>
    %389 = vector.multi_reduction <add>, %388, %cst_255 [1, 2] : vector<1x3x384xf32> to vector<1xf32>
    %390 = vector.shape_cast %389 : vector<1xf32> to vector<1x1x1xf32>
    %391 = vector.extract %390[0, 0, 0] : f32 from vector<1x1x1xf32>
    %392 = vector.shape_cast %345 : vector<3x384xf32> to vector<1x3x384xf32>
    %cst_256 = arith.constant dense<0.000000e+00> : vector<1xf32>
    %393 = vector.multi_reduction <add>, %392, %cst_256 [1, 2] : vector<1x3x384xf32> to vector<1xf32>
    %394 = vector.shape_cast %393 : vector<1xf32> to vector<1x1x1xf32>
    %395 = vector.extract %394[0, 0, 0] : f32 from vector<1x1x1xf32>
    %396 = arith.mulf %163, %163 : vector<3x384xf32>
    %397 = vector.shape_cast %396 : vector<3x384xf32> to vector<1x3x384xf32>
    %cst_257 = arith.constant dense<0.000000e+00> : vector<1xf32>
    %398 = vector.multi_reduction <add>, %397, %cst_257 [1, 2] : vector<1x3x384xf32> to vector<1xf32>
    %399 = vector.shape_cast %398 : vector<1xf32> to vector<1x1x1xf32>
    %400 = vector.extract %399[0, 0, 0] : f32 from vector<1x1x1xf32>
    %401 = arith.mulf %345, %345 : vector<3x384xf32>
    %402 = vector.shape_cast %401 : vector<3x384xf32> to vector<1x3x384xf32>
    %cst_258 = arith.constant dense<0.000000e+00> : vector<1xf32>
    %403 = vector.multi_reduction <add>, %402, %cst_258 [1, 2] : vector<1x3x384xf32> to vector<1xf32>
    %404 = vector.shape_cast %403 : vector<1xf32> to vector<1x1x1xf32>
    %405 = vector.extract %404[0, 0, 0] : f32 from vector<1x1x1xf32>
    %406 = arith.mulf %163, %345 : vector<3x384xf32>
    %407 = vector.shape_cast %406 : vector<3x384xf32> to vector<1x3x384xf32>
    %cst_259 = arith.constant dense<0.000000e+00> : vector<1xf32>
    %408 = vector.multi_reduction <add>, %407, %cst_259 [1, 2] : vector<1x3x384xf32> to vector<1xf32>
    %409 = vector.shape_cast %408 : vector<1xf32> to vector<1x1x1xf32>
    %410 = vector.extract %409[0, 0, 0] : f32 from vector<1x1x1xf32>
    %411 = tpu.iota {dimensions = array<i32: 1>} : vector<1x128xi32>
    %cst_260 = arith.constant 0.000000e+00 : f32
    %412 = vector.broadcast %cst_260 : f32 to vector<1x128xf32>
    %c0_i32 = arith.constant 0 : i32
    %413 = vector.broadcast %c0_i32 : i32 to vector<1x128xi32>
    %414 = arith.cmpi eq, %411, %413 : vector<1x128xi32>
    %cst_261 = arith.constant 0.000000e+00 : f32
    %415 = vector.broadcast %358 : f32 to vector<1x128xf32>
    %416 = vector.broadcast %cst_261 : f32 to vector<1x128xf32>
    %417 = arith.select %414, %415, %416 : vector<1x128xi1>, vector<1x128xf32>
    %418 = arith.addf %412, %417 : vector<1x128xf32>
    %c1_i32 = arith.constant 1 : i32
    %419 = vector.broadcast %c1_i32 : i32 to vector<1x128xi32>
    %420 = arith.cmpi eq, %411, %419 : vector<1x128xi32>
    %cst_262 = arith.constant 0.000000e+00 : f32
    %421 = vector.broadcast %370 : f32 to vector<1x128xf32>
    %422 = vector.broadcast %cst_262 : f32 to vector<1x128xf32>
    %423 = arith.select %420, %421, %422 : vector<1x128xi1>, vector<1x128xf32>
    %424 = arith.addf %418, %423 : vector<1x128xf32>
    %c2_i32 = arith.constant 2 : i32
    %425 = vector.broadcast %c2_i32 : i32 to vector<1x128xi32>
    %426 = arith.cmpi eq, %411, %425 : vector<1x128xi32>
    %cst_263 = arith.constant 0.000000e+00 : f32
    %427 = vector.broadcast %382 : f32 to vector<1x128xf32>
    %428 = vector.broadcast %cst_263 : f32 to vector<1x128xf32>
    %429 = arith.select %426, %427, %428 : vector<1x128xi1>, vector<1x128xf32>
    %430 = arith.addf %424, %429 : vector<1x128xf32>
    %c3_i32 = arith.constant 3 : i32
    %431 = vector.broadcast %c3_i32 : i32 to vector<1x128xi32>
    %432 = arith.cmpi eq, %411, %431 : vector<1x128xi32>
    %cst_264 = arith.constant 0.000000e+00 : f32
    %433 = vector.broadcast %387 : f32 to vector<1x128xf32>
    %434 = vector.broadcast %cst_264 : f32 to vector<1x128xf32>
    %435 = arith.select %432, %433, %434 : vector<1x128xi1>, vector<1x128xf32>
    %436 = arith.addf %430, %435 : vector<1x128xf32>
    %c4_i32 = arith.constant 4 : i32
    %437 = vector.broadcast %c4_i32 : i32 to vector<1x128xi32>
    %438 = arith.cmpi eq, %411, %437 : vector<1x128xi32>
    %cst_265 = arith.constant 0.000000e+00 : f32
    %439 = vector.broadcast %391 : f32 to vector<1x128xf32>
    %440 = vector.broadcast %cst_265 : f32 to vector<1x128xf32>
    %441 = arith.select %438, %439, %440 : vector<1x128xi1>, vector<1x128xf32>
    %442 = arith.addf %436, %441 : vector<1x128xf32>
    %c5_i32 = arith.constant 5 : i32
    %443 = vector.broadcast %c5_i32 : i32 to vector<1x128xi32>
    %444 = arith.cmpi eq, %411, %443 : vector<1x128xi32>
    %cst_266 = arith.constant 0.000000e+00 : f32
    %445 = vector.broadcast %395 : f32 to vector<1x128xf32>
    %446 = vector.broadcast %cst_266 : f32 to vector<1x128xf32>
    %447 = arith.select %444, %445, %446 : vector<1x128xi1>, vector<1x128xf32>
    %448 = arith.addf %442, %447 : vector<1x128xf32>
    %c6_i32 = arith.constant 6 : i32
    %449 = vector.broadcast %c6_i32 : i32 to vector<1x128xi32>
    %450 = arith.cmpi eq, %411, %449 : vector<1x128xi32>
    %cst_267 = arith.constant 0.000000e+00 : f32
    %451 = vector.broadcast %400 : f32 to vector<1x128xf32>
    %452 = vector.broadcast %cst_267 : f32 to vector<1x128xf32>
    %453 = arith.select %450, %451, %452 : vector<1x128xi1>, vector<1x128xf32>
    %454 = arith.addf %448, %453 : vector<1x128xf32>
    %c7_i32 = arith.constant 7 : i32
    %455 = vector.broadcast %c7_i32 : i32 to vector<1x128xi32>
    %456 = arith.cmpi eq, %411, %455 : vector<1x128xi32>
    %cst_268 = arith.constant 0.000000e+00 : f32
    %457 = vector.broadcast %405 : f32 to vector<1x128xf32>
    %458 = vector.broadcast %cst_268 : f32 to vector<1x128xf32>
    %459 = arith.select %456, %457, %458 : vector<1x128xi1>, vector<1x128xf32>
    %460 = arith.addf %454, %459 : vector<1x128xf32>
    %c8_i32 = arith.constant 8 : i32
    %461 = vector.broadcast %c8_i32 : i32 to vector<1x128xi32>
    %462 = arith.cmpi eq, %411, %461 : vector<1x128xi32>
    %cst_269 = arith.constant 0.000000e+00 : f32
    %463 = vector.broadcast %410 : f32 to vector<1x128xf32>
    %464 = vector.broadcast %cst_269 : f32 to vector<1x128xf32>
    %465 = arith.select %462, %463, %464 : vector<1x128xi1>, vector<1x128xf32>
    %466 = arith.addf %460, %465 : vector<1x128xf32>
    %c0_270 = arith.constant 0 : index
    %c0_271 = arith.constant 0 : index
    %c0_272 = arith.constant 0 : index
    %467 = vector.load %arg18[%c0_270, %c0_271, %c0_272] : memref<1x1x128xf32, #tpu.memory_space<vmem>>, vector<1x1x128xf32>
    %468 = vector.shape_cast %467 : vector<1x1x128xf32> to vector<1x128xf32>
    %469 = vector.shape_cast %466 : vector<1x128xf32> to vector<1x1x128xf32>
    tpu.vector_store %arg18[%c0_270, %c0_271, %c0_272], %469 {strides = array<i32>} : memref<1x1x128xf32, #tpu.memory_space<vmem>>, vector<1x1x128xf32>,
    return
  }
  func.func @transform_0(%arg0: i32) -> (i32, i32, i32) {
    %c0_i32 = arith.constant 0 : i32
    %c0_i32_0 = arith.constant 0 : i32
    %c0_i32_1 = arith.constant 0 : i32
    return %arg0, %c0_i32, %c0_i32_0 : i32, i32, i32
  }
  func.func @transform_1(%arg0: i32) -> (i32, i32, i32) {
    %c0_i32 = arith.constant 0 : i32
    %c0_i32_0 = arith.constant 0 : i32
    %c0_i32_1 = arith.constant 0 : i32
    return %arg0, %c0_i32, %c0_i32_0 : i32, i32, i32
  }
  func.func @transform_2(%arg0: i32) -> (i32, i32) {
    %c0_i32 = arith.constant 0 : i32
    %c0_i32_0 = arith.constant 0 : i32
    %c0_i32_1 = arith.constant 0 : i32
    return %c0_i32, %c0_i32_0 : i32, i32
  }
  func.func @transform_3(%arg0: i32) -> (i32, i32) {
    %c0_i32 = arith.constant 0 : i32
    %c0_i32_0 = arith.constant 0 : i32
    %c0_i32_1 = arith.constant 0 : i32
    return %c0_i32, %c0_i32_0 : i32, i32
  }
  func.func @transform_4(%arg0: i32) -> (i32, i32) {
    %c0_i32 = arith.constant 0 : i32
    %c0_i32_0 = arith.constant 0 : i32
    %c0_i32_1 = arith.constant 0 : i32
    return %c0_i32, %c0_i32_0 : i32, i32
  }
  func.func @transform_5(%arg0: i32) -> (i32, i32) {
    %c0_i32 = arith.constant 0 : i32
    %c0_i32_0 = arith.constant 0 : i32
    %c0_i32_1 = arith.constant 0 : i32
    return %c0_i32, %c0_i32_0 : i32, i32
  }
  func.func @transform_6(%arg0: i32) -> (i32, i32) {
    %c0_i32 = arith.constant 0 : i32
    %c0_i32_0 = arith.constant 0 : i32
    %c0_i32_1 = arith.constant 0 : i32
    return %c0_i32, %c0_i32_0 : i32, i32
  }
  func.func @transform_7(%arg0: i32) -> (i32, i32) {
    %c0_i32 = arith.constant 0 : i32
    %c0_i32_0 = arith.constant 0 : i32
    %c0_i32_1 = arith.constant 0 : i32
    return %c0_i32, %c0_i32_0 : i32, i32
  }
  func.func @transform_8(%arg0: i32) -> (i32, i32) {
    %c0_i32 = arith.constant 0 : i32
    %c0_i32_0 = arith.constant 0 : i32
    %c0_i32_1 = arith.constant 0 : i32
    return %c0_i32, %c0_i32_0 : i32, i32
  }
  func.func @transform_9(%arg0: i32) -> (i32, i32) {
    %c0_i32 = arith.constant 0 : i32
    %c0_i32_0 = arith.constant 0 : i32
    %c0_i32_1 = arith.constant 0 : i32
    return %c0_i32, %c0_i32_0 : i32, i32
  }
  func.func @transform_10(%arg0: i32) -> (i32, i32) {
    %c0_i32 = arith.constant 0 : i32
    %c0_i32_0 = arith.constant 0 : i32
    %c0_i32_1 = arith.constant 0 : i32
    return %c0_i32, %c0_i32_0 : i32, i32
  }
  func.func @transform_11(%arg0: i32) -> (i32, i32) {
    %c0_i32 = arith.constant 0 : i32
    %c0_i32_0 = arith.constant 0 : i32
    %c0_i32_1 = arith.constant 0 : i32
    return %c0_i32, %c0_i32_0 : i32, i32
  }
  func.func @transform_12(%arg0: i32) -> (i32, i32) {
    %c0_i32 = arith.constant 0 : i32
    %c0_i32_0 = arith.constant 0 : i32
    %c0_i32_1 = arith.constant 0 : i32
    return %c0_i32, %c0_i32_0 : i32, i32
  }
  func.func @transform_13(%arg0: i32) -> (i32, i32) {
    %c0_i32 = arith.constant 0 : i32
    %c0_i32_0 = arith.constant 0 : i32
    %c0_i32_1 = arith.constant 0 : i32
    return %c0_i32, %c0_i32_0 : i32, i32
  }
  func.func @transform_14(%arg0: i32) -> (i32, i32, i32) {
    %c0_i32 = arith.constant 0 : i32
    %c0_i32_0 = arith.constant 0 : i32
    %c0_i32_1 = arith.constant 0 : i32
    return %arg0, %c0_i32, %c0_i32_0 : i32, i32, i32
  }
  func.func @transform_15(%arg0: i32) -> (i32, i32, i32) {
    %c0_i32 = arith.constant 0 : i32
    %c0_i32_0 = arith.constant 0 : i32
    %c0_i32_1 = arith.constant 0 : i32
    return %arg0, %c0_i32, %c0_i32_0 : i32, i32, i32
  }
  func.func @transform_16(%arg0: i32) -> (i32, i32, i32) {
    %c0_i32 = arith.constant 0 : i32
    %c0_i32_0 = arith.constant 0 : i32
    %c0_i32_1 = arith.constant 0 : i32
    return %arg0, %c0_i32, %c0_i32_0 : i32, i32, i32
  }
  func.func @transform_17(%arg0: i32) -> (i32, i32, i32) {
    %c0_i32 = arith.constant 0 : i32
    %c0_i32_0 = arith.constant 0 : i32
    %c0_i32_1 = arith.constant 0 : i32
    return %arg0, %c0_i32, %c0_i32_0 : i32, i32, i32
  }
}

</mosaic_0001>

<llo_original>
// kernel: _lambda_.1
$region0: #{_lambda_.1}
  #allocation0 [shape = 'u32[]', space=smem, size = 0x4, offset = 0x4, fixed_abs, tag = 'smem constant byte address 0x4 - core index']
  #allocation1 [shape = 'u32[144,128]{1,0:T(1,128)}', space=vmem, size = 0x12000, scoped, tag = 'internal scratch']
  #allocation2 [shape = 'bf16[8,640]{1,0:T(8,128)(2,1)}', space=vmem, size = 0x2800, scoped, tag = 'scratch operand']
  #allocation3 [shape = 'bf16[16,640]{1,0:T(8,128)(2,1)}', space=vmem, size = 0x5000, scoped, tag = 'scratch operand']
  #allocation4 [shape = 'bf16[16,640]{1,0:T(8,128)(2,1)}', space=vmem, size = 0x5000, scoped, tag = 'scratch operand']
  #allocation5 [shape = 'bf16[8,640]{1,0:T(8,128)(2,1)}', space=vmem, size = 0x2800, scoped, tag = 'scratch operand']
  #allocation6 [shape = 'bf16[8,640]{1,0:T(8,128)(2,1)}', space=vmem, size = 0x2800, scoped, tag = 'scratch operand']
  %s0 = inlined_call_operand.vmem [shape: bf16[2,8,640], index: 0, kind: input, shape index: {}]
  %s1 = inlined_call_operand.vmem [shape: f32[2,3,640], index: 1, kind: input, shape index: {}]
  %s2 = inlined_call_operand.vmem [shape: f32[3,384], index: 2, kind: input, shape index: {}]
  %s3 = inlined_call_operand.vmem [shape: bf16[8,72], index: 3, kind: input, shape index: {}]
  %s4 = inlined_call_operand.vmem [shape: bf16[16,72], index: 4, kind: input, shape index: {}]
  %s5 = inlined_call_operand.vmem [shape: bf16[8,144], index: 5, kind: input, shape index: {}]
  %s6 = inlined_call_operand.vmem [shape: bf16[8,72], index: 6, kind: input, shape index: {}]
  %s7 = inlined_call_operand.vmem [shape: bf16[8,72], index: 7, kind: input, shape index: {}]
  %s8 = inlined_call_operand.vmem [shape: bf16[3,72], index: 8, kind: input, shape index: {}]
  %s9 = inlined_call_operand.vmem [shape: f32[8,1], index: 9, kind: input, shape index: {}]
  %s10 = inlined_call_operand.vmem [shape: f32[16,1], index: 10, kind: input, shape index: {}]
  %s11 = inlined_call_operand.vmem [shape: f32[8,1], index: 11, kind: input, shape index: {}]
  %s12 = inlined_call_operand.vmem [shape: f32[8,1], index: 12, kind: input, shape index: {}]
  %s13 = inlined_call_operand.vmem [shape: f32[3,1], index: 13, kind: input, shape index: {}]
  %s14 = inlined_call_operand.vmem [shape: f32[2,3,384], index: 14, kind: output, shape index: {0}]
  %s15 = inlined_call_operand.vmem [shape: f32[2,1,384], index: 15, kind: output, shape index: {1}]
  %s16 = inlined_call_operand.vmem [shape: f32[2,1,384], index: 16, kind: output, shape index: {2}]
  %s17 = inlined_call_operand.vmem [shape: f32[2,1,128], index: 17, kind: output, shape index: {3}]
  %18 = xla_tuple %s14, %s15, %s16, %s17
  %s19 = sld [smem:[#allocation0]]
  $region113: #{_lambda_.1} parent=0
    _
  %s21 = ssub.s32 1, %s19
  %s22 = scalar_select 0, %s21, %s19
  loop: start=0, step=1, limit=4
  $region2: #{_lambda_.1} parent=0 // loop_pre_header
    _
  $region3: #{_lambda_.1} parent=0 // loop_header
    %s24 = sphi 0, %s28
    %p25 = scmp.ge.s32.totalorder %s24, 4
    %s34 = sphi 0, %s36
    %s37 = sphi 0, %s34
    %s38 = sphi 0, %s37
    %s54 = sphi 0, %s38
    %s60 = sphi 0, %s62
    %s63 = sphi 0, %s60
    %s64 = sphi 0, %s63
    %s80 = sphi 0, %s64
    %s84 = sphi 0, %s84
    %s86 = sphi 0, %s84
    %s87 = sphi 0, %s86
    %s101 = sphi 0, %s87
    %s105 = sphi 0, %s105
    %s107 = sphi 0, %s105
    %s108 = sphi 0, %s107
    %s122 = sphi 0, %s108
    %s126 = sphi 0, %s126
    %s128 = sphi 0, %s126
    %s129 = sphi 0, %s128
    %s143 = sphi 0, %s129
    %s147 = sphi 0, %s147
    %s149 = sphi 0, %s147
    %s150 = sphi 0, %s149
    %s164 = sphi 0, %s150
    %s168 = sphi 0, %s168
    %s170 = sphi 0, %s168
    %s171 = sphi 0, %s170
    %s185 = sphi 0, %s171
    %s189 = sphi 0, %s189
    %s191 = sphi 0, %s189
    %s192 = sphi 0, %s191
    %s206 = sphi 0, %s192
    %s210 = sphi 0, %s210
    %s212 = sphi 0, %s210
    %s213 = sphi 0, %s212
    %s227 = sphi 0, %s213
    %s231 = sphi 0, %s231
    %s233 = sphi 0, %s231
    %s234 = sphi 0, %s233
    %s248 = sphi 0, %s234
    %s252 = sphi 0, %s252
    %s254 = sphi 0, %s252
    %s255 = sphi 0, %s254
    %s269 = sphi 0, %s255
    %s273 = sphi 0, %s273
    %s275 = sphi 0, %s273
    %s276 = sphi 0, %s275
    %s290 = sphi 0, %s276
    %s294 = sphi 0, %s294
    %s296 = sphi 0, %s294
    %s297 = sphi 0, %s296
    %s311 = sphi 0, %s297
    %s315 = sphi 0, %s315
    %s317 = sphi 0, %s315
    %s318 = sphi 0, %s317
    %s332 = sphi 0, %s318
    %s338 = sphi 0, %s340
    %s341 = sphi 0, %s338
    %s342 = sphi 0, %s341
    %s358 = sphi 0, %s342
    %s364 = sphi 0, %s366
    %s367 = sphi 0, %s364
    %s368 = sphi 0, %s367
    %s384 = sphi 0, %s368
    %s390 = sphi 0, %s392
    %s393 = sphi 0, %s390
    %s394 = sphi 0, %s393
    %s410 = sphi 0, %s394
    %s416 = sphi 0, %s418
    %s419 = sphi 0, %s416
    %s420 = sphi 0, %s419
    %s436 = sphi 0, %s420
  $region4: #{_lambda_.1} parent=0 // loop_header_branch
    %27 = sbr.rel (%p25) target = $region8
  $region5: #{_lambda_.1} parent=0 // loop_body
    %s29 = ssub.s32 %s24, 1
    %s30 = ssub.s32 %s24, 2
    %s31 = sadd.s32 %s24, 1
    %s32 = ssub.s32 %s24, %s31
    %p33 = scmp.eq.s32.totalorder %s32, 0
    %s35 = sadd.s32 %s34, 1
    %s36 = scalar_select %p33, %s34, %s35
    %p39 = pneg %p33
    %p40 = scmp.eq.s32.totalorder %s24, 1
    %p41 = por %p39, %p40
    %p42 = scmp.ne.s32.totalorder %s34, %s37
    %p43 = scmp.eq.s32.totalorder %s24, 0
    %p44 = por %p42, %p43
    %p45 = scmp.ne.s32.totalorder %s34, %s37
    %p46 = scmp.eq.s32.totalorder %s29, 1
    %p47 = por %p45, %p46
    %p48 = scmp.ne.s32.totalorder %s37, %s38
    %p49 = scmp.eq.s32.totalorder %s29, 0
    %p50 = por %p48, %p49
    %p51 = scmp.ne.s32.totalorder %s37, %s38
    %p52 = scmp.eq.s32.totalorder %s30, 1
    %p53 = por %p51, %p52
    %p55 = scmp.ne.s32.totalorder %s38, %s54
    %p56 = scmp.eq.s32.totalorder %s30, 0
    %p57 = por %p55, %p56
    %s58 = ssub.s32 %s24, %s31
    %p59 = scmp.eq.s32.totalorder %s58, 0
    %s61 = sadd.s32 %s60, 1
    %s62 = scalar_select %p59, %s60, %s61
    %p65 = pneg %p59
    %p66 = scmp.eq.s32.totalorder %s24, 1
    %p67 = por %p65, %p66
    %p68 = scmp.ne.s32.totalorder %s60, %s63
    %p69 = scmp.eq.s32.totalorder %s24, 0
    %p70 = por %p68, %p69
    %p71 = scmp.ne.s32.totalorder %s60, %s63
    %p72 = scmp.eq.s32.totalorder %s29, 1
    %p73 = por %p71, %p72
    %p74 = scmp.ne.s32.totalorder %s63, %s64
    %p75 = scmp.eq.s32.totalorder %s29, 0
    %p76 = por %p74, %p75
    %p77 = scmp.ne.s32.totalorder %s63, %s64
    %p78 = scmp.eq.s32.totalorder %s30, 1
    %p79 = por %p77, %p78
    %p81 = scmp.ne.s32.totalorder %s64, %s80
    %p82 = scmp.eq.s32.totalorder %s30, 0
    %p83 = por %p81, %p82
    %s85 = sadd.s32 %s84, 1
    %p88 = scmp.eq.s32.totalorder %s24, 1
    %p89 = scmp.ne.s32.totalorder %s84, %s86
    %p90 = scmp.eq.s32.totalorder %s24, 0
    %p91 = por %p89, %p90
    %p92 = scmp.ne.s32.totalorder %s84, %s86
    %p93 = scmp.eq.s32.totalorder %s29, 1
    %p94 = por %p92, %p93
    %p95 = scmp.ne.s32.totalorder %s86, %s87
    %p96 = scmp.eq.s32.totalorder %s29, 0
    %p97 = por %p95, %p96
    %p98 = scmp.ne.s32.totalorder %s86, %s87
    %p99 = scmp.eq.s32.totalorder %s30, 1
    %p100 = por %p98, %p99
    %p102 = scmp.ne.s32.totalorder %s87, %s101
    %p103 = scmp.eq.s32.totalorder %s30, 0
    %p104 = por %p102, %p103
    %s106 = sadd.s32 %s105, 1
    %p109 = scmp.eq.s32.totalorder %s24, 1
    %p110 = scmp.ne.s32.totalorder %s105, %s107
    %p111 = scmp.eq.s32.totalorder %s24, 0
    %p112 = por %p110, %p111
    %p113 = scmp.ne.s32.totalorder %s105, %s107
    %p114 = scmp.eq.s32.totalorder %s29, 1
    %p115 = por %p113, %p114
    %p116 = scmp.ne.s32.totalorder %s107, %s108
    %p117 = scmp.eq.s32.totalorder %s29, 0
    %p118 = por %p116, %p117
    %p119 = scmp.ne.s32.totalorder %s107, %s108
    %p120 = scmp.eq.s32.totalorder %s30, 1
    %p121 = por %p119, %p120
    %p123 = scmp.ne.s32.totalorder %s108, %s122
    %p124 = scmp.eq.s32.totalorder %s30, 0
    %p125 = por %p123, %p124
    %s127 = sadd.s32 %s126, 1
    %p130 = scmp.eq.s32.totalorder %s24, 1
    %p131 = scmp.ne.s32.totalorder %s126, %s128
    %p132 = scmp.eq.s32.totalorder %s24, 0
    %p133 = por %p131, %p132
    %p134 = scmp.ne.s32.totalorder %s126, %s128
    %p135 = scmp.eq.s32.totalorder %s29, 1
    %p136 = por %p134, %p135
    %p137 = scmp.ne.s32.totalorder %s128, %s129
    %p138 = scmp.eq.s32.totalorder %s29, 0
    %p139 = por %p137, %p138
    %p140 = scmp.ne.s32.totalorder %s128, %s129
    %p141 = scmp.eq.s32.totalorder %s30, 1
    %p142 = por %p140, %p141
    %p144 = scmp.ne.s32.totalorder %s129, %s143
    %p145 = scmp.eq.s32.totalorder %s30, 0
    %p146 = por %p144, %p145
    %s148 = sadd.s32 %s147, 1
    %p151 = scmp.eq.s32.totalorder %s24, 1
    %p152 = scmp.ne.s32.totalorder %s147, %s149
    %p153 = scmp.eq.s32.totalorder %s24, 0
    %p154 = por %p152, %p153
    %p155 = scmp.ne.s32.totalorder %s147, %s149
    %p156 = scmp.eq.s32.totalorder %s29, 1
    %p157 = por %p155, %p156
    %p158 = scmp.ne.s32.totalorder %s149, %s150
    %p159 = scmp.eq.s32.totalorder %s29, 0
    %p160 = por %p158, %p159
    %p161 = scmp.ne.s32.totalorder %s149, %s150
    %p162 = scmp.eq.s32.totalorder %s30, 1
    %p163 = por %p161, %p162
    %p165 = scmp.ne.s32.totalorder %s150, %s164
    %p166 = scmp.eq.s32.totalorder %s30, 0
    %p167 = por %p165, %p166
    %s169 = sadd.s32 %s168, 1
    %p172 = scmp.eq.s32.totalorder %s24, 1
    %p173 = scmp.ne.s32.totalorder %s168, %s170
    %p174 = scmp.eq.s32.totalorder %s24, 0
    %p175 = por %p173, %p174
    %p176 = scmp.ne.s32.totalorder %s168, %s170
    %p177 = scmp.eq.s32.totalorder %s29, 1
    %p178 = por %p176, %p177
    %p179 = scmp.ne.s32.totalorder %s170, %s171
    %p180 = scmp.eq.s32.totalorder %s29, 0
    %p181 = por %p179, %p180
    %p182 = scmp.ne.s32.totalorder %s170, %s171
    %p183 = scmp.eq.s32.totalorder %s30, 1
    %p184 = por %p182, %p183
    %p186 = scmp.ne.s32.totalorder %s171, %s185
    %p187 = scmp.eq.s32.totalorder %s30, 0
    %p188 = por %p186, %p187
    %s190 = sadd.s32 %s189, 1
    %p193 = scmp.eq.s32.totalorder %s24, 1
    %p194 = scmp.ne.s32.totalorder %s189, %s191
    %p195 = scmp.eq.s32.totalorder %s24, 0
    %p196 = por %p194, %p195
    %p197 = scmp.ne.s32.totalorder %s189, %s191
    %p198 = scmp.eq.s32.totalorder %s29, 1
    %p199 = por %p197, %p198
    %p200 = scmp.ne.s32.totalorder %s191, %s192
    %p201 = scmp.eq.s32.totalorder %s29, 0
    %p202 = por %p200, %p201
    %p203 = scmp.ne.s32.totalorder %s191, %s192
    %p204 = scmp.eq.s32.totalorder %s30, 1
    %p205 = por %p203, %p204
    %p207 = scmp.ne.s32.totalorder %s192, %s206
    %p208 = scmp.eq.s32.totalorder %s30, 0
    %p209 = por %p207, %p208
    %s211 = sadd.s32 %s210, 1
    %p214 = scmp.eq.s32.totalorder %s24, 1
    %p215 = scmp.ne.s32.totalorder %s210, %s212
    %p216 = scmp.eq.s32.totalorder %s24, 0
    %p217 = por %p215, %p216
    %p218 = scmp.ne.s32.totalorder %s210, %s212
    %p219 = scmp.eq.s32.totalorder %s29, 1
    %p220 = por %p218, %p219
    %p221 = scmp.ne.s32.totalorder %s212, %s213
    %p222 = scmp.eq.s32.totalorder %s29, 0
    %p223 = por %p221, %p222
    %p224 = scmp.ne.s32.totalorder %s212, %s213
    %p225 = scmp.eq.s32.totalorder %s30, 1
    %p226 = por %p224, %p225
    %p228 = scmp.ne.s32.totalorder %s213, %s227
    %p229 = scmp.eq.s32.totalorder %s30, 0
    %p230 = por %p228, %p229
    %s232 = sadd.s32 %s231, 1
    %p235 = scmp.eq.s32.totalorder %s24, 1
    %p236 = scmp.ne.s32.totalorder %s231, %s233
    %p237 = scmp.eq.s32.totalorder %s24, 0
    %p238 = por %p236, %p237
    %p239 = scmp.ne.s32.totalorder %s231, %s233
    %p240 = scmp.eq.s32.totalorder %s29, 1
    %p241 = por %p239, %p240
    %p242 = scmp.ne.s32.totalorder %s233, %s234
    %p243 = scmp.eq.s32.totalorder %s29, 0
    %p244 = por %p242, %p243
    %p245 = scmp.ne.s32.totalorder %s233, %s234
    %p246 = scmp.eq.s32.totalorder %s30, 1
    %p247 = por %p245, %p246
    %p249 = scmp.ne.s32.totalorder %s234, %s248
    %p250 = scmp.eq.s32.totalorder %s30, 0
    %p251 = por %p249, %p250
    %s253 = sadd.s32 %s252, 1
    %p256 = scmp.eq.s32.totalorder %s24, 1
    %p257 = scmp.ne.s32.totalorder %s252, %s254
    %p258 = scmp.eq.s32.totalorder %s24, 0
    %p259 = por %p257, %p258
    %p260 = scmp.ne.s32.totalorder %s252, %s254
    %p261 = scmp.eq.s32.totalorder %s29, 1
    %p262 = por %p260, %p261
    %p263 = scmp.ne.s32.totalorder %s254, %s255
    %p264 = scmp.eq.s32.totalorder %s29, 0
    %p265 = por %p263, %p264
    %p266 = scmp.ne.s32.totalorder %s254, %s255
    %p267 = scmp.eq.s32.totalorder %s30, 1
    %p268 = por %p266, %p267
    %p270 = scmp.ne.s32.totalorder %s255, %s269
    %p271 = scmp.eq.s32.totalorder %s30, 0
    %p272 = por %p270, %p271
    %s274 = sadd.s32 %s273, 1
    %p277 = scmp.eq.s32.totalorder %s24, 1
    %p278 = scmp.ne.s32.totalorder %s273, %s275
    %p279 = scmp.eq.s32.totalorder %s24, 0
    %p280 = por %p278, %p279
    %p281 = scmp.ne.s32.totalorder %s273, %s275
    %p282 = scmp.eq.s32.totalorder %s29, 1
    %p283 = por %p281, %p282
    %p284 = scmp.ne.s32.totalorder %s275, %s276
    %p285 = scmp.eq.s32.totalorder %s29, 0
    %p286 = por %p284, %p285
    %p287 = scmp.ne.s32.totalorder %s275, %s276
    %p288 = scmp.eq.s32.totalorder %s30, 1
    %p289 = por %p287, %p288
    %p291 = scmp.ne.s32.totalorder %s276, %s290
    %p292 = scmp.eq.s32.totalorder %s30, 0
    %p293 = por %p291, %p292
    %s295 = sadd.s32 %s294, 1
    %p298 = scmp.eq.s32.totalorder %s24, 1
    %p299 = scmp.ne.s32.totalorder %s294, %s296
    %p300 = scmp.eq.s32.totalorder %s24, 0
    %p301 = por %p299, %p300
    %p302 = scmp.ne.s32.totalorder %s294, %s296
    %p303 = scmp.eq.s32.totalorder %s29, 1
    %p304 = por %p302, %p303
    %p305 = scmp.ne.s32.totalorder %s296, %s297
    %p306 = scmp.eq.s32.totalorder %s29, 0
    %p307 = por %p305, %p306
    %p308 = scmp.ne.s32.totalorder %s296, %s297
    %p309 = scmp.eq.s32.totalorder %s30, 1
    %p310 = por %p308, %p309
    %p312 = scmp.ne.s32.totalorder %s297, %s311
    %p313 = scmp.eq.s32.totalorder %s30, 0
    %p314 = por %p312, %p313
    %s316 = sadd.s32 %s315, 1
    %p319 = scmp.eq.s32.totalorder %s24, 1
    %p320 = scmp.ne.s32.totalorder %s315, %s317
    %p321 = scmp.eq.s32.totalorder %s24, 0
    %p322 = por %p320, %p321
    %p323 = scmp.ne.s32.totalorder %s315, %s317
    %p324 = scmp.eq.s32.totalorder %s29, 1
    %p325 = por %p323, %p324
    %p326 = scmp.ne.s32.totalorder %s317, %s318
    %p327 = scmp.eq.s32.totalorder %s29, 0
    %p328 = por %p326, %p327
    %p329 = scmp.ne.s32.totalorder %s317, %s318
    %p330 = scmp.eq.s32.totalorder %s30, 1
    %p331 = por %p329, %p330
    %p333 = scmp.ne.s32.totalorder %s318, %s332
    %p334 = scmp.eq.s32.totalorder %s30, 0
    %p335 = por %p333, %p334
    %s336 = ssub.s32 %s24, %s31
    %p337 = scmp.eq.s32.totalorder %s336, 0
    %s339 = sadd.s32 %s338, 1
    %s340 = scalar_select %p337, %s338, %s339
    %p343 = pneg %p337
    %p344 = scmp.eq.s32.totalorder %s24, 1
    %p345 = por %p343, %p344
    %p346 = scmp.ne.s32.totalorder %s338, %s341
    %p347 = scmp.eq.s32.totalorder %s24, 0
    %p348 = por %p346, %p347
    %p349 = scmp.ne.s32.totalorder %s338, %s341
    %p350 = scmp.eq.s32.totalorder %s29, 1
    %p351 = por %p349, %p350
    %p352 = scmp.ne.s32.totalorder %s341, %s342
    %p353 = scmp.eq.s32.totalorder %s29, 0
    %p354 = por %p352, %p353
    %p355 = scmp.ne.s32.totalorder %s341, %s342
    %p356 = scmp.eq.s32.totalorder %s30, 1
    %p357 = por %p355, %p356
    %p359 = scmp.ne.s32.totalorder %s342, %s358
    %p360 = scmp.eq.s32.totalorder %s30, 0
    %p361 = por %p359, %p360
    %s362 = ssub.s32 %s24, %s31
    %p363 = scmp.eq.s32.totalorder %s362, 0
    %s365 = sadd.s32 %s364, 1
    %s366 = scalar_select %p363, %s364, %s365
    %p369 = pneg %p363
    %p370 = scmp.eq.s32.totalorder %s24, 1
    %p371 = por %p369, %p370
    %p372 = scmp.ne.s32.totalorder %s364, %s367
    %p373 = scmp.eq.s32.totalorder %s24, 0
    %p374 = por %p372, %p373
    %p375 = scmp.ne.s32.totalorder %s364, %s367
    %p376 = scmp.eq.s32.totalorder %s29, 1
    %p377 = por %p375, %p376
    %p378 = scmp.ne.s32.totalorder %s367, %s368
    %p379 = scmp.eq.s32.totalorder %s29, 0
    %p380 = por %p378, %p379
    %p381 = scmp.ne.s32.totalorder %s367, %s368
    %p382 = scmp.eq.s32.totalorder %s30, 1
    %p383 = por %p381, %p382
    %p385 = scmp.ne.s32.totalorder %s368, %s384
    %p386 = scmp.eq.s32.totalorder %s30, 0
    %p387 = por %p385, %p386
    %s388 = ssub.s32 %s24, %s31
    %p389 = scmp.eq.s32.totalorder %s388, 0
    %s391 = sadd.s32 %s390, 1
    %s392 = scalar_select %p389, %s390, %s391
    %p395 = pneg %p389
    %p396 = scmp.eq.s32.totalorder %s24, 1
    %p397 = por %p395, %p396
    %p398 = scmp.ne.s32.totalorder %s390, %s393
    %p399 = scmp.eq.s32.totalorder %s24, 0
    %p400 = por %p398, %p399
    %p401 = scmp.ne.s32.totalorder %s390, %s393
    %p402 = scmp.eq.s32.totalorder %s29, 1
    %p403 = por %p401, %p402
    %p404 = scmp.ne.s32.totalorder %s393, %s394
    %p405 = scmp.eq.s32.totalorder %s29, 0
    %p406 = por %p404, %p405
    %p407 = scmp.ne.s32.totalorder %s393, %s394
    %p408 = scmp.eq.s32.totalorder %s30, 1
    %p409 = por %p407, %p408
    %p411 = scmp.ne.s32.totalorder %s394, %s410
    %p412 = scmp.eq.s32.totalorder %s30, 0
    %p413 = por %p411, %p412
    %s414 = ssub.s32 %s24, %s31
    %p415 = scmp.eq.s32.totalorder %s414, 0
    %s417 = sadd.s32 %s416, 1
    %s418 = scalar_select %p415, %s416, %s417
    %p421 = pneg %p415
    %p422 = scmp.eq.s32.totalorder %s24, 1
    %p423 = por %p421, %p422
    %p424 = scmp.ne.s32.totalorder %s416, %s419
    %p425 = scmp.eq.s32.totalorder %s24, 0
    %p426 = por %p424, %p425
    %p427 = scmp.ne.s32.totalorder %s416, %s419
    %p428 = scmp.eq.s32.totalorder %s29, 1
    %p429 = por %p427, %p428
    %p430 = scmp.ne.s32.totalorder %s419, %s420
    %p431 = scmp.eq.s32.totalorder %s29, 0
    %p432 = por %p430, %p431
    %p433 = scmp.ne.s32.totalorder %s419, %s420
    %p434 = scmp.eq.s32.totalorder %s30, 1
    %p435 = por %p433, %p434
    %p437 = scmp.ne.s32.totalorder %s420, %s436
    %p438 = scmp.eq.s32.totalorder %s30, 0
    %p439 = por %p437, %p438
    %p440 = scmp.le.s32.totalorder 1, %s24
    %p441 = scmp.lt.s32.totalorder %s24, 3
    %p442 = pnand %p440, %p441
    %p443 = pneg %p442
    // Predicated region
    $region9: #{_lambda_.1} parent=5 // pred_check
      _
    $region10: #{_lambda_.1} parent=5 // pred_check_branch
      %445 = sbr.rel (%p442) target = $region12
    $region11: #{_lambda_.1} parent=5 // pred_region
      %s446 = ssub.s32 %s24, 1
      // Predicated region
      $region13: #{_lambda_.1} parent=11 // pred_check
        %p447 = pneg %p97
      $region14: #{_lambda_.1} parent=11 // pred_check_branch
        %449 = sbr.rel (%p447) target = $region16
      $region15: #{_lambda_.1} parent=11 // pred_region
        _
      $region16: #{_lambda_.1} parent=11 // pred_fallthru
        _
      // Predicated region
      $region17: #{_lambda_.1} parent=11 // pred_check
        %p450 = pneg %p118
      $region18: #{_lambda_.1} parent=11 // pred_check_branch
        %452 = sbr.rel (%p450) target = $region20
      $region19: #{_lambda_.1} parent=11 // pred_region
        _
      $region20: #{_lambda_.1} parent=11 // pred_fallthru
        _
      // Predicated region
      $region21: #{_lambda_.1} parent=11 // pred_check
        %p453 = pneg %p139
      $region22: #{_lambda_.1} parent=11 // pred_check_branch
        %455 = sbr.rel (%p453) target = $region24
      $region23: #{_lambda_.1} parent=11 // pred_region
        _
      $region24: #{_lambda_.1} parent=11 // pred_fallthru
        _
      // Predicated region
      $region25: #{_lambda_.1} parent=11 // pred_check
        %p456 = pneg %p160
      $region26: #{_lambda_.1} parent=11 // pred_check_branch
        %458 = sbr.rel (%p456) target = $region28
      $region27: #{_lambda_.1} parent=11 // pred_region
        _
      $region28: #{_lambda_.1} parent=11 // pred_fallthru
        _
      // Predicated region
      $region29: #{_lambda_.1} parent=11 // pred_check
        %p459 = pneg %p181
      $region30: #{_lambda_.1} parent=11 // pred_check_branch
        %461 = sbr.rel (%p459) target = $region32
      $region31: #{_lambda_.1} parent=11 // pred_region
        _
      $region32: #{_lambda_.1} parent=11 // pred_fallthru
        _
      // Predicated region
      $region33: #{_lambda_.1} parent=11 // pred_check
        %p462 = pneg %p202
      $region34: #{_lambda_.1} parent=11 // pred_check_branch
        %464 = sbr.rel (%p462) target = $region36
      $region35: #{_lambda_.1} parent=11 // pred_region
        _
      $region36: #{_lambda_.1} parent=11 // pred_fallthru
        _
      // Predicated region
      $region37: #{_lambda_.1} parent=11 // pred_check
        %p465 = pneg %p223
      $region38: #{_lambda_.1} parent=11 // pred_check_branch
        %467 = sbr.rel (%p465) target = $region40
      $region39: #{_lambda_.1} parent=11 // pred_region
        _
      $region40: #{_lambda_.1} parent=11 // pred_fallthru
        _
      // Predicated region
      $region41: #{_lambda_.1} parent=11 // pred_check
        %p468 = pneg %p244
      $region42: #{_lambda_.1} parent=11 // pred_check_branch
        %470 = sbr.rel (%p468) target = $region44
      $region43: #{_lambda_.1} parent=11 // pred_region
        _
      $region44: #{_lambda_.1} parent=11 // pred_fallthru
        _
      // Predicated region
      $region45: #{_lambda_.1} parent=11 // pred_check
        %p471 = pneg %p265
      $region46: #{_lambda_.1} parent=11 // pred_check_branch
        %473 = sbr.rel (%p471) target = $region48
      $region47: #{_lambda_.1} parent=11 // pred_region
        _
      $region48: #{_lambda_.1} parent=11 // pred_fallthru
        _
      // Predicated region
      $region49: #{_lambda_.1} parent=11 // pred_check
        %p474 = pneg %p286
      $region50: #{_lambda_.1} parent=11 // pred_check_branch
        %476 = sbr.rel (%p474) target = $region52
      $region51: #{_lambda_.1} parent=11 // pred_region
        _
      $region52: #{_lambda_.1} parent=11 // pred_fallthru
        _
      // Predicated region
      $region53: #{_lambda_.1} parent=11 // pred_check
        %p477 = pneg %p307
      $region54: #{_lambda_.1} parent=11 // pred_check_branch
        %479 = sbr.rel (%p477) target = $region56
      $region55: #{_lambda_.1} parent=11 // pred_region
        _
      $region56: #{_lambda_.1} parent=11 // pred_fallthru
        _
      // Predicated region
      $region57: #{_lambda_.1} parent=11 // pred_check
        %p480 = pneg %p328
      $region58: #{_lambda_.1} parent=11 // pred_check_branch
        %482 = sbr.rel (%p480) target = $region60
      $region59: #{_lambda_.1} parent=11 // pred_region
        _
      $region60: #{_lambda_.1} parent=11 // pred_fallthru
        _
    $region12: #{_lambda_.1} parent=5 // pred_fallthru
      _
    %p483 = scmp.lt.s32.totalorder %s24, 2
    // Predicated region
    $region61: #{_lambda_.1} parent=5 // pred_check
      %p484 = pneg %p483
    $region62: #{_lambda_.1} parent=5 // pred_check_branch
      %486 = sbr.rel (%p484) target = $region64
    $region63: #{_lambda_.1} parent=5 // pred_region
      // Predicated region
      $region65: #{_lambda_.1} parent=63 // pred_check
        %p487 = pneg %p44
      $region66: #{_lambda_.1} parent=63 // pred_check_branch
        %489 = sbr.rel (%p487) target = $region68
      $region67: #{_lambda_.1} parent=63 // pred_region
        %p490 = scmp.lt.s32.totalorder %s24, 1
        %s491 = scalar_select %p490, %s24, 1
        %s492 = smul.addr %s491, 5
        %s493 = smul.addr %s492, 4
        %s494 = scalar_lea.vmem %s0, %s493
      $region68: #{_lambda_.1} parent=63 // pred_fallthru
        _
      // Predicated region
      $region69: #{_lambda_.1} parent=63 // pred_check
        %p495 = pneg %p70
      $region70: #{_lambda_.1} parent=63 // pred_check_branch
        %497 = sbr.rel (%p495) target = $region72
      $region71: #{_lambda_.1} parent=63 // pred_region
        %p498 = scmp.lt.s32.totalorder %s24, 1
        %s499 = scalar_select %p498, %s24, 1
        %s500 = smul.addr %s499, 5
        %s501 = smul.addr %s500, 4
        %s502 = scalar_lea.vmem %s1, %s501
      $region72: #{_lambda_.1} parent=63 // pred_fallthru
        _
    $region64: #{_lambda_.1} parent=5 // pred_fallthru
      _
    %p503 = scmp.le.s32.totalorder 1, %s24
    %p504 = scmp.lt.s32.totalorder %s24, 3
    %p505 = pnand %p503, %p504
    %p506 = pneg %p505
    // Predicated region
    $region73: #{_lambda_.1} parent=5 // pred_check
      _
    $region74: #{_lambda_.1} parent=5 // pred_check_branch
      %508 = sbr.rel (%p505) target = $region76
    $region75: #{_lambda_.1} parent=5 // pred_region
      %s509 = ssub.s32 %s24, 1
      %p510 = scmp.lt.s32.totalorder %s29, 1
      %s511 = scalar_select %p510, %s29, 1
      %s512 = smul.addr %s511, 5
      %s513 = smul.addr %s512, 4
      %s514 = scalar_lea.vmem %s0, %s513
      %p515 = pneg %p50
      %p516 = pneg %p47
      %p517 = scmp.lt.s32.totalorder %s29, 1
      %s518 = scalar_select %p517, %s29, 1
      %s519 = smul.addr %s518, 5
      %s520 = smul.addr %s519, 4
      %s521 = scalar_lea.vmem %s1, %s520
      %p522 = pneg %p76
      %p523 = pneg %p73
      %p524 = pneg %p97
      %p525 = pneg %p94
      %p526 = pneg %p118
      %p527 = pneg %p115
      %p528 = pneg %p139
      %p529 = pneg %p136
      %p530 = pneg %p160
      %p531 = pneg %p157
      %p532 = pneg %p181
      %p533 = pneg %p178
      %p534 = pneg %p202
      %p535 = pneg %p199
      %p536 = pneg %p223
      %p537 = pneg %p220
      %p538 = pneg %p244
      %p539 = pneg %p241
      %p540 = pneg %p265
      %p541 = pneg %p262
      %p542 = pneg %p286
      %p543 = pneg %p283
      %p544 = pneg %p307
      %p545 = pneg %p304
      %p546 = pneg %p328
      %p547 = pneg %p325
      %p548 = pneg %p354
      %p549 = pneg %p351
      %p550 = scmp.lt.s32.totalorder %s29, 1
      %s551 = scalar_select %p550, %s29, 1
      %s552 = smul.addr %s551, 3
      %s553 = smul.addr %s552, 4
      %s554 = scalar_lea.vmem %s14, %s553
      %p555 = pneg %p380
      %p556 = pneg %p377
      %p557 = scmp.lt.s32.totalorder %s29, 1
      %s558 = scalar_select %p557, %s29, 1
      %s559 = smul.addr %s558, 3
      %s560 = scalar_lea.vmem %s15, %s559
      %p561 = pneg %p406
      %p562 = pneg %p403
      %p563 = scmp.lt.s32.totalorder %s29, 1
      %s564 = scalar_select %p563, %s29, 1
      %s565 = smul.addr %s564, 3
      %s566 = scalar_lea.vmem %s16, %s565
      %p567 = pneg %p432
      %p568 = pneg %p429
      %p569 = scmp.lt.s32.totalorder %s29, 1
      %s570 = scalar_select %p569, %s29, 1
      %s571 = scalar_lea.vmem %s17, %s570
      %p572 = scmp.lt.s32.totalorder %s29, 1
      %s573 = scalar_select %p572, %s29, 1
      %s574 = smul.addr %s573, 5
      %s575 = smul.addr %s574, 4
      %s576 = scalar_lea.vmem %s0, %s575
      %p577 = scmp.lt.s32.totalorder %s29, 1
      %s578 = scalar_select %p577, %s29, 1
      %s579 = smul.addr %s578, 5
      %s580 = smul.addr %s579, 4
      %s581 = scalar_lea.vmem %s1, %s580
      %p582 = scmp.lt.s32.totalorder %s29, 1
      %s583 = scalar_select %p582, %s29, 1
      %s584 = smul.addr %s583, 3
      %s585 = smul.addr %s584, 4
      %s586 = scalar_lea.vmem %s14, %s585
      %p587 = scmp.lt.s32.totalorder %s29, 1
      %s588 = scalar_select %p587, %s29, 1
      %s589 = smul.addr %s588, 3
      %s590 = scalar_lea.vmem %s15, %s589
      %p591 = scmp.lt.s32.totalorder %s29, 1
      %s592 = scalar_select %p591, %s29, 1
      %s593 = smul.addr %s592, 3
      %s594 = scalar_lea.vmem %s16, %s593
      %p595 = scmp.lt.s32.totalorder %s29, 1
      %s596 = scalar_select %p595, %s29, 1
      %s597 = scalar_lea.vmem %s17, %s596
      %v601 = vld [vmem:[%s2] ss:$4 sm:$0x7]
      %s602 = scalar_lea.vmem %s2, 1
      %v603 = vld [vmem:[%s602] ss:$4 sm:$0x7]
      %vm604 = vcmp.gt.f32.partialorder %v603, 0.5
      %s605 = scalar_lea.vmem %s2, 2
      %v606 = vld [vmem:[%s605] ss:$4 sm:$0x7]
      %vm607 = vcmp.gt.f32.partialorder %v606, 0.5
      %v608 = vld [vmem:[%s3] sm:$0xf]
      %v609 = vld [vmem:[%s576] sm:$0xff]
      %v610 = vld [vmem:[%s576 + $0x8] sm:$0xff]
      %v611 = vld [vmem:[%s576 + $0x4] sm:$0xff]
      %v612 = vld [vmem:[%s576 + $0xc] sm:$0xf]
      %v613 = vld [vmem:[%s576 + $0x4] sm:$0xff]
      %v614 = vld [vmem:[%s576 + $0xc] sm:$0xff]
      %v617 = vunpack.c.l.b16 %v609
      %v618 = vunpack.c.h.b16 %v609
      %v619 = vunpack.c.l.b16 %v610
      %v620 = vunpack.c.h.b16 %v610
      %v621 = vpack.c.b16 %v617, %v617
      %v622 = vpack.c.b16 %v618, %v618
      %v623 = vpack.c.b16 %v619, %v619
      %v624 = vpack.c.b16 %v620, %v620
      %625 = vrot.lane.b32.xlu0 %v621, 127
      %v626 = vpop.permute.xlu0 %625
      %627 = vrot.lane.b32.xlu0 %v622, 127
      %v628 = vpop.permute.xlu0 %627
      %629 = vrot.lane.b32.xlu0 %v623, 127
      %v630 = vpop.permute.xlu0 %629
      %631 = vrot.lane.b32.xlu0 %v624, 127
      %v632 = vpop.permute.xlu0 %631
      %vm633 = vcmask 1039360
      %v634 = vsel %vm633, %v626, %v628
      %v635 = vsel %vm633, %v628, %v630
      %v636 = vsel %vm633, %v630, %v632
      %637 = vrot.lane.b32.xlu0 %v621, 126
      %v638 = vpop.permute.xlu0 %637
      %639 = vrot.lane.b32.xlu0 %v622, 126
      %v640 = vpop.permute.xlu0 %639
      %641 = vrot.lane.b32.xlu0 %v623, 126
      %v642 = vpop.permute.xlu0 %641
      %643 = vrot.lane.b32.xlu0 %v624, 126
      %v644 = vpop.permute.xlu0 %643
      %vm645 = vcmask 1031168
      %v646 = vsel %vm645, %v638, %v640
      %v647 = vsel %vm645, %v640, %v642
      %v648 = vsel %vm645, %v642, %v644
      %649 = vrot.lane.b32.xlu0 %v621, 110
      %v650 = vpop.permute.xlu0 %649
      %651 = vrot.lane.b32.xlu0 %v622, 110
      %v652 = vpop.permute.xlu0 %651
      %653 = vrot.lane.b32.xlu0 %v623, 110
      %v654 = vpop.permute.xlu0 %653
      %655 = vrot.lane.b32.xlu0 %v624, 110
      %v656 = vpop.permute.xlu0 %655
      %vm657 = vcmask 900096
      %v658 = vsel %vm657, %v650, %v652
      %v659 = vsel %vm657, %v652, %v654
      %v660 = vsel %vm657, %v654, %v656
      %v663 = vunpack.c.l.b16 %v611
      %v664 = vunpack.c.h.b16 %v611
      %v665 = vunpack.c.l.b16 %v612
      %v666 = vpack.c.b16 %v663, %v663
      %v667 = vpack.c.b16 %v664, %v664
      %v668 = vpack.c.b16 %v665, %v665
      %669 = vrot.lane.b32.xlu0 %v666, 109
      %v670 = vpop.permute.xlu0 %669
      %671 = vrot.lane.b32.xlu0 %v667, 109
      %v672 = vpop.permute.xlu0 %671
      %673 = vrot.lane.b32.xlu0 %v668, 109
      %v674 = vpop.permute.xlu0 %673
      %vm675 = vcmask 891904
      %v676 = vsel %vm675, %v670, %v672
      %v677 = vsel %vm675, %v672, %v674
      %v680 = vunpack.c.l.b16 %v613
      %v681 = vunpack.c.h.b16 %v613
      %v682 = vunpack.c.l.b16 %v614
      %v683 = vunpack.c.h.b16 %v614
      %v684 = vpack.c.b16 %v680, %v680
      %v685 = vpack.c.b16 %v681, %v681
      %v686 = vpack.c.b16 %v682, %v682
      %v687 = vpack.c.b16 %v683, %v683
      %688 = vrot.lane.b32.xlu0 %v684, 108
      %v689 = vpop.permute.xlu0 %688
      %690 = vrot.lane.b32.xlu0 %v685, 108
      %v691 = vpop.permute.xlu0 %690
      %692 = vrot.lane.b32.xlu0 %v686, 108
      %v693 = vpop.permute.xlu0 %692
      %694 = vrot.lane.b32.xlu0 %v687, 108
      %v695 = vpop.permute.xlu0 %694
      %vm696 = vcmask 883712
      %v697 = vsel %vm696, %v689, %v691
      %v698 = vsel %vm696, %v691, %v693
      %v699 = vsel %vm696, %v693, %v695
      %700 = vrot.lane.b32.xlu0 %v684, 92
      %v701 = vpop.permute.xlu0 %700
      %702 = vrot.lane.b32.xlu0 %v685, 92
      %v703 = vpop.permute.xlu0 %702
      %704 = vrot.lane.b32.xlu0 %v686, 92
      %v705 = vpop.permute.xlu0 %704
      %706 = vrot.lane.b32.xlu0 %v687, 92
      %v707 = vpop.permute.xlu0 %706
      %vm708 = vcmask 752640
      %v709 = vsel %vm708, %v701, %v703
      %v710 = vsel %vm708, %v703, %v705
      %v711 = vsel %vm708, %v705, %v707
      %712 = vrot.lane.b32.xlu0 %v684, 91
      %v713 = vpop.permute.xlu0 %712
      %714 = vrot.lane.b32.xlu0 %v685, 91
      %v715 = vpop.permute.xlu0 %714
      %716 = vrot.lane.b32.xlu0 %v686, 91
      %v717 = vpop.permute.xlu0 %716
      %718 = vrot.lane.b32.xlu0 %v687, 91
      %v719 = vpop.permute.xlu0 %718
      %vm720 = vcmask 744448
      %v721 = vsel %vm720, %v713, %v715
      %v722 = vsel %vm720, %v715, %v717
      %v723 = vsel %vm720, %v717, %v719
      %724 = vrot.lane.b32.xlu0 %v684, 90
      %v725 = vpop.permute.xlu0 %724
      %726 = vrot.lane.b32.xlu0 %v685, 90
      %v727 = vpop.permute.xlu0 %726
      %728 = vrot.lane.b32.xlu0 %v686, 90
      %v729 = vpop.permute.xlu0 %728
      %730 = vrot.lane.b32.xlu0 %v687, 90
      %v731 = vpop.permute.xlu0 %730
      %vm732 = vcmask 736256
      %v733 = vsel %vm732, %v725, %v727
      %v734 = vsel %vm732, %v727, %v729
      %v735 = vsel %vm732, %v729, %v731
      %vm736 = vcmask 1043456
      %v739 = vsel %vm736, %v621, %v634
      %v742 = vsel %vm736, %v622, %v635
      %v745 = vsel %vm736, %v623, %v636
      %v748 = vsel %vm736, %v624, %v632
      %v751 = vsel %vm736, %v646, %v658
      %v754 = vsel %vm736, %v647, %v659
      %v757 = vsel %vm736, %v648, %v660
      %v760 = vsel %vm736, %v644, %v656
      %v763 = vsel %vm736, %v670, %v689
      %v766 = vsel %vm736, %v676, %v697
      %v769 = vsel %vm736, %v677, %v698
      %v772 = vsel %vm736, %v674, %v699
      %v775 = vsel %vm736, %v701, %v713
      %v778 = vsel %vm736, %v709, %v721
      %v781 = vsel %vm736, %v710, %v722
      %v784 = vsel %vm736, %v711, %v723
      %v785 = vld [vmem:[%s9] sm:$0xff]
      %787 = vset.pattern.permute.xlu0 0
      %788 = vperm.xlu0 %787, %v785
      %v789 = vpop.permute.xlu0 %788
      %807 = vrot.lane.b32.xlu0 %v739, 19
      %v808 = vpop.permute.xlu0 %807
      %809 = vrot.lane.b32.xlu0 %v742, 19
      %v810 = vpop.permute.xlu0 %809
      %811 = vrot.lane.b32.xlu0 %v745, 19
      %v812 = vpop.permute.xlu0 %811
      %813 = vrot.lane.b32.xlu0 %v748, 19
      %v814 = vpop.permute.xlu0 %813
      %815 = vrot.lane.b32.xlu0 %v751, 19
      %v816 = vpop.permute.xlu0 %815
      %817 = vrot.lane.b32.xlu0 %v754, 19
      %v818 = vpop.permute.xlu0 %817
      %819 = vrot.lane.b32.xlu0 %v757, 19
      %v820 = vpop.permute.xlu0 %819
      %821 = vrot.lane.b32.xlu0 %v760, 19
      %v822 = vpop.permute.xlu0 %821
      %823 = vrot.lane.b32.xlu0 %v763, 19
      %v824 = vpop.permute.xlu0 %823
      %825 = vrot.lane.b32.xlu0 %v766, 19
      %v826 = vpop.permute.xlu0 %825
      %827 = vrot.lane.b32.xlu0 %v769, 19
      %v828 = vpop.permute.xlu0 %827
      %829 = vrot.lane.b32.xlu0 %v772, 19
      %v830 = vpop.permute.xlu0 %829
      %831 = vrot.lane.b32.xlu0 %v775, 19
      %v832 = vpop.permute.xlu0 %831
      %833 = vrot.lane.b32.xlu0 %v778, 19
      %v834 = vpop.permute.xlu0 %833
      %835 = vrot.lane.b32.xlu0 %v781, 19
      %v836 = vpop.permute.xlu0 %835
      %837 = vrot.lane.b32.xlu0 %v784, 19
      %v838 = vpop.permute.xlu0 %837
      %839 = vrot.lane.b32.xlu0 %v725, 19
      %v840 = vpop.permute.xlu0 %839
      %841 = vrot.lane.b32.xlu0 %v733, 19
      %v842 = vpop.permute.xlu0 %841
      %843 = vrot.lane.b32.xlu0 %v734, 19
      %v844 = vpop.permute.xlu0 %843
      %845 = vrot.lane.b32.xlu0 %v735, 19
      %v846 = vpop.permute.xlu0 %845
      %vm847 = vcmask 154624
      %v848 = vsel %vm847, %v808, %v810
      %v849 = vsel %vm847, %v810, %v812
      %v850 = vsel %vm847, %v812, %v814
      %v851 = vsel %vm847, %v816, %v818
      %v852 = vsel %vm847, %v818, %v820
      %v853 = vsel %vm847, %v820, %v822
      %v854 = vsel %vm847, %v824, %v826
      %v855 = vsel %vm847, %v826, %v828
      %v856 = vsel %vm847, %v828, %v830
      %v857 = vsel %vm847, %v832, %v834
      %v858 = vsel %vm847, %v834, %v836
      %v859 = vsel %vm847, %v836, %v838
      %v860 = vsel %vm847, %v840, %v842
      %v861 = vsel %vm847, %v842, %v844
      %v862 = vsel %vm847, %v844, %v846
      %vm875 = vcmask 588800
      %v877 = vsel %vm875, %v608, 0
      %v880 = vsel %vm736, %v860, 0
      %v883 = vsel %vm736, %v861, 0
      %v886 = vsel %vm736, %v862, 0
      %888 = vmatprep.subr.bf16.mxu0 0
      %889 = vmatpush1.bf16.msra.mxu0 0
      %890 = vmatprep.subr.bf16.mxu0 0
      %891 = vmatpush1.bf16.msra.mxu0 0
      %892 = vmatprep.subr.bf16.mxu0 0
      %893 = vmatpush1.bf16.msra.mxu0 0
      %894 = vmatprep.subr.bf16.mxu0 %v883
      %895 = vmatpush1.bf16.msra.mxu0 %v880
      %896 = vmatprep.subr.bf16.mxu0 %v858
      %897 = vmatpush1.bf16.msra.mxu0 %v857
      %898 = vmatprep.subr.bf16.mxu0 %v855
      %899 = vmatpush1.bf16.msra.mxu0 %v854
      %900 = vmatprep.subr.bf16.mxu0 %v852
      %901 = vmatpush1.bf16.msra.mxu0 %v851
      %902 = vmatprep.subr.bf16.mxu0 %v849
      %903 = vmatpush1.bf16.msra.mxu0 %v848
      %904 = vmatprep.subr.bf16.mxu0 0
      %905 = vmatpush2.bf16.msra.mxu0 0
      %906 = vmatprep.subr.bf16.mxu0 0
      %907 = vmatpush2.bf16.msra.mxu0 0
      %908 = vmatprep.subr.bf16.mxu0 0
      %909 = vmatpush2.bf16.msra.mxu0 0
      %910 = vmatprep.subr.bf16.mxu0 0
      %911 = vmatpush2.bf16.msra.mxu0 0
      %912 = vmatprep.subr.bf16.mxu0 0
      %913 = vmatpush2.bf16.msra.mxu0 0
      %914 = vmatprep.subr.bf16.mxu0 0
      %915 = vmatpush2.bf16.msra.mxu0 0
      %916 = vmatprep.subr.bf16.mxu0 0
      %917 = vmatpush2.bf16.msra.mxu0 0
      %918 = vmatprep.subr.bf16.mxu0 0
      %919 = vmatpush2.bf16.msra.mxu0 0
      %920 = vmatprep.mubr.bf16.mxu0 0
      %921 = vmatmul.mubr.bf16.gmra.mxu0 %v877
      %v922 = vpop.f32.mrf.mxu0
      %v923 = vadd.f32 %v789, %v922
      %v924 = vpop.f32.mrf.mxu0
      %v925 = vadd.f32 %v789, %v924
      %v926 = vpop.f32.mrf.mxu0
      %v927 = vpop.f32.mrf.mxu0
      %928 = vdwg.mxu0
      %929 = vmatprep.subr.bf16.mxu0 0
      %930 = vmatpush1.bf16.msra.mxu0 0
      %931 = vmatprep.subr.bf16.mxu0 0
      %932 = vmatpush1.bf16.msra.mxu0 0
      %933 = vmatprep.subr.bf16.mxu0 0
      %934 = vmatpush1.bf16.msra.mxu0 0
      %935 = vmatprep.subr.bf16.mxu0 0
      %936 = vmatpush1.bf16.msra.mxu0 %v886
      %937 = vmatprep.subr.bf16.mxu0 0
      %938 = vmatpush1.bf16.msra.mxu0 %v859
      %939 = vmatprep.subr.bf16.mxu0 0
      %940 = vmatpush1.bf16.msra.mxu0 %v856
      %941 = vmatprep.subr.bf16.mxu0 0
      %942 = vmatpush1.bf16.msra.mxu0 %v853
      %943 = vmatprep.subr.bf16.mxu0 0
      %944 = vmatpush1.bf16.msra.mxu0 %v850
      %945 = vmatprep.subr.bf16.mxu0 0
      %946 = vmatpush2.bf16.msra.mxu0 0
      %947 = vmatprep.subr.bf16.mxu0 0
      %948 = vmatpush2.bf16.msra.mxu0 0
      %949 = vmatprep.subr.bf16.mxu0 0
      %950 = vmatpush2.bf16.msra.mxu0 0
      %951 = vmatprep.subr.bf16.mxu0 0
      %952 = vmatpush2.bf16.msra.mxu0 0
      %953 = vmatprep.subr.bf16.mxu0 0
      %954 = vmatpush2.bf16.msra.mxu0 0
      %955 = vmatprep.subr.bf16.mxu0 0
      %956 = vmatpush2.bf16.msra.mxu0 0
      %957 = vmatprep.subr.bf16.mxu0 0
      %958 = vmatpush2.bf16.msra.mxu0 0
      %959 = vmatprep.subr.bf16.mxu0 0
      %960 = vmatpush2.bf16.msra.mxu0 0
      %961 = vmatprep.mubr.bf16.mxu0 0
      %962 = vmatmul.mubr.bf16.gmra.mxu0 %v877
      %v963 = vpop.f32.mrf.mxu0
      %v964 = vadd.f32 %v789, %v963
      %v965 = vpop.f32.mrf.mxu0
      %v966 = vpop.f32.mrf.mxu0
      %v967 = vpop.f32.mrf.mxu0
      %968 = vdwg.mxu0
      %v969 = vmax.f32 %v923, 0.0
      %v970 = vmax.f32 %v925, 0.0
      %v971 = vmax.f32 %v964, 0.0
      %v973 = vlaneseq
      %v974 = vshrl.u32 %v973, 7
      %v975 = vsub.s32 0, %v974
      %v976 = vrot.slane %v601, %v975
      %v977 = vlaneseq
      %v978 = vshrl.u32 %v977, 7
      %v979 = vsub.s32 1, %v978
      %v980 = vrot.slane %v601, %v979
      %v981 = vlaneseq
      %v982 = vshrl.u32 %v981, 7
      %v983 = vsub.s32 2, %v982
      %v984 = vrot.slane %v601, %v983
      %v988 = vmul.f32 %v969, %v976
      %v989 = vmul.f32 %v970, %v980
      %v990 = vmul.f32 %v971, %v984
      %v991 = vpack.c.bf16 %v988, %v988
      %v992 = vpack.c.bf16 %v989, %v989
      %v993 = vpack.c.bf16 %v990, %v990
      %v998 = vunpack.c.l.b16 0
      %v999 = vunpack.c.l.b16 %v991
      %v1000 = vunpack.c.l.b16 %v992
      %v1001 = vunpack.c.l.b16 %v993
      %v1002 = vpack.c.b16 %v999, %v998
      %v1003 = vpack.c.b16 %v1001, %v1000
      %v1004 = vpack.c.b16 %v998, %v998
      %1008 = vst [vmem:[#allocation2] sm:$0xff] %v1002
      %1009 = vst [vmem:[#allocation2 + $0x8] sm:$0xff] %v1003
      %1010 = vst [vmem:[#allocation2 + $0x10] sm:$0xf] %v1004
      %v1011 = vld [vmem:[%s4] sm:$0xf]
      %v1012 = vld [vmem:[%s4 + $0x4] sm:$0xf]
      %v1013 = vld [vmem:[#allocation2] sm:$0xff]
      %v1014 = vld [vmem:[#allocation2 + $0x8] sm:$0xff]
      %v1015 = vld [vmem:[#allocation2 + $0x4] sm:$0xff]
      %v1016 = vld [vmem:[#allocation2 + $0xc] sm:$0xf]
      %v1017 = vld [vmem:[#allocation2 + $0x4] sm:$0xff]
      %v1018 = vld [vmem:[#allocation2 + $0xc] sm:$0xff]
      %v1021 = vunpack.c.l.b16 %v1013
      %v1022 = vunpack.c.h.b16 %v1013
      %v1023 = vunpack.c.l.b16 %v1014
      %v1024 = vunpack.c.h.b16 %v1014
      %v1025 = vpack.c.b16 %v1021, %v1021
      %v1026 = vpack.c.b16 %v1022, %v1022
      %v1027 = vpack.c.b16 %v1023, %v1023
      %v1028 = vpack.c.b16 %v1024, %v1024
      %1029 = vrot.lane.b32.xlu0 %v1025, 127
      %v1030 = vpop.permute.xlu0 %1029
      %1031 = vrot.lane.b32.xlu0 %v1026, 127
      %v1032 = vpop.permute.xlu0 %1031
      %1033 = vrot.lane.b32.xlu0 %v1027, 127
      %v1034 = vpop.permute.xlu0 %1033
      %1035 = vrot.lane.b32.xlu0 %v1028, 127
      %v1036 = vpop.permute.xlu0 %1035
      %v1037 = vsel %vm633, %v1030, %v1032
      %v1038 = vsel %vm633, %v1032, %v1034
      %v1039 = vsel %vm633, %v1034, %v1036
      %1040 = vrot.lane.b32.xlu0 %v1025, 126
      %v1041 = vpop.permute.xlu0 %1040
      %1042 = vrot.lane.b32.xlu0 %v1026, 126
      %v1043 = vpop.permute.xlu0 %1042
      %1044 = vrot.lane.b32.xlu0 %v1027, 126
      %v1045 = vpop.permute.xlu0 %1044
      %1046 = vrot.lane.b32.xlu0 %v1028, 126
      %v1047 = vpop.permute.xlu0 %1046
      %v1048 = vsel %vm645, %v1041, %v1043
      %v1049 = vsel %vm645, %v1043, %v1045
      %v1050 = vsel %vm645, %v1045, %v1047
      %1051 = vrot.lane.b32.xlu0 %v1025, 110
      %v1052 = vpop.permute.xlu0 %1051
      %1053 = vrot.lane.b32.xlu0 %v1026, 110
      %v1054 = vpop.permute.xlu0 %1053
      %1055 = vrot.lane.b32.xlu0 %v1027, 110
      %v1056 = vpop.permute.xlu0 %1055
      %1057 = vrot.lane.b32.xlu0 %v1028, 110
      %v1058 = vpop.permute.xlu0 %1057
      %v1059 = vsel %vm657, %v1052, %v1054
      %v1060 = vsel %vm657, %v1054, %v1056
      %v1061 = vsel %vm657, %v1056, %v1058
      %v1064 = vunpack.c.l.b16 %v1015
      %v1065 = vunpack.c.h.b16 %v1015
      %v1066 = vunpack.c.l.b16 %v1016
      %v1067 = vpack.c.b16 %v1064, %v1064
      %v1068 = vpack.c.b16 %v1065, %v1065
      %v1069 = vpack.c.b16 %v1066, %v1066
      %1070 = vrot.lane.b32.xlu0 %v1067, 109
      %v1071 = vpop.permute.xlu0 %1070
      %1072 = vrot.lane.b32.xlu0 %v1068, 109
      %v1073 = vpop.permute.xlu0 %1072
      %1074 = vrot.lane.b32.xlu0 %v1069, 109
      %v1075 = vpop.permute.xlu0 %1074
      %v1076 = vsel %vm675, %v1071, %v1073
      %v1077 = vsel %vm675, %v1073, %v1075
      %v1080 = vunpack.c.l.b16 %v1017
      %v1081 = vunpack.c.h.b16 %v1017
      %v1082 = vunpack.c.l.b16 %v1018
      %v1083 = vunpack.c.h.b16 %v1018
      %v1084 = vpack.c.b16 %v1080, %v1080
      %v1085 = vpack.c.b16 %v1081, %v1081
      %v1086 = vpack.c.b16 %v1082, %v1082
      %v1087 = vpack.c.b16 %v1083, %v1083
      %1088 = vrot.lane.b32.xlu0 %v1084, 108
      %v1089 = vpop.permute.xlu0 %1088
      %1090 = vrot.lane.b32.xlu0 %v1085, 108
      %v1091 = vpop.permute.xlu0 %1090
      %1092 = vrot.lane.b32.xlu0 %v1086, 108
      %v1093 = vpop.permute.xlu0 %1092
      %1094 = vrot.lane.b32.xlu0 %v1087, 108
      %v1095 = vpop.permute.xlu0 %1094
      %v1096 = vsel %vm696, %v1089, %v1091
      %v1097 = vsel %vm696, %v1091, %v1093
      %v1098 = vsel %vm696, %v1093, %v1095
      %1099 = vrot.lane.b32.xlu0 %v1084, 92
      %v1100 = vpop.permute.xlu0 %1099
      %1101 = vrot.lane.b32.xlu0 %v1085, 92
      %v1102 = vpop.permute.xlu0 %1101
      %1103 = vrot.lane.b32.xlu0 %v1086, 92
      %v1104 = vpop.permute.xlu0 %1103
      %1105 = vrot.lane.b32.xlu0 %v1087, 92
      %v1106 = vpop.permute.xlu0 %1105
      %v1107 = vsel %vm708, %v1100, %v1102
      %v1108 = vsel %vm708, %v1102, %v1104
      %v1109 = vsel %vm708, %v1104, %v1106
      %1110 = vrot.lane.b32.xlu0 %v1084, 91
      %v1111 = vpop.permute.xlu0 %1110
      %1112 = vrot.lane.b32.xlu0 %v1085, 91
      %v1113 = vpop.permute.xlu0 %1112
      %1114 = vrot.lane.b32.xlu0 %v1086, 91
      %v1115 = vpop.permute.xlu0 %1114
      %1116 = vrot.lane.b32.xlu0 %v1087, 91
      %v1117 = vpop.permute.xlu0 %1116
      %v1118 = vsel %vm720, %v1111, %v1113
      %v1119 = vsel %vm720, %v1113, %v1115
      %v1120 = vsel %vm720, %v1115, %v1117
      %1121 = vrot.lane.b32.xlu0 %v1084, 90
      %v1122 = vpop.permute.xlu0 %1121
      %1123 = vrot.lane.b32.xlu0 %v1085, 90
      %v1124 = vpop.permute.xlu0 %1123
      %1125 = vrot.lane.b32.xlu0 %v1086, 90
      %v1126 = vpop.permute.xlu0 %1125
      %1127 = vrot.lane.b32.xlu0 %v1087, 90
      %v1128 = vpop.permute.xlu0 %1127
      %v1129 = vsel %vm732, %v1122, %v1124
      %v1130 = vsel %vm732, %v1124, %v1126
      %v1131 = vsel %vm732, %v1126, %v1128
      %v1134 = vsel %vm736, %v1025, %v1037
      %v1137 = vsel %vm736, %v1026, %v1038
      %v1140 = vsel %vm736, %v1027, %v1039
      %v1143 = vsel %vm736, %v1028, %v1036
      %v1146 = vsel %vm736, %v1048, %v1059
      %v1149 = vsel %vm736, %v1049, %v1060
      %v1152 = vsel %vm736, %v1050, %v1061
      %v1155 = vsel %vm736, %v1047, %v1058
      %v1158 = vsel %vm736, %v1071, %v1089
      %v1161 = vsel %vm736, %v1076, %v1096
      %v1164 = vsel %vm736, %v1077, %v1097
      %v1167 = vsel %vm736, %v1075, %v1098
      %v1170 = vsel %vm736, %v1100, %v1111
      %v1173 = vsel %vm736, %v1107, %v1118
      %v1176 = vsel %vm736, %v1108, %v1119
      %v1179 = vsel %vm736, %v1109, %v1120
      %v1180 = vld [vmem:[%s10] sm:$0xff]
      %v1181 = vld [vmem:[%s10 + $0x8] sm:$0xff]
      %1183 = vset.pattern.permute.xlu0 0
      %1184 = vperm.xlu0 %1183, %v1180
      %v1185 = vpop.permute.xlu0 %1184
      %1188 = vset.pattern.permute.xlu0 0
      %1189 = vperm.xlu0 %1188, %v1181
      %v1190 = vpop.permute.xlu0 %1189
      %v1194 = vunpack.c.l.b16 %v1011
      %v1195 = vunpack.c.l.b16 %v1012
      %v1196 = vpack.c.b16 %v1195, %v1194
      %1213 = vrot.lane.b32.xlu0 %v1134, 19
      %v1214 = vpop.permute.xlu0 %1213
      %1215 = vrot.lane.b32.xlu0 %v1137, 19
      %v1216 = vpop.permute.xlu0 %1215
      %1217 = vrot.lane.b32.xlu0 %v1140, 19
      %v1218 = vpop.permute.xlu0 %1217
      %1219 = vrot.lane.b32.xlu0 %v1143, 19
      %v1220 = vpop.permute.xlu0 %1219
      %1221 = vrot.lane.b32.xlu0 %v1146, 19
      %v1222 = vpop.permute.xlu0 %1221
      %1223 = vrot.lane.b32.xlu0 %v1149, 19
      %v1224 = vpop.permute.xlu0 %1223
      %1225 = vrot.lane.b32.xlu0 %v1152, 19
      %v1226 = vpop.permute.xlu0 %1225
      %1227 = vrot.lane.b32.xlu0 %v1155, 19
      %v1228 = vpop.permute.xlu0 %1227
      %1229 = vrot.lane.b32.xlu0 %v1158, 19
      %v1230 = vpop.permute.xlu0 %1229
      %1231 = vrot.lane.b32.xlu0 %v1161, 19
      %v1232 = vpop.permute.xlu0 %1231
      %1233 = vrot.lane.b32.xlu0 %v1164, 19
      %v1234 = vpop.permute.xlu0 %1233
      %1235 = vrot.lane.b32.xlu0 %v1167, 19
      %v1236 = vpop.permute.xlu0 %1235
      %1237 = vrot.lane.b32.xlu0 %v1170, 19
      %v1238 = vpop.permute.xlu0 %1237
      %1239 = vrot.lane.b32.xlu0 %v1173, 19
      %v1240 = vpop.permute.xlu0 %1239
      %1241 = vrot.lane.b32.xlu0 %v1176, 19
      %v1242 = vpop.permute.xlu0 %1241
      %1243 = vrot.lane.b32.xlu0 %v1179, 19
      %v1244 = vpop.permute.xlu0 %1243
      %1245 = vrot.lane.b32.xlu0 %v1122, 19
      %v1246 = vpop.permute.xlu0 %1245
      %1247 = vrot.lane.b32.xlu0 %v1129, 19
      %v1248 = vpop.permute.xlu0 %1247
      %1249 = vrot.lane.b32.xlu0 %v1130, 19
      %v1250 = vpop.permute.xlu0 %1249
      %1251 = vrot.lane.b32.xlu0 %v1131, 19
      %v1252 = vpop.permute.xlu0 %1251
      %v1253 = vsel %vm847, %v1214, %v1216
      %v1254 = vsel %vm847, %v1216, %v1218
      %v1255 = vsel %vm847, %v1218, %v1220
      %v1256 = vsel %vm847, %v1222, %v1224
      %v1257 = vsel %vm847, %v1224, %v1226
      %v1258 = vsel %vm847, %v1226, %v1228
      %v1259 = vsel %vm847, %v1230, %v1232
      %v1260 = vsel %vm847, %v1232, %v1234
      %v1261 = vsel %vm847, %v1234, %v1236
      %v1262 = vsel %vm847, %v1238, %v1240
      %v1263 = vsel %vm847, %v1240, %v1242
      %v1264 = vsel %vm847, %v1242, %v1244
      %v1265 = vsel %vm847, %v1246, %v1248
      %v1266 = vsel %vm847, %v1248, %v1250
      %v1267 = vsel %vm847, %v1250, %v1252
      %v1281 = vsel %vm875, %v1196, 0
      %v1284 = vsel %vm736, %v1265, 0
      %v1287 = vsel %vm736, %v1266, 0
      %v1290 = vsel %vm736, %v1267, 0
      %1292 = vmatprep.subr.bf16.mxu0 0
      %1293 = vmatpush1.bf16.msra.mxu0 0
      %1294 = vmatprep.subr.bf16.mxu0 0
      %1295 = vmatpush1.bf16.msra.mxu0 0
      %1296 = vmatprep.subr.bf16.mxu0 0
      %1297 = vmatpush1.bf16.msra.mxu0 0
      %1298 = vmatprep.subr.bf16.mxu0 %v1287
      %1299 = vmatpush1.bf16.msra.mxu0 %v1284
      %1300 = vmatprep.subr.bf16.mxu0 %v1263
      %1301 = vmatpush1.bf16.msra.mxu0 %v1262
      %1302 = vmatprep.subr.bf16.mxu0 %v1260
      %1303 = vmatpush1.bf16.msra.mxu0 %v1259
      %1304 = vmatprep.subr.bf16.mxu0 %v1257
      %1305 = vmatpush1.bf16.msra.mxu0 %v1256
      %1306 = vmatprep.subr.bf16.mxu0 %v1254
      %1307 = vmatpush1.bf16.msra.mxu0 %v1253
      %1308 = vmatprep.subr.bf16.mxu0 0
      %1309 = vmatpush2.bf16.msra.mxu0 0
      %1310 = vmatprep.subr.bf16.mxu0 0
      %1311 = vmatpush2.bf16.msra.mxu0 0
      %1312 = vmatprep.subr.bf16.mxu0 0
      %1313 = vmatpush2.bf16.msra.mxu0 0
      %1314 = vmatprep.subr.bf16.mxu0 0
      %1315 = vmatpush2.bf16.msra.mxu0 0
      %1316 = vmatprep.subr.bf16.mxu0 0
      %1317 = vmatpush2.bf16.msra.mxu0 0
      %1318 = vmatprep.subr.bf16.mxu0 0
      %1319 = vmatpush2.bf16.msra.mxu0 0
      %1320 = vmatprep.subr.bf16.mxu0 0
      %1321 = vmatpush2.bf16.msra.mxu0 0
      %1322 = vmatprep.subr.bf16.mxu0 0
      %1323 = vmatpush2.bf16.msra.mxu0 0
      %1324 = vmatprep.mubr.bf16.mxu0 0
      %1325 = vmatmul.mubr.bf16.gmra.mxu0 %v1281
      %v1326 = vpop.f32.mrf.mxu0
      %v1327 = vadd.f32 %v1185, %v1326
      %v1328 = vpop.f32.mrf.mxu0
      %v1329 = vadd.f32 %v1185, %v1328
      %v1330 = vpop.f32.mrf.mxu0
      %v1331 = vadd.f32 %v1190, %v1330
      %v1332 = vpop.f32.mrf.mxu0
      %v1333 = vadd.f32 %v1190, %v1332
      %1334 = vdwg.mxu0
      %1335 = vmatprep.subr.bf16.mxu0 0
      %1336 = vmatpush1.bf16.msra.mxu0 0
      %1337 = vmatprep.subr.bf16.mxu0 0
      %1338 = vmatpush1.bf16.msra.mxu0 0
      %1339 = vmatprep.subr.bf16.mxu0 0
      %1340 = vmatpush1.bf16.msra.mxu0 0
      %1341 = vmatprep.subr.bf16.mxu0 0
      %1342 = vmatpush1.bf16.msra.mxu0 %v1290
      %1343 = vmatprep.subr.bf16.mxu0 0
      %1344 = vmatpush1.bf16.msra.mxu0 %v1264
      %1345 = vmatprep.subr.bf16.mxu0 0
      %1346 = vmatpush1.bf16.msra.mxu0 %v1261
      %1347 = vmatprep.subr.bf16.mxu0 0
      %1348 = vmatpush1.bf16.msra.mxu0 %v1258
      %1349 = vmatprep.subr.bf16.mxu0 0
      %1350 = vmatpush1.bf16.msra.mxu0 %v1255
      %1351 = vmatprep.subr.bf16.mxu0 0
      %1352 = vmatpush2.bf16.msra.mxu0 0
      %1353 = vmatprep.subr.bf16.mxu0 0
      %1354 = vmatpush2.bf16.msra.mxu0 0
      %1355 = vmatprep.subr.bf16.mxu0 0
      %1356 = vmatpush2.bf16.msra.mxu0 0
      %1357 = vmatprep.subr.bf16.mxu0 0
      %1358 = vmatpush2.bf16.msra.mxu0 0
      %1359 = vmatprep.subr.bf16.mxu0 0
      %1360 = vmatpush2.bf16.msra.mxu0 0
      %1361 = vmatprep.subr.bf16.mxu0 0
      %1362 = vmatpush2.bf16.msra.mxu0 0
      %1363 = vmatprep.subr.bf16.mxu0 0
      %1364 = vmatpush2.bf16.msra.mxu0 0
      %1365 = vmatprep.subr.bf16.mxu0 0
      %1366 = vmatpush2.bf16.msra.mxu0 0
      %1367 = vmatprep.mubr.bf16.mxu0 0
      %1368 = vmatmul.mubr.bf16.gmra.mxu0 %v1281
      %v1369 = vpop.f32.mrf.mxu0
      %v1370 = vadd.f32 %v1185, %v1369
      %v1371 = vpop.f32.mrf.mxu0
      %v1372 = vpop.f32.mrf.mxu0
      %v1373 = vadd.f32 %v1190, %v1372
      %v1374 = vpop.f32.mrf.mxu0
      %1375 = vdwg.mxu0
      %v1376 = vmax.f32 %v1327, 0.0
      %v1377 = vmax.f32 %v1329, 0.0
      %v1378 = vmax.f32 %v1370, 0.0
      %v1379 = vmax.f32 %v1331, 0.0
      %v1380 = vmax.f32 %v1333, 0.0
      %v1381 = vmax.f32 %v1373, 0.0
      %v1382 = vmul.f32 %v1376, %v976
      %v1383 = vmul.f32 %v1377, %v980
      %v1384 = vmul.f32 %v1378, %v984
      %v1385 = vmul.f32 %v1379, %v976
      %v1386 = vmul.f32 %v1380, %v980
      %v1387 = vmul.f32 %v1381, %v984
      %v1388 = vpack.c.bf16 %v1385, %v1382
      %v1389 = vpack.c.bf16 %v1386, %v1383
      %v1390 = vpack.c.bf16 %v1387, %v1384
      %v1394 = vunpack.c.l.b16 %v1388
      %v1395 = vunpack.c.l.b16 %v1389
      %v1396 = vunpack.c.l.b16 %v1390
      %v1397 = vunpack.c.h.b16 0
      %v1398 = vunpack.c.h.b16 %v1388
      %v1399 = vunpack.c.h.b16 %v1389
      %v1400 = vunpack.c.h.b16 %v1390
      %v1401 = vpack.c.b16 %v1394, %v998
      %v1402 = vpack.c.b16 %v1396, %v1395
      %v1403 = vpack.c.b16 %v1398, %v1397
      %v1404 = vpack.c.b16 %v1400, %v1399
      %v1405 = vpack.c.b16 %v1397, %v1397
      %1411 = vst [vmem:[#allocation3] sm:$0xff] %v1401
      %1412 = vst [vmem:[#allocation3 + $0x8] sm:$0xff] %v1402
      %1413 = vst [vmem:[#allocation3 + $0x10] sm:$0xf] %v1004
      %1414 = vst [vmem:[#allocation3 + $0x14] sm:$0xff] %v1403
      %1415 = vst [vmem:[#allocation3 + $0x1c] sm:$0xff] %v1404
      %1416 = vst [vmem:[#allocation3 + $0x24] sm:$0xf] %v1405
      %v1417 = vld [vmem:[#allocation3 + $0x4] sm:$0xff]
      %v1418 = vld [vmem:[#allocation3 + $0xc] sm:$0xf]
      %v1419 = vld [vmem:[#allocation3 + $0x18] sm:$0xff]
      %v1420 = vld [vmem:[#allocation3 + $0x20] sm:$0xf]
      %v1421 = vld [vmem:[#allocation3] sm:$0xff]
      %v1422 = vld [vmem:[#allocation3 + $0x8] sm:$0xff]
      %v1423 = vld [vmem:[#allocation3 + $0x14] sm:$0xff]
      %v1424 = vld [vmem:[#allocation3 + $0x1c] sm:$0xff]
      %v1425 = vsel %vm607, 1, 0
      %v1426 = vlaneseq
      %v1427 = vshrl.u32 %v1426, 7
      %v1428 = vsub.s32 0, %v1427
      %v1429 = vrot.slane %v1425, %v1428
      %v1430 = vlaneseq
      %v1431 = vshrl.u32 %v1430, 7
      %v1432 = vsub.s32 1, %v1431
      %v1433 = vrot.slane %v1425, %v1432
      %v1434 = vlaneseq
      %v1435 = vshrl.u32 %v1434, 7
      %v1436 = vsub.s32 2, %v1435
      %v1437 = vrot.slane %v1425, %v1436
      %vm1438 = vcmp.eq.s32.totalorder %v1429, 1
      %vm1439 = vcmp.eq.s32.totalorder %v1433, 1
      %vm1440 = vcmp.eq.s32.totalorder %v1437, 1
      %vm1441 = vmpackc.low %vm1439, %vm1438
      %vm1442 = vmpackc.low %vm1440, %vm1440
      %1447 = vrot.lane.b32.xlu0 %v1421, 1
      %v1448 = vpop.permute.xlu0 %1447
      %1449 = vrot.lane.b32.xlu0 %v1422, 1
      %v1450 = vpop.permute.xlu0 %1449
      %1451 = vrot.lane.b32.xlu0 %v1423, 1
      %v1452 = vpop.permute.xlu0 %1451
      %1453 = vrot.lane.b32.xlu0 %v1424, 1
      %v1454 = vpop.permute.xlu0 %1453
      %v1455 = vrot.slane %v1448, 4
      %v1456 = vrot.slane %v1450, 4
      %v1457 = vrot.slane %v1452, 4
      %v1458 = vrot.slane %v1454, 4
      %vm1459 = vcmask 1043456
      %v1460 = vsel %vm1459, %v1455, %v1456
      %vm1461 = vcmask 7168
      %v1462 = vsel %vm1461, %v1448, %v1460
      %v1463 = vsel %vm1461, %v1450, %v1456
      %v1464 = vsel %vm1459, %v1457, %v1458
      %v1465 = vsel %vm1461, %v1452, %v1464
      %v1466 = vsel %vm1461, %v1454, %v1458
      %v1471 = vsel %vm1441, %v1417, %v1462
      %v1472 = vsel %vm1442, %v1418, %v1463
      %v1473 = vsel %vm1441, %v1419, %v1465
      %v1474 = vsel %vm1442, %v1420, %v1466
      %v1475 = vsel %vm1441, 65537, 0
      %v1476 = vsel %vm1442, 65537, 0
      %1477 = vrot.lane.b32.xlu0 %v1475, 110
      %v1478 = vpop.permute.xlu0 %1477
      %1479 = vrot.lane.b32.xlu0 %v1476, 110
      %v1480 = vpop.permute.xlu0 %1479
      %v1481 = vrot.slane %v1478, 4
      %v1482 = vrot.slane %v1480, 4
      %v1483 = vsel %vm657, %v1481, %v1478
      %v1484 = vsel %vm1459, %v1481, %v1482
      %v1485 = vsel %vm657, %v1484, %v1480
      %vm1486 = vcmp.ne.s16.totalorder %v1483, 0
      %vm1487 = vcmp.ne.s16.totalorder %v1485, 0
      %v1488 = vsel %vm1461, %v1455, %v1448
      %v1489 = vsel %vm1461, %v1460, %v1450
      %v1490 = vsel %vm1461, %v1457, %v1452
      %v1491 = vsel %vm1461, %v1464, %v1454
      %v1496 = vsel %vm1486, %v1421, %v1488
      %v1497 = vsel %vm1487, %v1422, %v1489
      %v1498 = vsel %vm1486, %v1423, %v1490
      %v1499 = vsel %vm1487, %v1424, %v1491
      %v1500 = vsel %vm604, 1, 0
      %v1501 = vlaneseq
      %v1502 = vshrl.u32 %v1501, 7
      %v1503 = vsub.s32 0, %v1502
      %v1504 = vrot.slane %v1500, %v1503
      %v1505 = vlaneseq
      %v1506 = vshrl.u32 %v1505, 7
      %v1507 = vsub.s32 1, %v1506
      %v1508 = vrot.slane %v1500, %v1507
      %v1509 = vlaneseq
      %v1510 = vshrl.u32 %v1509, 7
      %v1511 = vsub.s32 2, %v1510
      %v1512 = vrot.slane %v1500, %v1511
      %vm1513 = vcmp.eq.s32.totalorder %v1504, 1
      %vm1514 = vcmp.eq.s32.totalorder %v1508, 1
      %vm1515 = vcmp.eq.s32.totalorder %v1512, 1
      %vm1516 = vmpackc.low %vm1514, %vm1513
      %vm1517 = vmpackc.low %vm1515, %vm1515
      %1522 = vrot.lane.b32.xlu0 %v1496, 18
      %v1523 = vpop.permute.xlu0 %1522
      %1524 = vrot.lane.b32.xlu0 %v1497, 18
      %v1525 = vpop.permute.xlu0 %1524
      %1526 = vrot.lane.b32.xlu0 %v1498, 18
      %v1527 = vpop.permute.xlu0 %1526
      %1528 = vrot.lane.b32.xlu0 %v1499, 18
      %v1529 = vpop.permute.xlu0 %1528
      %v1530 = vrot.slane %v1523, 4
      %v1531 = vrot.slane %v1525, 4
      %v1532 = vrot.slane %v1527, 4
      %v1533 = vrot.slane %v1529, 4
      %v1534 = vsel %vm1459, %v1530, %v1531
      %vm1535 = vcmask 146432
      %v1536 = vsel %vm1535, %v1523, %v1534
      %v1537 = vsel %vm1535, %v1525, %v1531
      %v1538 = vsel %vm1459, %v1532, %v1533
      %v1539 = vsel %vm1535, %v1527, %v1538
      %v1540 = vsel %vm1535, %v1529, %v1533
      %v1545 = vsel %vm1516, %v1471, %v1536
      %v1546 = vsel %vm1517, %v1472, %v1537
      %v1547 = vsel %vm1516, %v1473, %v1539
      %v1548 = vsel %vm1517, %v1474, %v1540
      %v1549 = vunpack.c.l.bf16 %v1545
      %v1550 = vunpack.c.h.bf16 %v1545
      %v1551 = vunpack.c.l.bf16 %v1546
      %v1552 = vunpack.c.l.bf16 %v1547
      %v1553 = vunpack.c.h.bf16 %v1547
      %v1554 = vunpack.c.l.bf16 %v1548
      %v1555 = vmul.f32 %v1549, %v976
      %v1556 = vmul.f32 %v1550, %v980
      %v1557 = vmul.f32 %v1551, %v984
      %v1558 = vmul.f32 %v1552, %v976
      %v1559 = vmul.f32 %v1553, %v980
      %v1560 = vmul.f32 %v1554, %v984
      %v1561 = vpack.c.bf16 %v1558, %v1555
      %v1562 = vpack.c.bf16 %v1559, %v1556
      %v1563 = vpack.c.bf16 %v1560, %v1557
      %v1567 = vunpack.c.l.b16 %v1561
      %v1568 = vunpack.c.l.b16 %v1562
      %v1569 = vunpack.c.l.b16 %v1563
      %v1570 = vunpack.c.h.b16 %v1561
      %v1571 = vunpack.c.h.b16 %v1562
      %v1572 = vunpack.c.h.b16 %v1563
      %v1573 = vpack.c.b16 %v1567, %v998
      %v1574 = vpack.c.b16 %v1569, %v1568
      %v1575 = vpack.c.b16 %v1570, %v1397
      %v1576 = vpack.c.b16 %v1572, %v1571
      %1581 = vst [vmem:[#allocation4] sm:$0xff] %v1573
      %1582 = vst [vmem:[#allocation4 + $0x8] sm:$0xff] %v1574
      %1583 = vst [vmem:[#allocation4 + $0x10] sm:$0xf] %v1004
      %1584 = vst [vmem:[#allocation4 + $0x14] sm:$0xff] %v1575
      %1585 = vst [vmem:[#allocation4 + $0x1c] sm:$0xff] %v1576
      %1586 = vst [vmem:[#allocation4 + $0x24] sm:$0xf] %v1405
      %v1587 = vld [vmem:[%s5] sm:$0xff]
      %v1588 = vld [vmem:[#allocation4] sm:$0xff]
      %v1589 = vld [vmem:[#allocation4 + $0x8] sm:$0xff]
      %v1590 = vld [vmem:[#allocation4 + $0x14] sm:$0xff]
      %v1591 = vld [vmem:[#allocation4 + $0x1c] sm:$0xff]
      %v1592 = vld [vmem:[#allocation4 + $0x4] sm:$0xff]
      %v1593 = vld [vmem:[#allocation4 + $0xc] sm:$0xf]
      %v1594 = vld [vmem:[#allocation4 + $0x18] sm:$0xff]
      %v1595 = vld [vmem:[#allocation4 + $0x20] sm:$0xf]
      %v1596 = vld [vmem:[#allocation4 + $0x4] sm:$0xff]
      %v1597 = vld [vmem:[#allocation4 + $0xc] sm:$0xff]
      %v1598 = vld [vmem:[#allocation4 + $0x18] sm:$0xff]
      %v1599 = vld [vmem:[#allocation4 + $0x20] sm:$0xff]
      %v1604 = vunpack.c.l.b16 %v1588
      %v1605 = vunpack.c.h.b16 %v1588
      %v1606 = vunpack.c.l.b16 %v1589
      %v1607 = vunpack.c.h.b16 %v1589
      %v1608 = vunpack.c.l.b16 %v1590
      %v1609 = vunpack.c.h.b16 %v1590
      %v1610 = vunpack.c.l.b16 %v1591
      %v1611 = vunpack.c.h.b16 %v1591
      %v1612 = vpack.c.b16 %v1608, %v1604
      %v1613 = vpack.c.b16 %v1609, %v1605
      %v1614 = vpack.c.b16 %v1610, %v1606
      %v1615 = vpack.c.b16 %v1611, %v1607
      %1616 = vrot.lane.b32.xlu0 %v1612, 127
      %v1617 = vpop.permute.xlu0 %1616
      %1618 = vrot.lane.b32.xlu0 %v1613, 127
      %v1619 = vpop.permute.xlu0 %1618
      %1620 = vrot.lane.b32.xlu0 %v1614, 127
      %v1621 = vpop.permute.xlu0 %1620
      %1622 = vrot.lane.b32.xlu0 %v1615, 127
      %v1623 = vpop.permute.xlu0 %1622
      %v1624 = vsel %vm633, %v1617, %v1619
      %v1625 = vsel %vm633, %v1619, %v1621
      %v1626 = vsel %vm633, %v1621, %v1623
      %1627 = vrot.lane.b32.xlu0 %v1612, 126
      %v1628 = vpop.permute.xlu0 %1627
      %1629 = vrot.lane.b32.xlu0 %v1613, 126
      %v1630 = vpop.permute.xlu0 %1629
      %1631 = vrot.lane.b32.xlu0 %v1614, 126
      %v1632 = vpop.permute.xlu0 %1631
      %1633 = vrot.lane.b32.xlu0 %v1615, 126
      %v1634 = vpop.permute.xlu0 %1633
      %v1635 = vsel %vm645, %v1628, %v1630
      %v1636 = vsel %vm645, %v1630, %v1632
      %v1637 = vsel %vm645, %v1632, %v1634
      %1638 = vrot.lane.b32.xlu0 %v1612, 110
      %v1639 = vpop.permute.xlu0 %1638
      %1640 = vrot.lane.b32.xlu0 %v1613, 110
      %v1641 = vpop.permute.xlu0 %1640
      %1642 = vrot.lane.b32.xlu0 %v1614, 110
      %v1643 = vpop.permute.xlu0 %1642
      %1644 = vrot.lane.b32.xlu0 %v1615, 110
      %v1645 = vpop.permute.xlu0 %1644
      %v1646 = vsel %vm657, %v1639, %v1641
      %v1647 = vsel %vm657, %v1641, %v1643
      %v1648 = vsel %vm657, %v1643, %v1645
      %v1653 = vunpack.c.l.b16 %v1592
      %v1654 = vunpack.c.h.b16 %v1592
      %v1655 = vunpack.c.l.b16 %v1593
      %v1656 = vunpack.c.l.b16 %v1594
      %v1657 = vunpack.c.h.b16 %v1594
      %v1658 = vunpack.c.l.b16 %v1595
      %v1659 = vpack.c.b16 %v1656, %v1653
      %v1660 = vpack.c.b16 %v1657, %v1654
      %v1661 = vpack.c.b16 %v1658, %v1655
      %1662 = vrot.lane.b32.xlu0 %v1659, 109
      %v1663 = vpop.permute.xlu0 %1662
      %1664 = vrot.lane.b32.xlu0 %v1660, 109
      %v1665 = vpop.permute.xlu0 %1664
      %1666 = vrot.lane.b32.xlu0 %v1661, 109
      %v1667 = vpop.permute.xlu0 %1666
      %v1668 = vsel %vm675, %v1663, %v1665
      %v1669 = vsel %vm675, %v1665, %v1667
      %v1674 = vunpack.c.l.b16 %v1596
      %v1675 = vunpack.c.h.b16 %v1596
      %v1676 = vunpack.c.l.b16 %v1597
      %v1677 = vunpack.c.h.b16 %v1597
      %v1678 = vunpack.c.l.b16 %v1598
      %v1679 = vunpack.c.h.b16 %v1598
      %v1680 = vunpack.c.l.b16 %v1599
      %v1681 = vunpack.c.h.b16 %v1599
      %v1682 = vpack.c.b16 %v1678, %v1674
      %v1683 = vpack.c.b16 %v1679, %v1675
      %v1684 = vpack.c.b16 %v1680, %v1676
      %v1685 = vpack.c.b16 %v1681, %v1677
      %1686 = vrot.lane.b32.xlu0 %v1682, 108
      %v1687 = vpop.permute.xlu0 %1686
      %1688 = vrot.lane.b32.xlu0 %v1683, 108
      %v1689 = vpop.permute.xlu0 %1688
      %1690 = vrot.lane.b32.xlu0 %v1684, 108
      %v1691 = vpop.permute.xlu0 %1690
      %1692 = vrot.lane.b32.xlu0 %v1685, 108
      %v1693 = vpop.permute.xlu0 %1692
      %v1694 = vsel %vm696, %v1687, %v1689
      %v1695 = vsel %vm696, %v1689, %v1691
      %v1696 = vsel %vm696, %v1691, %v1693
      %1697 = vrot.lane.b32.xlu0 %v1682, 92
      %v1698 = vpop.permute.xlu0 %1697
      %1699 = vrot.lane.b32.xlu0 %v1683, 92
      %v1700 = vpop.permute.xlu0 %1699
      %1701 = vrot.lane.b32.xlu0 %v1684, 92
      %v1702 = vpop.permute.xlu0 %1701
      %1703 = vrot.lane.b32.xlu0 %v1685, 92
      %v1704 = vpop.permute.xlu0 %1703
      %v1705 = vsel %vm708, %v1698, %v1700
      %v1706 = vsel %vm708, %v1700, %v1702
      %v1707 = vsel %vm708, %v1702, %v1704
      %1708 = vrot.lane.b32.xlu0 %v1682, 91
      %v1709 = vpop.permute.xlu0 %1708
      %1710 = vrot.lane.b32.xlu0 %v1683, 91
      %v1711 = vpop.permute.xlu0 %1710
      %1712 = vrot.lane.b32.xlu0 %v1684, 91
      %v1713 = vpop.permute.xlu0 %1712
      %1714 = vrot.lane.b32.xlu0 %v1685, 91
      %v1715 = vpop.permute.xlu0 %1714
      %v1716 = vsel %vm720, %v1709, %v1711
      %v1717 = vsel %vm720, %v1711, %v1713
      %v1718 = vsel %vm720, %v1713, %v1715
      %1719 = vrot.lane.b32.xlu0 %v1682, 90
      %v1720 = vpop.permute.xlu0 %1719
      %1721 = vrot.lane.b32.xlu0 %v1683, 90
      %v1722 = vpop.permute.xlu0 %1721
      %1723 = vrot.lane.b32.xlu0 %v1684, 90
      %v1724 = vpop.permute.xlu0 %1723
      %1725 = vrot.lane.b32.xlu0 %v1685, 90
      %v1726 = vpop.permute.xlu0 %1725
      %v1727 = vsel %vm732, %v1720, %v1722
      %v1728 = vsel %vm732, %v1722, %v1724
      %v1729 = vsel %vm732, %v1724, %v1726
      %v1730 = vld [vmem:[%s11] sm:$0xff]
      %1732 = vset.pattern.permute.xlu0 0
      %1733 = vperm.xlu0 %1732, %v1730
      %v1734 = vpop.permute.xlu0 %1733
      %v1737 = vunpack.c.l.b16 %v1587
      %v1738 = vunpack.c.h.b16 %v1587
      %v1739 = vpack.c.b16 %v1737, %v1737
      %v1740 = vpack.c.b16 %v1738, %v1738
      %1742 = vrot.lane.b32.xlu0 %v1612, 19
      %v1743 = vpop.permute.xlu0 %1742
      %1744 = vrot.lane.b32.xlu0 %v1613, 19
      %v1745 = vpop.permute.xlu0 %1744
      %1746 = vrot.lane.b32.xlu0 %v1614, 19
      %v1747 = vpop.permute.xlu0 %1746
      %1748 = vrot.lane.b32.xlu0 %v1615, 19
      %v1749 = vpop.permute.xlu0 %1748
      %1750 = vrot.lane.b32.xlu0 %v1624, 19
      %v1751 = vpop.permute.xlu0 %1750
      %1752 = vrot.lane.b32.xlu0 %v1625, 19
      %v1753 = vpop.permute.xlu0 %1752
      %1754 = vrot.lane.b32.xlu0 %v1626, 19
      %v1755 = vpop.permute.xlu0 %1754
      %1756 = vrot.lane.b32.xlu0 %v1623, 19
      %v1757 = vpop.permute.xlu0 %1756
      %1758 = vrot.lane.b32.xlu0 %v1635, 19
      %v1759 = vpop.permute.xlu0 %1758
      %1760 = vrot.lane.b32.xlu0 %v1636, 19
      %v1761 = vpop.permute.xlu0 %1760
      %1762 = vrot.lane.b32.xlu0 %v1637, 19
      %v1763 = vpop.permute.xlu0 %1762
      %1764 = vrot.lane.b32.xlu0 %v1634, 19
      %v1765 = vpop.permute.xlu0 %1764
      %1766 = vrot.lane.b32.xlu0 %v1646, 19
      %v1767 = vpop.permute.xlu0 %1766
      %1768 = vrot.lane.b32.xlu0 %v1647, 19
      %v1769 = vpop.permute.xlu0 %1768
      %1770 = vrot.lane.b32.xlu0 %v1648, 19
      %v1771 = vpop.permute.xlu0 %1770
      %1772 = vrot.lane.b32.xlu0 %v1645, 19
      %v1773 = vpop.permute.xlu0 %1772
      %1774 = vrot.lane.b32.xlu0 %v1663, 19
      %v1775 = vpop.permute.xlu0 %1774
      %1776 = vrot.lane.b32.xlu0 %v1668, 19
      %v1777 = vpop.permute.xlu0 %1776
      %1778 = vrot.lane.b32.xlu0 %v1669, 19
      %v1779 = vpop.permute.xlu0 %1778
      %1780 = vrot.lane.b32.xlu0 %v1667, 19
      %v1781 = vpop.permute.xlu0 %1780
      %1782 = vrot.lane.b32.xlu0 %v1687, 19
      %v1783 = vpop.permute.xlu0 %1782
      %1784 = vrot.lane.b32.xlu0 %v1694, 19
      %v1785 = vpop.permute.xlu0 %1784
      %1786 = vrot.lane.b32.xlu0 %v1695, 19
      %v1787 = vpop.permute.xlu0 %1786
      %1788 = vrot.lane.b32.xlu0 %v1696, 19
      %v1789 = vpop.permute.xlu0 %1788
      %1790 = vrot.lane.b32.xlu0 %v1698, 19
      %v1791 = vpop.permute.xlu0 %1790
      %1792 = vrot.lane.b32.xlu0 %v1705, 19
      %v1793 = vpop.permute.xlu0 %1792
      %1794 = vrot.lane.b32.xlu0 %v1706, 19
      %v1795 = vpop.permute.xlu0 %1794
      %1796 = vrot.lane.b32.xlu0 %v1707, 19
      %v1797 = vpop.permute.xlu0 %1796
      %1798 = vrot.lane.b32.xlu0 %v1709, 19
      %v1799 = vpop.permute.xlu0 %1798
      %1800 = vrot.lane.b32.xlu0 %v1716, 19
      %v1801 = vpop.permute.xlu0 %1800
      %1802 = vrot.lane.b32.xlu0 %v1717, 19
      %v1803 = vpop.permute.xlu0 %1802
      %1804 = vrot.lane.b32.xlu0 %v1718, 19
      %v1805 = vpop.permute.xlu0 %1804
      %1806 = vrot.lane.b32.xlu0 %v1720, 19
      %v1807 = vpop.permute.xlu0 %1806
      %1808 = vrot.lane.b32.xlu0 %v1727, 19
      %v1809 = vpop.permute.xlu0 %1808
      %1810 = vrot.lane.b32.xlu0 %v1728, 19
      %v1811 = vpop.permute.xlu0 %1810
      %1812 = vrot.lane.b32.xlu0 %v1729, 19
      %v1813 = vpop.permute.xlu0 %1812
      %v1814 = vsel %vm847, %v1743, %v1745
      %v1815 = vsel %vm847, %v1745, %v1747
      %v1816 = vsel %vm847, %v1747, %v1749
      %v1817 = vsel %vm847, %v1751, %v1753
      %v1818 = vsel %vm847, %v1753, %v1755
      %v1819 = vsel %vm847, %v1755, %v1757
      %v1820 = vsel %vm847, %v1759, %v1761
      %v1821 = vsel %vm847, %v1761, %v1763
      %v1822 = vsel %vm847, %v1763, %v1765
      %v1823 = vsel %vm847, %v1767, %v1769
      %v1824 = vsel %vm847, %v1769, %v1771
      %v1825 = vsel %vm847, %v1771, %v1773
      %v1826 = vsel %vm847, %v1775, %v1777
      %v1827 = vsel %vm847, %v1777, %v1779
      %v1828 = vsel %vm847, %v1779, %v1781
      %v1829 = vsel %vm847, %v1783, %v1785
      %v1830 = vsel %vm847, %v1785, %v1787
      %v1831 = vsel %vm847, %v1787, %v1789
      %v1832 = vsel %vm847, %v1791, %v1793
      %v1833 = vsel %vm847, %v1793, %v1795
      %v1834 = vsel %vm847, %v1795, %v1797
      %v1835 = vsel %vm847, %v1799, %v1801
      %v1836 = vsel %vm847, %v1801, %v1803
      %v1837 = vsel %vm847, %v1803, %v1805
      %v1838 = vsel %vm847, %v1807, %v1809
      %v1839 = vsel %vm847, %v1809, %v1811
      %v1840 = vsel %vm847, %v1811, %v1813
      %vm1868 = vcmask 130048
      %v1870 = vsel %vm1868, %v1740, 0
      %1872 = vmatprep.subr.bf16.mxu0 %v1836
      %1873 = vmatpush1.bf16.msra.mxu0 %v1835
      %1874 = vmatprep.subr.bf16.mxu0 %v1833
      %1875 = vmatpush1.bf16.msra.mxu0 %v1832
      %1876 = vmatprep.subr.bf16.mxu0 %v1830
      %1877 = vmatpush1.bf16.msra.mxu0 %v1829
      %1878 = vmatprep.subr.bf16.mxu0 %v1827
      %1879 = vmatpush1.bf16.msra.mxu0 %v1826
      %1880 = vmatprep.subr.bf16.mxu0 %v1824
      %1881 = vmatpush1.bf16.msra.mxu0 %v1823
      %1882 = vmatprep.subr.bf16.mxu0 %v1821
      %1883 = vmatpush1.bf16.msra.mxu0 %v1820
      %1884 = vmatprep.subr.bf16.mxu0 %v1818
      %1885 = vmatpush1.bf16.msra.mxu0 %v1817
      %1886 = vmatprep.subr.bf16.mxu0 %v1815
      %1887 = vmatpush1.bf16.msra.mxu0 %v1814
      %1888 = vmatprep.subr.bf16.mxu0 0
      %1889 = vmatpush2.bf16.msra.mxu0 0
      %1890 = vmatprep.subr.bf16.mxu0 0
      %1891 = vmatpush2.bf16.msra.mxu0 0
      %1892 = vmatprep.subr.bf16.mxu0 0
      %1893 = vmatpush2.bf16.msra.mxu0 0
      %1894 = vmatprep.subr.bf16.mxu0 0
      %1895 = vmatpush2.bf16.msra.mxu0 0
      %1896 = vmatprep.subr.bf16.mxu0 0
      %1897 = vmatpush2.bf16.msra.mxu0 0
      %1898 = vmatprep.subr.bf16.mxu0 0
      %1899 = vmatpush2.bf16.msra.mxu0 0
      %1900 = vmatprep.subr.bf16.mxu0 0
      %1901 = vmatpush2.bf16.msra.mxu0 0
      %1902 = vmatprep.subr.bf16.mxu0 %v1839
      %1903 = vmatpush2.bf16.msra.mxu0 %v1838
      %1904 = vmatprep.mubr.bf16.mxu0 %v1870
      %1905 = vmatmul.mubr.bf16.gmra.mxu0 %v1739
      %v1906 = vpop.f32.mrf.mxu0
      %v1907 = vadd.f32 %v1734, %v1906
      %v1908 = vpop.f32.mrf.mxu0
      %v1909 = vadd.f32 %v1734, %v1908
      %v1910 = vpop.f32.mrf.mxu0
      %v1911 = vpop.f32.mrf.mxu0
      %1912 = vdwg.mxu0
      %1913 = vmatprep.subr.bf16.mxu0 0
      %1914 = vmatpush1.bf16.msra.mxu0 %v1837
      %1915 = vmatprep.subr.bf16.mxu0 0
      %1916 = vmatpush1.bf16.msra.mxu0 %v1834
      %1917 = vmatprep.subr.bf16.mxu0 0
      %1918 = vmatpush1.bf16.msra.mxu0 %v1831
      %1919 = vmatprep.subr.bf16.mxu0 0
      %1920 = vmatpush1.bf16.msra.mxu0 %v1828
      %1921 = vmatprep.subr.bf16.mxu0 0
      %1922 = vmatpush1.bf16.msra.mxu0 %v1825
      %1923 = vmatprep.subr.bf16.mxu0 0
      %1924 = vmatpush1.bf16.msra.mxu0 %v1822
      %1925 = vmatprep.subr.bf16.mxu0 0
      %1926 = vmatpush1.bf16.msra.mxu0 %v1819
      %1927 = vmatprep.subr.bf16.mxu0 0
      %1928 = vmatpush1.bf16.msra.mxu0 %v1816
      %1929 = vmatprep.subr.bf16.mxu0 0
      %1930 = vmatpush2.bf16.msra.mxu0 0
      %1931 = vmatprep.subr.bf16.mxu0 0
      %1932 = vmatpush2.bf16.msra.mxu0 0
      %1933 = vmatprep.subr.bf16.mxu0 0
      %1934 = vmatpush2.bf16.msra.mxu0 0
      %1935 = vmatprep.subr.bf16.mxu0 0
      %1936 = vmatpush2.bf16.msra.mxu0 0
      %1937 = vmatprep.subr.bf16.mxu0 0
      %1938 = vmatpush2.bf16.msra.mxu0 0
      %1939 = vmatprep.subr.bf16.mxu0 0
      %1940 = vmatpush2.bf16.msra.mxu0 0
      %1941 = vmatprep.subr.bf16.mxu0 0
      %1942 = vmatpush2.bf16.msra.mxu0 0
      %1943 = vmatprep.subr.bf16.mxu0 0
      %1944 = vmatpush2.bf16.msra.mxu0 %v1840
      %1945 = vmatprep.mubr.bf16.mxu0 %v1870
      %1946 = vmatmul.mubr.bf16.gmra.mxu0 %v1739
      %v1947 = vpop.f32.mrf.mxu0
      %v1948 = vadd.f32 %v1734, %v1947
      %v1949 = vpop.f32.mrf.mxu0
      %v1950 = vpop.f32.mrf.mxu0
      %v1951 = vpop.f32.mrf.mxu0
      %1952 = vdwg.mxu0
      %v1953 = vmax.f32 %v1907, 0.0
      %v1954 = vmax.f32 %v1909, 0.0
      %v1955 = vmax.f32 %v1948, 0.0
      %v1956 = vmul.f32 %v1953, %v976
      %v1957 = vmul.f32 %v1954, %v980
      %v1958 = vmul.f32 %v1955, %v984
      %v1959 = vpack.c.bf16 %v1956, %v1956
      %v1960 = vpack.c.bf16 %v1957, %v1957
      %v1961 = vpack.c.bf16 %v1958, %v1958
      %v1965 = vunpack.c.l.b16 %v1959
      %v1966 = vunpack.c.l.b16 %v1960
      %v1967 = vunpack.c.l.b16 %v1961
      %v1968 = vpack.c.b16 %v1965, %v998
      %v1969 = vpack.c.b16 %v1967, %v1966
      %1972 = vst [vmem:[#allocation5] sm:$0xff] %v1968
      %1973 = vst [vmem:[#allocation5 + $0x8] sm:$0xff] %v1969
      %1974 = vst [vmem:[#allocation5 + $0x10] sm:$0xf] %v1004
      %v1975 = vld [vmem:[%s6] sm:$0xf]
      %v1976 = vld [vmem:[#allocation5] sm:$0xff]
      %v1977 = vld [vmem:[#allocation5 + $0x8] sm:$0xff]
      %v1978 = vld [vmem:[#allocation5 + $0x4] sm:$0xff]
      %v1979 = vld [vmem:[#allocation5 + $0xc] sm:$0xf]
      %v1980 = vld [vmem:[#allocation5 + $0x4] sm:$0xff]
      %v1981 = vld [vmem:[#allocation5 + $0xc] sm:$0xff]
      %v1984 = vunpack.c.l.b16 %v1976
      %v1985 = vunpack.c.h.b16 %v1976
      %v1986 = vunpack.c.l.b16 %v1977
      %v1987 = vunpack.c.h.b16 %v1977
      %v1988 = vpack.c.b16 %v1984, %v1984
      %v1989 = vpack.c.b16 %v1985, %v1985
      %v1990 = vpack.c.b16 %v1986, %v1986
      %v1991 = vpack.c.b16 %v1987, %v1987
      %1992 = vrot.lane.b32.xlu0 %v1988, 127
      %v1993 = vpop.permute.xlu0 %1992
      %1994 = vrot.lane.b32.xlu0 %v1989, 127
      %v1995 = vpop.permute.xlu0 %1994
      %1996 = vrot.lane.b32.xlu0 %v1990, 127
      %v1997 = vpop.permute.xlu0 %1996
      %1998 = vrot.lane.b32.xlu0 %v1991, 127
      %v1999 = vpop.permute.xlu0 %1998
      %v2000 = vsel %vm633, %v1993, %v1995
      %v2001 = vsel %vm633, %v1995, %v1997
      %v2002 = vsel %vm633, %v1997, %v1999
      %2003 = vrot.lane.b32.xlu0 %v1988, 126
      %v2004 = vpop.permute.xlu0 %2003
      %2005 = vrot.lane.b32.xlu0 %v1989, 126
      %v2006 = vpop.permute.xlu0 %2005
      %2007 = vrot.lane.b32.xlu0 %v1990, 126
      %v2008 = vpop.permute.xlu0 %2007
      %2009 = vrot.lane.b32.xlu0 %v1991, 126
      %v2010 = vpop.permute.xlu0 %2009
      %v2011 = vsel %vm645, %v2004, %v2006
      %v2012 = vsel %vm645, %v2006, %v2008
      %v2013 = vsel %vm645, %v2008, %v2010
      %2014 = vrot.lane.b32.xlu0 %v1988, 110
      %v2015 = vpop.permute.xlu0 %2014
      %2016 = vrot.lane.b32.xlu0 %v1989, 110
      %v2017 = vpop.permute.xlu0 %2016
      %2018 = vrot.lane.b32.xlu0 %v1990, 110
      %v2019 = vpop.permute.xlu0 %2018
      %2020 = vrot.lane.b32.xlu0 %v1991, 110
      %v2021 = vpop.permute.xlu0 %2020
      %v2022 = vsel %vm657, %v2015, %v2017
      %v2023 = vsel %vm657, %v2017, %v2019
      %v2024 = vsel %vm657, %v2019, %v2021
      %v2027 = vunpack.c.l.b16 %v1978
      %v2028 = vunpack.c.h.b16 %v1978
      %v2029 = vunpack.c.l.b16 %v1979
      %v2030 = vpack.c.b16 %v2027, %v2027
      %v2031 = vpack.c.b16 %v2028, %v2028
      %v2032 = vpack.c.b16 %v2029, %v2029
      %2033 = vrot.lane.b32.xlu0 %v2030, 109
      %v2034 = vpop.permute.xlu0 %2033
      %2035 = vrot.lane.b32.xlu0 %v2031, 109
      %v2036 = vpop.permute.xlu0 %2035
      %2037 = vrot.lane.b32.xlu0 %v2032, 109
      %v2038 = vpop.permute.xlu0 %2037
      %v2039 = vsel %vm675, %v2034, %v2036
      %v2040 = vsel %vm675, %v2036, %v2038
      %v2043 = vunpack.c.l.b16 %v1980
      %v2044 = vunpack.c.h.b16 %v1980
      %v2045 = vunpack.c.l.b16 %v1981
      %v2046 = vunpack.c.h.b16 %v1981
      %v2047 = vpack.c.b16 %v2043, %v2043
      %v2048 = vpack.c.b16 %v2044, %v2044
      %v2049 = vpack.c.b16 %v2045, %v2045
      %v2050 = vpack.c.b16 %v2046, %v2046
      %2051 = vrot.lane.b32.xlu0 %v2047, 108
      %v2052 = vpop.permute.xlu0 %2051
      %2053 = vrot.lane.b32.xlu0 %v2048, 108
      %v2054 = vpop.permute.xlu0 %2053
      %2055 = vrot.lane.b32.xlu0 %v2049, 108
      %v2056 = vpop.permute.xlu0 %2055
      %2057 = vrot.lane.b32.xlu0 %v2050, 108
      %v2058 = vpop.permute.xlu0 %2057
      %v2059 = vsel %vm696, %v2052, %v2054
      %v2060 = vsel %vm696, %v2054, %v2056
      %v2061 = vsel %vm696, %v2056, %v2058
      %2062 = vrot.lane.b32.xlu0 %v2047, 92
      %v2063 = vpop.permute.xlu0 %2062
      %2064 = vrot.lane.b32.xlu0 %v2048, 92
      %v2065 = vpop.permute.xlu0 %2064
      %2066 = vrot.lane.b32.xlu0 %v2049, 92
      %v2067 = vpop.permute.xlu0 %2066
      %2068 = vrot.lane.b32.xlu0 %v2050, 92
      %v2069 = vpop.permute.xlu0 %2068
      %v2070 = vsel %vm708, %v2063, %v2065
      %v2071 = vsel %vm708, %v2065, %v2067
      %v2072 = vsel %vm708, %v2067, %v2069
      %2073 = vrot.lane.b32.xlu0 %v2047, 91
      %v2074 = vpop.permute.xlu0 %2073
      %2075 = vrot.lane.b32.xlu0 %v2048, 91
      %v2076 = vpop.permute.xlu0 %2075
      %2077 = vrot.lane.b32.xlu0 %v2049, 91
      %v2078 = vpop.permute.xlu0 %2077
      %2079 = vrot.lane.b32.xlu0 %v2050, 91
      %v2080 = vpop.permute.xlu0 %2079
      %v2081 = vsel %vm720, %v2074, %v2076
      %v2082 = vsel %vm720, %v2076, %v2078
      %v2083 = vsel %vm720, %v2078, %v2080
      %2084 = vrot.lane.b32.xlu0 %v2047, 90
      %v2085 = vpop.permute.xlu0 %2084
      %2086 = vrot.lane.b32.xlu0 %v2048, 90
      %v2087 = vpop.permute.xlu0 %2086
      %2088 = vrot.lane.b32.xlu0 %v2049, 90
      %v2089 = vpop.permute.xlu0 %2088
      %2090 = vrot.lane.b32.xlu0 %v2050, 90
      %v2091 = vpop.permute.xlu0 %2090
      %v2092 = vsel %vm732, %v2085, %v2087
      %v2093 = vsel %vm732, %v2087, %v2089
      %v2094 = vsel %vm732, %v2089, %v2091
      %v2097 = vsel %vm736, %v1988, %v2000
      %v2100 = vsel %vm736, %v1989, %v2001
      %v2103 = vsel %vm736, %v1990, %v2002
      %v2106 = vsel %vm736, %v1991, %v1999
      %v2109 = vsel %vm736, %v2011, %v2022
      %v2112 = vsel %vm736, %v2012, %v2023
      %v2115 = vsel %vm736, %v2013, %v2024
      %v2118 = vsel %vm736, %v2010, %v2021
      %v2121 = vsel %vm736, %v2034, %v2052
      %v2124 = vsel %vm736, %v2039, %v2059
      %v2127 = vsel %vm736, %v2040, %v2060
      %v2130 = vsel %vm736, %v2038, %v2061
      %v2133 = vsel %vm736, %v2063, %v2074
      %v2136 = vsel %vm736, %v2070, %v2081
      %v2139 = vsel %vm736, %v2071, %v2082
      %v2142 = vsel %vm736, %v2072, %v2083
      %v2143 = vld [vmem:[%s7] sm:$0xf]
      %v2144 = vld [vmem:[#allocation2] sm:$0xff]
      %v2145 = vld [vmem:[#allocation2 + $0x8] sm:$0xff]
      %v2146 = vld [vmem:[#allocation2 + $0x4] sm:$0xff]
      %v2147 = vld [vmem:[#allocation2 + $0xc] sm:$0xf]
      %v2148 = vld [vmem:[#allocation2 + $0x4] sm:$0xff]
      %v2149 = vld [vmem:[#allocation2 + $0xc] sm:$0xff]
      %v2152 = vunpack.c.l.b16 %v2144
      %v2153 = vunpack.c.h.b16 %v2144
      %v2154 = vunpack.c.l.b16 %v2145
      %v2155 = vunpack.c.h.b16 %v2145
      %v2156 = vpack.c.b16 %v2152, %v2152
      %v2157 = vpack.c.b16 %v2153, %v2153
      %v2158 = vpack.c.b16 %v2154, %v2154
      %v2159 = vpack.c.b16 %v2155, %v2155
      %2160 = vrot.lane.b32.xlu0 %v2156, 127
      %v2161 = vpop.permute.xlu0 %2160
      %2162 = vrot.lane.b32.xlu0 %v2157, 127
      %v2163 = vpop.permute.xlu0 %2162
      %2164 = vrot.lane.b32.xlu0 %v2158, 127
      %v2165 = vpop.permute.xlu0 %2164
      %2166 = vrot.lane.b32.xlu0 %v2159, 127
      %v2167 = vpop.permute.xlu0 %2166
      %v2168 = vsel %vm633, %v2161, %v2163
      %v2169 = vsel %vm633, %v2163, %v2165
      %v2170 = vsel %vm633, %v2165, %v2167
      %2171 = vrot.lane.b32.xlu0 %v2156, 126
      %v2172 = vpop.permute.xlu0 %2171
      %2173 = vrot.lane.b32.xlu0 %v2157, 126
      %v2174 = vpop.permute.xlu0 %2173
      %2175 = vrot.lane.b32.xlu0 %v2158, 126
      %v2176 = vpop.permute.xlu0 %2175
      %2177 = vrot.lane.b32.xlu0 %v2159, 126
      %v2178 = vpop.permute.xlu0 %2177
      %v2179 = vsel %vm645, %v2172, %v2174
      %v2180 = vsel %vm645, %v2174, %v2176
      %v2181 = vsel %vm645, %v2176, %v2178
      %2182 = vrot.lane.b32.xlu0 %v2156, 110
      %v2183 = vpop.permute.xlu0 %2182
      %2184 = vrot.lane.b32.xlu0 %v2157, 110
      %v2185 = vpop.permute.xlu0 %2184
      %2186 = vrot.lane.b32.xlu0 %v2158, 110
      %v2187 = vpop.permute.xlu0 %2186
      %2188 = vrot.lane.b32.xlu0 %v2159, 110
      %v2189 = vpop.permute.xlu0 %2188
      %v2190 = vsel %vm657, %v2183, %v2185
      %v2191 = vsel %vm657, %v2185, %v2187
      %v2192 = vsel %vm657, %v2187, %v2189
      %v2195 = vunpack.c.l.b16 %v2146
      %v2196 = vunpack.c.h.b16 %v2146
      %v2197 = vunpack.c.l.b16 %v2147
      %v2198 = vpack.c.b16 %v2195, %v2195
      %v2199 = vpack.c.b16 %v2196, %v2196
      %v2200 = vpack.c.b16 %v2197, %v2197
      %2201 = vrot.lane.b32.xlu0 %v2198, 109
      %v2202 = vpop.permute.xlu0 %2201
      %2203 = vrot.lane.b32.xlu0 %v2199, 109
      %v2204 = vpop.permute.xlu0 %2203
      %2205 = vrot.lane.b32.xlu0 %v2200, 109
      %v2206 = vpop.permute.xlu0 %2205
      %v2207 = vsel %vm675, %v2202, %v2204
      %v2208 = vsel %vm675, %v2204, %v2206
      %v2211 = vunpack.c.l.b16 %v2148
      %v2212 = vunpack.c.h.b16 %v2148
      %v2213 = vunpack.c.l.b16 %v2149
      %v2214 = vunpack.c.h.b16 %v2149
      %v2215 = vpack.c.b16 %v2211, %v2211
      %v2216 = vpack.c.b16 %v2212, %v2212
      %v2217 = vpack.c.b16 %v2213, %v2213
      %v2218 = vpack.c.b16 %v2214, %v2214
      %2219 = vrot.lane.b32.xlu0 %v2215, 108
      %v2220 = vpop.permute.xlu0 %2219
      %2221 = vrot.lane.b32.xlu0 %v2216, 108
      %v2222 = vpop.permute.xlu0 %2221
      %2223 = vrot.lane.b32.xlu0 %v2217, 108
      %v2224 = vpop.permute.xlu0 %2223
      %2225 = vrot.lane.b32.xlu0 %v2218, 108
      %v2226 = vpop.permute.xlu0 %2225
      %v2227 = vsel %vm696, %v2220, %v2222
      %v2228 = vsel %vm696, %v2222, %v2224
      %v2229 = vsel %vm696, %v2224, %v2226
      %2230 = vrot.lane.b32.xlu0 %v2215, 92
      %v2231 = vpop.permute.xlu0 %2230
      %2232 = vrot.lane.b32.xlu0 %v2216, 92
      %v2233 = vpop.permute.xlu0 %2232
      %2234 = vrot.lane.b32.xlu0 %v2217, 92
      %v2235 = vpop.permute.xlu0 %2234
      %2236 = vrot.lane.b32.xlu0 %v2218, 92
      %v2237 = vpop.permute.xlu0 %2236
      %v2238 = vsel %vm708, %v2231, %v2233
      %v2239 = vsel %vm708, %v2233, %v2235
      %v2240 = vsel %vm708, %v2235, %v2237
      %2241 = vrot.lane.b32.xlu0 %v2215, 91
      %v2242 = vpop.permute.xlu0 %2241
      %2243 = vrot.lane.b32.xlu0 %v2216, 91
      %v2244 = vpop.permute.xlu0 %2243
      %2245 = vrot.lane.b32.xlu0 %v2217, 91
      %v2246 = vpop.permute.xlu0 %2245
      %2247 = vrot.lane.b32.xlu0 %v2218, 91
      %v2248 = vpop.permute.xlu0 %2247
      %v2249 = vsel %vm720, %v2242, %v2244
      %v2250 = vsel %vm720, %v2244, %v2246
      %v2251 = vsel %vm720, %v2246, %v2248
      %2252 = vrot.lane.b32.xlu0 %v2215, 90
      %v2253 = vpop.permute.xlu0 %2252
      %2254 = vrot.lane.b32.xlu0 %v2216, 90
      %v2255 = vpop.permute.xlu0 %2254
      %2256 = vrot.lane.b32.xlu0 %v2217, 90
      %v2257 = vpop.permute.xlu0 %2256
      %2258 = vrot.lane.b32.xlu0 %v2218, 90
      %v2259 = vpop.permute.xlu0 %2258
      %v2260 = vsel %vm732, %v2253, %v2255
      %v2261 = vsel %vm732, %v2255, %v2257
      %v2262 = vsel %vm732, %v2257, %v2259
      %v2265 = vsel %vm736, %v2156, %v2168
      %v2268 = vsel %vm736, %v2157, %v2169
      %v2271 = vsel %vm736, %v2158, %v2170
      %v2274 = vsel %vm736, %v2159, %v2167
      %v2277 = vsel %vm736, %v2179, %v2190
      %v2280 = vsel %vm736, %v2180, %v2191
      %v2283 = vsel %vm736, %v2181, %v2192
      %v2286 = vsel %vm736, %v2178, %v2189
      %v2289 = vsel %vm736, %v2202, %v2220
      %v2292 = vsel %vm736, %v2207, %v2227
      %v2295 = vsel %vm736, %v2208, %v2228
      %v2298 = vsel %vm736, %v2206, %v2229
      %v2301 = vsel %vm736, %v2231, %v2242
      %v2304 = vsel %vm736, %v2238, %v2249
      %v2307 = vsel %vm736, %v2239, %v2250
      %v2310 = vsel %vm736, %v2240, %v2251
      %2327 = vrot.lane.b32.xlu0 %v2265, 19
      %v2328 = vpop.permute.xlu0 %2327
      %2329 = vrot.lane.b32.xlu0 %v2268, 19
      %v2330 = vpop.permute.xlu0 %2329
      %2331 = vrot.lane.b32.xlu0 %v2271, 19
      %v2332 = vpop.permute.xlu0 %2331
      %2333 = vrot.lane.b32.xlu0 %v2274, 19
      %v2334 = vpop.permute.xlu0 %2333
      %2335 = vrot.lane.b32.xlu0 %v2277, 19
      %v2336 = vpop.permute.xlu0 %2335
      %2337 = vrot.lane.b32.xlu0 %v2280, 19
      %v2338 = vpop.permute.xlu0 %2337
      %2339 = vrot.lane.b32.xlu0 %v2283, 19
      %v2340 = vpop.permute.xlu0 %2339
      %2341 = vrot.lane.b32.xlu0 %v2286, 19
      %v2342 = vpop.permute.xlu0 %2341
      %2343 = vrot.lane.b32.xlu0 %v2289, 19
      %v2344 = vpop.permute.xlu0 %2343
      %2345 = vrot.lane.b32.xlu0 %v2292, 19
      %v2346 = vpop.permute.xlu0 %2345
      %2347 = vrot.lane.b32.xlu0 %v2295, 19
      %v2348 = vpop.permute.xlu0 %2347
      %2349 = vrot.lane.b32.xlu0 %v2298, 19
      %v2350 = vpop.permute.xlu0 %2349
      %2351 = vrot.lane.b32.xlu0 %v2301, 19
      %v2352 = vpop.permute.xlu0 %2351
      %2353 = vrot.lane.b32.xlu0 %v2304, 19
      %v2354 = vpop.permute.xlu0 %2353
      %2355 = vrot.lane.b32.xlu0 %v2307, 19
      %v2356 = vpop.permute.xlu0 %2355
      %2357 = vrot.lane.b32.xlu0 %v2310, 19
      %v2358 = vpop.permute.xlu0 %2357
      %2359 = vrot.lane.b32.xlu0 %v2253, 19
      %v2360 = vpop.permute.xlu0 %2359
      %2361 = vrot.lane.b32.xlu0 %v2260, 19
      %v2362 = vpop.permute.xlu0 %2361
      %2363 = vrot.lane.b32.xlu0 %v2261, 19
      %v2364 = vpop.permute.xlu0 %2363
      %2365 = vrot.lane.b32.xlu0 %v2262, 19
      %v2366 = vpop.permute.xlu0 %2365
      %v2367 = vsel %vm847, %v2328, %v2330
      %v2368 = vsel %vm847, %v2330, %v2332
      %v2369 = vsel %vm847, %v2332, %v2334
      %v2370 = vsel %vm847, %v2336, %v2338
      %v2371 = vsel %vm847, %v2338, %v2340
      %v2372 = vsel %vm847, %v2340, %v2342
      %v2373 = vsel %vm847, %v2344, %v2346
      %v2374 = vsel %vm847, %v2346, %v2348
      %v2375 = vsel %vm847, %v2348, %v2350
      %v2376 = vsel %vm847, %v2352, %v2354
      %v2377 = vsel %vm847, %v2354, %v2356
      %v2378 = vsel %vm847, %v2356, %v2358
      %v2379 = vsel %vm847, %v2360, %v2362
      %v2380 = vsel %vm847, %v2362, %v2364
      %v2381 = vsel %vm847, %v2364, %v2366
      %v2395 = vsel %vm875, %v2143, 0
      %v2398 = vsel %vm736, %v2379, 0
      %v2401 = vsel %vm736, %v2380, 0
      %v2404 = vsel %vm736, %v2381, 0
      %2406 = vmatprep.subr.bf16.mxu0 0
      %2407 = vmatpush1.bf16.msra.mxu0 0
      %2408 = vmatprep.subr.bf16.mxu0 0
      %2409 = vmatpush1.bf16.msra.mxu0 0
      %2410 = vmatprep.subr.bf16.mxu0 0
      %2411 = vmatpush1.bf16.msra.mxu0 0
      %2412 = vmatprep.subr.bf16.mxu0 %v2401
      %2413 = vmatpush1.bf16.msra.mxu0 %v2398
      %2414 = vmatprep.subr.bf16.mxu0 %v2377
      %2415 = vmatpush1.bf16.msra.mxu0 %v2376
      %2416 = vmatprep.subr.bf16.mxu0 %v2374
      %2417 = vmatpush1.bf16.msra.mxu0 %v2373
      %2418 = vmatprep.subr.bf16.mxu0 %v2371
      %2419 = vmatpush1.bf16.msra.mxu0 %v2370
      %2420 = vmatprep.subr.bf16.mxu0 %v2368
      %2421 = vmatpush1.bf16.msra.mxu0 %v2367
      %2422 = vmatprep.subr.bf16.mxu0 0
      %2423 = vmatpush2.bf16.msra.mxu0 0
      %2424 = vmatprep.subr.bf16.mxu0 0
      %2425 = vmatpush2.bf16.msra.mxu0 0
      %2426 = vmatprep.subr.bf16.mxu0 0
      %2427 = vmatpush2.bf16.msra.mxu0 0
      %2428 = vmatprep.subr.bf16.mxu0 0
      %2429 = vmatpush2.bf16.msra.mxu0 0
      %2430 = vmatprep.subr.bf16.mxu0 0
      %2431 = vmatpush2.bf16.msra.mxu0 0
      %2432 = vmatprep.subr.bf16.mxu0 0
      %2433 = vmatpush2.bf16.msra.mxu0 0
      %2434 = vmatprep.subr.bf16.mxu0 0
      %2435 = vmatpush2.bf16.msra.mxu0 0
      %2436 = vmatprep.subr.bf16.mxu0 0
      %2437 = vmatpush2.bf16.msra.mxu0 0
      %2438 = vmatprep.mubr.bf16.mxu0 0
      %2439 = vmatmul.mubr.bf16.gmra.mxu0 %v2395
      %v2440 = vpop.f32.mrf.mxu0
      %v2441 = vadd.f32 0.0, %v2440
      %v2442 = vpop.f32.mrf.mxu0
      %v2443 = vadd.f32 0.0, %v2442
      %v2444 = vpop.f32.mrf.mxu0
      %v2445 = vpop.f32.mrf.mxu0
      %2446 = vdwg.mxu0
      %2447 = vmatprep.subr.bf16.mxu0 0
      %2448 = vmatpush1.bf16.msra.mxu0 0
      %2449 = vmatprep.subr.bf16.mxu0 0
      %2450 = vmatpush1.bf16.msra.mxu0 0
      %2451 = vmatprep.subr.bf16.mxu0 0
      %2452 = vmatpush1.bf16.msra.mxu0 0
      %2453 = vmatprep.subr.bf16.mxu0 0
      %2454 = vmatpush1.bf16.msra.mxu0 %v2404
      %2455 = vmatprep.subr.bf16.mxu0 0
      %2456 = vmatpush1.bf16.msra.mxu0 %v2378
      %2457 = vmatprep.subr.bf16.mxu0 0
      %2458 = vmatpush1.bf16.msra.mxu0 %v2375
      %2459 = vmatprep.subr.bf16.mxu0 0
      %2460 = vmatpush1.bf16.msra.mxu0 %v2372
      %2461 = vmatprep.subr.bf16.mxu0 0
      %2462 = vmatpush1.bf16.msra.mxu0 %v2369
      %2463 = vmatprep.subr.bf16.mxu0 0
      %2464 = vmatpush2.bf16.msra.mxu0 0
      %2465 = vmatprep.subr.bf16.mxu0 0
      %2466 = vmatpush2.bf16.msra.mxu0 0
      %2467 = vmatprep.subr.bf16.mxu0 0
      %2468 = vmatpush2.bf16.msra.mxu0 0
      %2469 = vmatprep.subr.bf16.mxu0 0
      %2470 = vmatpush2.bf16.msra.mxu0 0
      %2471 = vmatprep.subr.bf16.mxu0 0
      %2472 = vmatpush2.bf16.msra.mxu0 0
      %2473 = vmatprep.subr.bf16.mxu0 0
      %2474 = vmatpush2.bf16.msra.mxu0 0
      %2475 = vmatprep.subr.bf16.mxu0 0
      %2476 = vmatpush2.bf16.msra.mxu0 0
      %2477 = vmatprep.subr.bf16.mxu0 0
      %2478 = vmatpush2.bf16.msra.mxu0 0
      %2479 = vmatprep.mubr.bf16.mxu0 0
      %2480 = vmatmul.mubr.bf16.gmra.mxu0 %v2395
      %v2481 = vpop.f32.mrf.mxu0
      %v2482 = vadd.f32 0.0, %v2481
      %v2483 = vpop.f32.mrf.mxu0
      %v2484 = vpop.f32.mrf.mxu0
      %v2485 = vpop.f32.mrf.mxu0
      %2486 = vdwg.mxu0
      %2503 = vrot.lane.b32.xlu0 %v2097, 19
      %v2504 = vpop.permute.xlu0 %2503
      %2505 = vrot.lane.b32.xlu0 %v2100, 19
      %v2506 = vpop.permute.xlu0 %2505
      %2507 = vrot.lane.b32.xlu0 %v2103, 19
      %v2508 = vpop.permute.xlu0 %2507
      %2509 = vrot.lane.b32.xlu0 %v2106, 19
      %v2510 = vpop.permute.xlu0 %2509
      %2511 = vrot.lane.b32.xlu0 %v2109, 19
      %v2512 = vpop.permute.xlu0 %2511
      %2513 = vrot.lane.b32.xlu0 %v2112, 19
      %v2514 = vpop.permute.xlu0 %2513
      %2515 = vrot.lane.b32.xlu0 %v2115, 19
      %v2516 = vpop.permute.xlu0 %2515
      %2517 = vrot.lane.b32.xlu0 %v2118, 19
      %v2518 = vpop.permute.xlu0 %2517
      %2519 = vrot.lane.b32.xlu0 %v2121, 19
      %v2520 = vpop.permute.xlu0 %2519
      %2521 = vrot.lane.b32.xlu0 %v2124, 19
      %v2522 = vpop.permute.xlu0 %2521
      %2523 = vrot.lane.b32.xlu0 %v2127, 19
      %v2524 = vpop.permute.xlu0 %2523
      %2525 = vrot.lane.b32.xlu0 %v2130, 19
      %v2526 = vpop.permute.xlu0 %2525
      %2527 = vrot.lane.b32.xlu0 %v2133, 19
      %v2528 = vpop.permute.xlu0 %2527
      %2529 = vrot.lane.b32.xlu0 %v2136, 19
      %v2530 = vpop.permute.xlu0 %2529
      %2531 = vrot.lane.b32.xlu0 %v2139, 19
      %v2532 = vpop.permute.xlu0 %2531
      %2533 = vrot.lane.b32.xlu0 %v2142, 19
      %v2534 = vpop.permute.xlu0 %2533
      %2535 = vrot.lane.b32.xlu0 %v2085, 19
      %v2536 = vpop.permute.xlu0 %2535
      %2537 = vrot.lane.b32.xlu0 %v2092, 19
      %v2538 = vpop.permute.xlu0 %2537
      %2539 = vrot.lane.b32.xlu0 %v2093, 19
      %v2540 = vpop.permute.xlu0 %2539
      %2541 = vrot.lane.b32.xlu0 %v2094, 19
      %v2542 = vpop.permute.xlu0 %2541
      %v2543 = vsel %vm847, %v2504, %v2506
      %v2544 = vsel %vm847, %v2506, %v2508
      %v2545 = vsel %vm847, %v2508, %v2510
      %v2546 = vsel %vm847, %v2512, %v2514
      %v2547 = vsel %vm847, %v2514, %v2516
      %v2548 = vsel %vm847, %v2516, %v2518
      %v2549 = vsel %vm847, %v2520, %v2522
      %v2550 = vsel %vm847, %v2522, %v2524
      %v2551 = vsel %vm847, %v2524, %v2526
      %v2552 = vsel %vm847, %v2528, %v2530
      %v2553 = vsel %vm847, %v2530, %v2532
      %v2554 = vsel %vm847, %v2532, %v2534
      %v2555 = vsel %vm847, %v2536, %v2538
      %v2556 = vsel %vm847, %v2538, %v2540
      %v2557 = vsel %vm847, %v2540, %v2542
      %v2571 = vsel %vm875, %v1975, 0
      %v2574 = vsel %vm736, %v2555, 0
      %v2577 = vsel %vm736, %v2556, 0
      %v2580 = vsel %vm736, %v2557, 0
      %2582 = vmatprep.subr.bf16.mxu0 0
      %2583 = vmatpush1.bf16.msra.mxu0 0
      %2584 = vmatprep.subr.bf16.mxu0 0
      %2585 = vmatpush1.bf16.msra.mxu0 0
      %2586 = vmatprep.subr.bf16.mxu0 0
      %2587 = vmatpush1.bf16.msra.mxu0 0
      %2588 = vmatprep.subr.bf16.mxu0 %v2577
      %2589 = vmatpush1.bf16.msra.mxu0 %v2574
      %2590 = vmatprep.subr.bf16.mxu0 %v2553
      %2591 = vmatpush1.bf16.msra.mxu0 %v2552
      %2592 = vmatprep.subr.bf16.mxu0 %v2550
      %2593 = vmatpush1.bf16.msra.mxu0 %v2549
      %2594 = vmatprep.subr.bf16.mxu0 %v2547
      %2595 = vmatpush1.bf16.msra.mxu0 %v2546
      %2596 = vmatprep.subr.bf16.mxu0 %v2544
      %2597 = vmatpush1.bf16.msra.mxu0 %v2543
      %2598 = vmatprep.subr.bf16.mxu0 0
      %2599 = vmatpush2.bf16.msra.mxu0 0
      %2600 = vmatprep.subr.bf16.mxu0 0
      %2601 = vmatpush2.bf16.msra.mxu0 0
      %2602 = vmatprep.subr.bf16.mxu0 0
      %2603 = vmatpush2.bf16.msra.mxu0 0
      %2604 = vmatprep.subr.bf16.mxu0 0
      %2605 = vmatpush2.bf16.msra.mxu0 0
      %2606 = vmatprep.subr.bf16.mxu0 0
      %2607 = vmatpush2.bf16.msra.mxu0 0
      %2608 = vmatprep.subr.bf16.mxu0 0
      %2609 = vmatpush2.bf16.msra.mxu0 0
      %2610 = vmatprep.subr.bf16.mxu0 0
      %2611 = vmatpush2.bf16.msra.mxu0 0
      %2612 = vmatprep.subr.bf16.mxu0 0
      %2613 = vmatpush2.bf16.msra.mxu0 0
      %2614 = vmatprep.mubr.bf16.mxu0 0
      %2615 = vmatmul.mubr.bf16.gmra.mxu0 %v2571
      %v2616 = vpop.f32.mrf.mxu0
      %v2617 = vadd.f32 %v2441, %v2616
      %v2618 = vpop.f32.mrf.mxu0
      %v2619 = vadd.f32 %v2443, %v2618
      %v2620 = vpop.f32.mrf.mxu0
      %v2621 = vpop.f32.mrf.mxu0
      %2622 = vdwg.mxu0
      %2623 = vmatprep.subr.bf16.mxu0 0
      %2624 = vmatpush1.bf16.msra.mxu0 0
      %2625 = vmatprep.subr.bf16.mxu0 0
      %2626 = vmatpush1.bf16.msra.mxu0 0
      %2627 = vmatprep.subr.bf16.mxu0 0
      %2628 = vmatpush1.bf16.msra.mxu0 0
      %2629 = vmatprep.subr.bf16.mxu0 0
      %2630 = vmatpush1.bf16.msra.mxu0 %v2580
      %2631 = vmatprep.subr.bf16.mxu0 0
      %2632 = vmatpush1.bf16.msra.mxu0 %v2554
      %2633 = vmatprep.subr.bf16.mxu0 0
      %2634 = vmatpush1.bf16.msra.mxu0 %v2551
      %2635 = vmatprep.subr.bf16.mxu0 0
      %2636 = vmatpush1.bf16.msra.mxu0 %v2548
      %2637 = vmatprep.subr.bf16.mxu0 0
      %2638 = vmatpush1.bf16.msra.mxu0 %v2545
      %2639 = vmatprep.subr.bf16.mxu0 0
      %2640 = vmatpush2.bf16.msra.mxu0 0
      %2641 = vmatprep.subr.bf16.mxu0 0
      %2642 = vmatpush2.bf16.msra.mxu0 0
      %2643 = vmatprep.subr.bf16.mxu0 0
      %2644 = vmatpush2.bf16.msra.mxu0 0
      %2645 = vmatprep.subr.bf16.mxu0 0
      %2646 = vmatpush2.bf16.msra.mxu0 0
      %2647 = vmatprep.subr.bf16.mxu0 0
      %2648 = vmatpush2.bf16.msra.mxu0 0
      %2649 = vmatprep.subr.bf16.mxu0 0
      %2650 = vmatpush2.bf16.msra.mxu0 0
      %2651 = vmatprep.subr.bf16.mxu0 0
      %2652 = vmatpush2.bf16.msra.mxu0 0
      %2653 = vmatprep.subr.bf16.mxu0 0
      %2654 = vmatpush2.bf16.msra.mxu0 0
      %2655 = vmatprep.mubr.bf16.mxu0 0
      %2656 = vmatmul.mubr.bf16.gmra.mxu0 %v2571
      %v2657 = vpop.f32.mrf.mxu0
      %v2658 = vadd.f32 %v2482, %v2657
      %v2659 = vpop.f32.mrf.mxu0
      %v2660 = vpop.f32.mrf.mxu0
      %v2661 = vpop.f32.mrf.mxu0
      %2662 = vdwg.mxu0
      %v2663 = vld [vmem:[%s12] sm:$0xff]
      %2665 = vset.pattern.permute.xlu0 0
      %2666 = vperm.xlu0 %2665, %v2663
      %v2667 = vpop.permute.xlu0 %2666
      %v2669 = vadd.f32 %v2617, %v2667
      %v2670 = vadd.f32 %v2619, %v2667
      %v2671 = vadd.f32 %v2658, %v2667
      %v2672 = vmax.f32 %v2669, 0.0
      %v2673 = vmax.f32 %v2670, 0.0
      %v2674 = vmax.f32 %v2671, 0.0
      %v2675 = vmul.f32 %v2672, %v976
      %v2676 = vmul.f32 %v2673, %v980
      %v2677 = vmul.f32 %v2674, %v984
      %v2678 = vpack.c.bf16 %v2675, %v2675
      %v2679 = vpack.c.bf16 %v2676, %v2676
      %v2680 = vpack.c.bf16 %v2677, %v2677
      %v2684 = vunpack.c.l.b16 %v2678
      %v2685 = vunpack.c.l.b16 %v2679
      %v2686 = vunpack.c.l.b16 %v2680
      %v2687 = vpack.c.b16 %v2684, %v998
      %v2688 = vpack.c.b16 %v2686, %v2685
      %2691 = vst [vmem:[#allocation6] sm:$0xff] %v2687
      %2692 = vst [vmem:[#allocation6 + $0x8] sm:$0xff] %v2688
      %2693 = vst [vmem:[#allocation6 + $0x10] sm:$0xf] %v1004
      %v2694 = vld [vmem:[%s8] sm:$0x3]
      %v2695 = vld [vmem:[#allocation6] sm:$0xff]
      %v2696 = vld [vmem:[#allocation6 + $0x8] sm:$0xff]
      %v2697 = vld [vmem:[#allocation6 + $0x4] sm:$0xff]
      %v2698 = vld [vmem:[#allocation6 + $0xc] sm:$0xf]
      %v2699 = vld [vmem:[#allocation6 + $0x4] sm:$0xff]
      %v2700 = vld [vmem:[#allocation6 + $0xc] sm:$0xff]
      %v2703 = vunpack.c.l.b16 %v2695
      %v2704 = vunpack.c.h.b16 %v2695
      %v2705 = vunpack.c.l.b16 %v2696
      %v2706 = vunpack.c.h.b16 %v2696
      %v2707 = vpack.c.b16 %v2703, %v2703
      %v2708 = vpack.c.b16 %v2704, %v2704
      %v2709 = vpack.c.b16 %v2705, %v2705
      %v2710 = vpack.c.b16 %v2706, %v2706
      %2711 = vrot.lane.b32.xlu0 %v2707, 127
      %v2712 = vpop.permute.xlu0 %2711
      %2713 = vrot.lane.b32.xlu0 %v2708, 127
      %v2714 = vpop.permute.xlu0 %2713
      %2715 = vrot.lane.b32.xlu0 %v2709, 127
      %v2716 = vpop.permute.xlu0 %2715
      %2717 = vrot.lane.b32.xlu0 %v2710, 127
      %v2718 = vpop.permute.xlu0 %2717
      %v2719 = vsel %vm633, %v2712, %v2714
      %v2720 = vsel %vm633, %v2714, %v2716
      %v2721 = vsel %vm633, %v2716, %v2718
      %2722 = vrot.lane.b32.xlu0 %v2707, 126
      %v2723 = vpop.permute.xlu0 %2722
      %2724 = vrot.lane.b32.xlu0 %v2708, 126
      %v2725 = vpop.permute.xlu0 %2724
      %2726 = vrot.lane.b32.xlu0 %v2709, 126
      %v2727 = vpop.permute.xlu0 %2726
      %2728 = vrot.lane.b32.xlu0 %v2710, 126
      %v2729 = vpop.permute.xlu0 %2728
      %v2730 = vsel %vm645, %v2723, %v2725
      %v2731 = vsel %vm645, %v2725, %v2727
      %v2732 = vsel %vm645, %v2727, %v2729
      %2733 = vrot.lane.b32.xlu0 %v2707, 110
      %v2734 = vpop.permute.xlu0 %2733
      %2735 = vrot.lane.b32.xlu0 %v2708, 110
      %v2736 = vpop.permute.xlu0 %2735
      %2737 = vrot.lane.b32.xlu0 %v2709, 110
      %v2738 = vpop.permute.xlu0 %2737
      %2739 = vrot.lane.b32.xlu0 %v2710, 110
      %v2740 = vpop.permute.xlu0 %2739
      %v2741 = vsel %vm657, %v2734, %v2736
      %v2742 = vsel %vm657, %v2736, %v2738
      %v2743 = vsel %vm657, %v2738, %v2740
      %v2746 = vunpack.c.l.b16 %v2697
      %v2747 = vunpack.c.h.b16 %v2697
      %v2748 = vunpack.c.l.b16 %v2698
      %v2749 = vpack.c.b16 %v2746, %v2746
      %v2750 = vpack.c.b16 %v2747, %v2747
      %v2751 = vpack.c.b16 %v2748, %v2748
      %2752 = vrot.lane.b32.xlu0 %v2749, 109
      %v2753 = vpop.permute.xlu0 %2752
      %2754 = vrot.lane.b32.xlu0 %v2750, 109
      %v2755 = vpop.permute.xlu0 %2754
      %2756 = vrot.lane.b32.xlu0 %v2751, 109
      %v2757 = vpop.permute.xlu0 %2756
      %v2758 = vsel %vm675, %v2753, %v2755
      %v2759 = vsel %vm675, %v2755, %v2757
      %v2762 = vunpack.c.l.b16 %v2699
      %v2763 = vunpack.c.h.b16 %v2699
      %v2764 = vunpack.c.l.b16 %v2700
      %v2765 = vunpack.c.h.b16 %v2700
      %v2766 = vpack.c.b16 %v2762, %v2762
      %v2767 = vpack.c.b16 %v2763, %v2763
      %v2768 = vpack.c.b16 %v2764, %v2764
      %v2769 = vpack.c.b16 %v2765, %v2765
      %2770 = vrot.lane.b32.xlu0 %v2766, 108
      %v2771 = vpop.permute.xlu0 %2770
      %2772 = vrot.lane.b32.xlu0 %v2767, 108
      %v2773 = vpop.permute.xlu0 %2772
      %2774 = vrot.lane.b32.xlu0 %v2768, 108
      %v2775 = vpop.permute.xlu0 %2774
      %2776 = vrot.lane.b32.xlu0 %v2769, 108
      %v2777 = vpop.permute.xlu0 %2776
      %v2778 = vsel %vm696, %v2771, %v2773
      %v2779 = vsel %vm696, %v2773, %v2775
      %v2780 = vsel %vm696, %v2775, %v2777
      %2781 = vrot.lane.b32.xlu0 %v2766, 92
      %v2782 = vpop.permute.xlu0 %2781
      %2783 = vrot.lane.b32.xlu0 %v2767, 92
      %v2784 = vpop.permute.xlu0 %2783
      %2785 = vrot.lane.b32.xlu0 %v2768, 92
      %v2786 = vpop.permute.xlu0 %2785
      %2787 = vrot.lane.b32.xlu0 %v2769, 92
      %v2788 = vpop.permute.xlu0 %2787
      %v2789 = vsel %vm708, %v2782, %v2784
      %v2790 = vsel %vm708, %v2784, %v2786
      %v2791 = vsel %vm708, %v2786, %v2788
      %2792 = vrot.lane.b32.xlu0 %v2766, 91
      %v2793 = vpop.permute.xlu0 %2792
      %2794 = vrot.lane.b32.xlu0 %v2767, 91
      %v2795 = vpop.permute.xlu0 %2794
      %2796 = vrot.lane.b32.xlu0 %v2768, 91
      %v2797 = vpop.permute.xlu0 %2796
      %2798 = vrot.lane.b32.xlu0 %v2769, 91
      %v2799 = vpop.permute.xlu0 %2798
      %v2800 = vsel %vm720, %v2793, %v2795
      %v2801 = vsel %vm720, %v2795, %v2797
      %v2802 = vsel %vm720, %v2797, %v2799
      %2803 = vrot.lane.b32.xlu0 %v2766, 90
      %v2804 = vpop.permute.xlu0 %2803
      %2805 = vrot.lane.b32.xlu0 %v2767, 90
      %v2806 = vpop.permute.xlu0 %2805
      %2807 = vrot.lane.b32.xlu0 %v2768, 90
      %v2808 = vpop.permute.xlu0 %2807
      %2809 = vrot.lane.b32.xlu0 %v2769, 90
      %v2810 = vpop.permute.xlu0 %2809
      %v2811 = vsel %vm732, %v2804, %v2806
      %v2812 = vsel %vm732, %v2806, %v2808
      %v2813 = vsel %vm732, %v2808, %v2810
      %v2816 = vsel %vm736, %v2707, %v2719
      %v2819 = vsel %vm736, %v2708, %v2720
      %v2822 = vsel %vm736, %v2709, %v2721
      %v2825 = vsel %vm736, %v2710, %v2718
      %v2828 = vsel %vm736, %v2730, %v2741
      %v2831 = vsel %vm736, %v2731, %v2742
      %v2834 = vsel %vm736, %v2732, %v2743
      %v2837 = vsel %vm736, %v2729, %v2740
      %v2840 = vsel %vm736, %v2753, %v2771
      %v2843 = vsel %vm736, %v2758, %v2778
      %v2846 = vsel %vm736, %v2759, %v2779
      %v2849 = vsel %vm736, %v2757, %v2780
      %v2852 = vsel %vm736, %v2782, %v2793
      %v2855 = vsel %vm736, %v2789, %v2800
      %v2858 = vsel %vm736, %v2790, %v2801
      %v2861 = vsel %vm736, %v2791, %v2802
      %v2862 = vld [vmem:[%s13] sm:$0x7]
      %2864 = vset.pattern.permute.xlu0 0
      %2865 = vperm.xlu0 %2864, %v2862
      %v2866 = vpop.permute.xlu0 %2865
      %2884 = vrot.lane.b32.xlu0 %v2816, 19
      %v2885 = vpop.permute.xlu0 %2884
      %2886 = vrot.lane.b32.xlu0 %v2819, 19
      %v2887 = vpop.permute.xlu0 %2886
      %2888 = vrot.lane.b32.xlu0 %v2822, 19
      %v2889 = vpop.permute.xlu0 %2888
      %2890 = vrot.lane.b32.xlu0 %v2825, 19
      %v2891 = vpop.permute.xlu0 %2890
      %2892 = vrot.lane.b32.xlu0 %v2828, 19
      %v2893 = vpop.permute.xlu0 %2892
      %2894 = vrot.lane.b32.xlu0 %v2831, 19
      %v2895 = vpop.permute.xlu0 %2894
      %2896 = vrot.lane.b32.xlu0 %v2834, 19
      %v2897 = vpop.permute.xlu0 %2896
      %2898 = vrot.lane.b32.xlu0 %v2837, 19
      %v2899 = vpop.permute.xlu0 %2898
      %2900 = vrot.lane.b32.xlu0 %v2840, 19
      %v2901 = vpop.permute.xlu0 %2900
      %2902 = vrot.lane.b32.xlu0 %v2843, 19
      %v2903 = vpop.permute.xlu0 %2902
      %2904 = vrot.lane.b32.xlu0 %v2846, 19
      %v2905 = vpop.permute.xlu0 %2904
      %2906 = vrot.lane.b32.xlu0 %v2849, 19
      %v2907 = vpop.permute.xlu0 %2906
      %2908 = vrot.lane.b32.xlu0 %v2852, 19
      %v2909 = vpop.permute.xlu0 %2908
      %2910 = vrot.lane.b32.xlu0 %v2855, 19
      %v2911 = vpop.permute.xlu0 %2910
      %2912 = vrot.lane.b32.xlu0 %v2858, 19
      %v2913 = vpop.permute.xlu0 %2912
      %2914 = vrot.lane.b32.xlu0 %v2861, 19
      %v2915 = vpop.permute.xlu0 %2914
      %2916 = vrot.lane.b32.xlu0 %v2804, 19
      %v2917 = vpop.permute.xlu0 %2916
      %2918 = vrot.lane.b32.xlu0 %v2811, 19
      %v2919 = vpop.permute.xlu0 %2918
      %2920 = vrot.lane.b32.xlu0 %v2812, 19
      %v2921 = vpop.permute.xlu0 %2920
      %2922 = vrot.lane.b32.xlu0 %v2813, 19
      %v2923 = vpop.permute.xlu0 %2922
      %v2924 = vsel %vm847, %v2885, %v2887
      %v2925 = vsel %vm847, %v2887, %v2889
      %v2926 = vsel %vm847, %v2889, %v2891
      %v2927 = vsel %vm847, %v2893, %v2895
      %v2928 = vsel %vm847, %v2895, %v2897
      %v2929 = vsel %vm847, %v2897, %v2899
      %v2930 = vsel %vm847, %v2901, %v2903
      %v2931 = vsel %vm847, %v2903, %v2905
      %v2932 = vsel %vm847, %v2905, %v2907
      %v2933 = vsel %vm847, %v2909, %v2911
      %v2934 = vsel %vm847, %v2911, %v2913
      %v2935 = vsel %vm847, %v2913, %v2915
      %v2936 = vsel %vm847, %v2917, %v2919
      %v2937 = vsel %vm847, %v2919, %v2921
      %v2938 = vsel %vm847, %v2921, %v2923
      %v2952 = vsel %vm875, %v2694, 0
      %v2955 = vsel %vm736, %v2936, 0
      %v2958 = vsel %vm736, %v2937, 0
      %v2961 = vsel %vm736, %v2938, 0
      %2963 = vmatprep.subr.bf16.mxu0 0
      %2964 = vmatpush1.bf16.msra.mxu0 0
      %2965 = vmatprep.subr.bf16.mxu0 0
      %2966 = vmatpush1.bf16.msra.mxu0 0
      %2967 = vmatprep.subr.bf16.mxu0 0
      %2968 = vmatpush1.bf16.msra.mxu0 0
      %2969 = vmatprep.subr.bf16.mxu0 %v2958
      %2970 = vmatpush1.bf16.msra.mxu0 %v2955
      %2971 = vmatprep.subr.bf16.mxu0 %v2934
      %2972 = vmatpush1.bf16.msra.mxu0 %v2933
      %2973 = vmatprep.subr.bf16.mxu0 %v2931
      %2974 = vmatpush1.bf16.msra.mxu0 %v2930
      %2975 = vmatprep.subr.bf16.mxu0 %v2928
      %2976 = vmatpush1.bf16.msra.mxu0 %v2927
      %2977 = vmatprep.subr.bf16.mxu0 %v2925
      %2978 = vmatpush1.bf16.msra.mxu0 %v2924
      %2979 = vmatprep.subr.bf16.mxu0 0
      %2980 = vmatpush2.bf16.msra.mxu0 0
      %2981 = vmatprep.subr.bf16.mxu0 0
      %2982 = vmatpush2.bf16.msra.mxu0 0
      %2983 = vmatprep.subr.bf16.mxu0 0
      %2984 = vmatpush2.bf16.msra.mxu0 0
      %2985 = vmatprep.subr.bf16.mxu0 0
      %2986 = vmatpush2.bf16.msra.mxu0 0
      %2987 = vmatprep.subr.bf16.mxu0 0
      %2988 = vmatpush2.bf16.msra.mxu0 0
      %2989 = vmatprep.subr.bf16.mxu0 0
      %2990 = vmatpush2.bf16.msra.mxu0 0
      %2991 = vmatprep.subr.bf16.mxu0 0
      %2992 = vmatpush2.bf16.msra.mxu0 0
      %2993 = vmatprep.subr.bf16.mxu0 0
      %2994 = vmatpush2.bf16.msra.mxu0 0
      %2995 = vmatprep.mubr.bf16.mxu0 0
      %2996 = vmatmul.mubr.bf16.gmra.mxu0 %v2952
      %v2997 = vpop.f32.mrf.mxu0
      %v2998 = vadd.f32 %v2866, %v2997
      %v2999 = vpop.f32.mrf.mxu0
      %v3000 = vadd.f32 %v2866, %v2999
      %v3001 = vpop.f32.mrf.mxu0
      %v3002 = vpop.f32.mrf.mxu0
      %3003 = vdwg.mxu0
      %3004 = vmatprep.subr.bf16.mxu0 0
      %3005 = vmatpush1.bf16.msra.mxu0 0
      %3006 = vmatprep.subr.bf16.mxu0 0
      %3007 = vmatpush1.bf16.msra.mxu0 0
      %3008 = vmatprep.subr.bf16.mxu0 0
      %3009 = vmatpush1.bf16.msra.mxu0 0
      %3010 = vmatprep.subr.bf16.mxu0 0
      %3011 = vmatpush1.bf16.msra.mxu0 %v2961
      %3012 = vmatprep.subr.bf16.mxu0 0
      %3013 = vmatpush1.bf16.msra.mxu0 %v2935
      %3014 = vmatprep.subr.bf16.mxu0 0
      %3015 = vmatpush1.bf16.msra.mxu0 %v2932
      %3016 = vmatprep.subr.bf16.mxu0 0
      %3017 = vmatpush1.bf16.msra.mxu0 %v2929
      %3018 = vmatprep.subr.bf16.mxu0 0
      %3019 = vmatpush1.bf16.msra.mxu0 %v2926
      %3020 = vmatprep.subr.bf16.mxu0 0
      %3021 = vmatpush2.bf16.msra.mxu0 0
      %3022 = vmatprep.subr.bf16.mxu0 0
      %3023 = vmatpush2.bf16.msra.mxu0 0
      %3024 = vmatprep.subr.bf16.mxu0 0
      %3025 = vmatpush2.bf16.msra.mxu0 0
      %3026 = vmatprep.subr.bf16.mxu0 0
      %3027 = vmatpush2.bf16.msra.mxu0 0
      %3028 = vmatprep.subr.bf16.mxu0 0
      %3029 = vmatpush2.bf16.msra.mxu0 0
      %3030 = vmatprep.subr.bf16.mxu0 0
      %3031 = vmatpush2.bf16.msra.mxu0 0
      %3032 = vmatprep.subr.bf16.mxu0 0
      %3033 = vmatpush2.bf16.msra.mxu0 0
      %3034 = vmatprep.subr.bf16.mxu0 0
      %3035 = vmatpush2.bf16.msra.mxu0 0
      %3036 = vmatprep.mubr.bf16.mxu0 0
      %3037 = vmatmul.mubr.bf16.gmra.mxu0 %v2952
      %v3038 = vpop.f32.mrf.mxu0
      %v3039 = vadd.f32 %v2866, %v3038
      %v3040 = vpop.f32.mrf.mxu0
      %v3041 = vpop.f32.mrf.mxu0
      %v3042 = vpop.f32.mrf.mxu0
      %3043 = vdwg.mxu0
      %v3044 = vtanh.pop %v2998
      %v3045 = vtanh.pop %v3000
      %v3046 = vtanh.pop %v3039
      %v3047 = vmul.f32 %v3044, %v976
      %v3048 = vmul.f32 %v3045, %v980
      %v3049 = vmul.f32 %v3046, %v984
      %v3052 = vcombine.low %v3047, %v3048
      %3054 = vst [vmem:[%s586] sm:$0x77] %v3052
      %3055 = vst [vmem:[%s586 + $0x8] sm:$0x7] %v3049
      %v3056 = vld [vmem:[%s581] sm:$0x77]
      %v3057 = vld [vmem:[%s581 + $0x8] sm:$0x77]
      %v3058 = vld [vmem:[%s581 + $0x10] sm:$0x7]
      %vm3059 = vcmask 1042432
      %v3060 = vsel %vm3059, %v3047, 0.0
      %v3061 = vrot.slane %v3060, 4
      %v3062 = vadd.f32 %v3060, %v3061
      %v3063 = vrot.slane %v3062, 2
      %v3064 = vadd.f32 %v3062, %v3063
      %v3065 = vrot.slane %v3064, 1
      %v3066 = vadd.f32 %v3064, %v3065
      %v3067 = vsel %vm3059, %v3048, 0.0
      %v3068 = vrot.slane %v3067, 4
      %v3069 = vadd.f32 %v3067, %v3068
      %v3070 = vrot.slane %v3069, 2
      %v3071 = vadd.f32 %v3069, %v3070
      %v3072 = vrot.slane %v3071, 1
      %v3073 = vadd.f32 %v3071, %v3072
      %v3074 = vsel %vm3059, %v3049, 0.0
      %v3075 = vrot.slane %v3074, 4
      %v3076 = vadd.f32 %v3074, %v3075
      %v3077 = vrot.slane %v3076, 2
      %v3078 = vadd.f32 %v3076, %v3077
      %v3079 = vrot.slane %v3078, 1
      %v3080 = vadd.f32 %v3078, %v3079
      %v3081 = vmul.f32 %v3066, 0.33333334
      %v3082 = vmul.f32 %v3073, 0.33333334
      %v3083 = vmul.f32 %v3080, 0.33333334
      %v3086 = vcombine.high %v3056, %v3056
      %v3087 = vcombine.high %v3057, %v3057
      %v3090 = vsel %vm3059, %v3056, 0.0
      %v3091 = vrot.slane %v3090, 4
      %v3092 = vadd.f32 %v3090, %v3091
      %v3093 = vrot.slane %v3092, 2
      %v3094 = vadd.f32 %v3092, %v3093
      %v3095 = vrot.slane %v3094, 1
      %v3096 = vadd.f32 %v3094, %v3095
      %v3097 = vsel %vm3059, %v3086, 0.0
      %v3098 = vrot.slane %v3097, 4
      %v3099 = vadd.f32 %v3097, %v3098
      %v3100 = vrot.slane %v3099, 2
      %v3101 = vadd.f32 %v3099, %v3100
      %v3102 = vrot.slane %v3101, 1
      %v3103 = vadd.f32 %v3101, %v3102
      %v3104 = vsel %vm3059, %v3057, 0.0
      %v3105 = vrot.slane %v3104, 4
      %v3106 = vadd.f32 %v3104, %v3105
      %v3107 = vrot.slane %v3106, 2
      %v3108 = vadd.f32 %v3106, %v3107
      %v3109 = vrot.slane %v3108, 1
      %v3110 = vadd.f32 %v3108, %v3109
      %v3111 = vsel %vm3059, %v3087, 0.0
      %v3112 = vrot.slane %v3111, 4
      %v3113 = vadd.f32 %v3111, %v3112
      %v3114 = vrot.slane %v3113, 2
      %v3115 = vadd.f32 %v3113, %v3114
      %v3116 = vrot.slane %v3115, 1
      %v3117 = vadd.f32 %v3115, %v3116
      %v3118 = vsel %vm3059, %v3058, 0.0
      %v3119 = vrot.slane %v3118, 4
      %v3120 = vadd.f32 %v3118, %v3119
      %v3121 = vrot.slane %v3120, 2
      %v3122 = vadd.f32 %v3120, %v3121
      %v3123 = vrot.slane %v3122, 1
      %v3124 = vadd.f32 %v3122, %v3123
      %v3125 = vmul.f32 %v3096, 0.33333334
      %v3126 = vmul.f32 %v3103, 0.33333334
      %v3127 = vmul.f32 %v3110, 0.33333334
      %v3128 = vmul.f32 %v3117, 0.33333334
      %v3129 = vmul.f32 %v3124, 0.33333334
      %v3130 = vmul.f32 %v3081, -1.0
      %v3131 = vmul.f32 %v3082, -1.0
      %v3132 = vmul.f32 %v3083, -1.0
      %v3133 = vmul.f32 %v3081, -2.0
      %v3134 = vmul.f32 %v3082, -2.0
      %v3135 = vmul.f32 %v3083, -2.0
      %3140 = vrot.lane.b32.xlu0 -0.0, 127
      %v3141 = vpop.permute.xlu0 %3140
      %3142 = vrot.lane.b32.xlu0 %v3133, 127
      %v3143 = vpop.permute.xlu0 %3142
      %3144 = vrot.lane.b32.xlu0 %v3134, 127
      %v3145 = vpop.permute.xlu0 %3144
      %3146 = vrot.lane.b32.xlu0 %v3135, 127
      %v3147 = vpop.permute.xlu0 %3146
      %vm3148 = vcmask 1039360
      %v3149 = vsel %vm3148, %v3141, %v3143
      %v3150 = vsel %vm3148, %v3143, %v3145
      %v3151 = vsel %vm3148, %v3145, %v3147
      %v3156 = vadd.f32 %v3130, %v3150
      %v3157 = vadd.f32 %v3131, %v3151
      %v3158 = vadd.f32 %v3132, %v3147
      %3163 = vrot.lane.b32.xlu0 0.0, 126
      %v3164 = vpop.permute.xlu0 %3163
      %3165 = vrot.lane.b32.xlu0 %v3081, 126
      %v3166 = vpop.permute.xlu0 %3165
      %3167 = vrot.lane.b32.xlu0 %v3082, 126
      %v3168 = vpop.permute.xlu0 %3167
      %3169 = vrot.lane.b32.xlu0 %v3083, 126
      %v3170 = vpop.permute.xlu0 %3169
      %vm3171 = vcmask 1031168
      %v3172 = vsel %vm3171, %v3164, %v3166
      %v3173 = vsel %vm3171, %v3166, %v3168
      %v3174 = vsel %vm3171, %v3168, %v3170
      %v3179 = vadd.f32 %v3130, %v3173
      %v3180 = vadd.f32 %v3131, %v3174
      %v3181 = vadd.f32 %v3132, %v3170
      %3185 = vrot.lane.b32.xlu0 -0.0, 126
      %v3186 = vpop.permute.xlu0 %3185
      %3187 = vrot.lane.b32.xlu0 %v3130, 126
      %v3188 = vpop.permute.xlu0 %3187
      %3189 = vrot.lane.b32.xlu0 %v3131, 126
      %v3190 = vpop.permute.xlu0 %3189
      %3191 = vrot.lane.b32.xlu0 %v3132, 126
      %v3192 = vpop.permute.xlu0 %3191
      %v3193 = vsel %vm3171, %v3186, %v3188
      %v3194 = vsel %vm3171, %v3188, %v3190
      %v3195 = vsel %vm3171, %v3190, %v3192
      %v3200 = vadd.f32 %v3149, %v3193
      %v3201 = vadd.f32 %v3156, %v3194
      %v3202 = vadd.f32 %v3157, %v3195
      %v3203 = vadd.f32 %v3158, %v3192
      %3204 = vrot.lane.b32.xlu0 -0.0, 110
      %v3205 = vpop.permute.xlu0 %3204
      %3206 = vrot.lane.b32.xlu0 %v3133, 110
      %v3207 = vpop.permute.xlu0 %3206
      %3208 = vrot.lane.b32.xlu0 %v3134, 110
      %v3209 = vpop.permute.xlu0 %3208
      %3210 = vrot.lane.b32.xlu0 %v3135, 110
      %v3211 = vpop.permute.xlu0 %3210
      %vm3212 = vcmask 900096
      %v3213 = vsel %vm3212, %v3205, %v3207
      %v3214 = vsel %vm3212, %v3207, %v3209
      %v3215 = vsel %vm3212, %v3209, %v3211
      %v3220 = vadd.f32 %v3172, %v3213
      %v3221 = vadd.f32 %v3179, %v3214
      %v3222 = vadd.f32 %v3180, %v3215
      %v3223 = vadd.f32 %v3181, %v3211
      %3224 = vrot.lane.b32.xlu0 0.0, 111
      %v3225 = vpop.permute.xlu0 %3224
      %3226 = vrot.lane.b32.xlu0 %v3081, 111
      %v3227 = vpop.permute.xlu0 %3226
      %3228 = vrot.lane.b32.xlu0 %v3082, 111
      %v3229 = vpop.permute.xlu0 %3228
      %3230 = vrot.lane.b32.xlu0 %v3083, 111
      %v3231 = vpop.permute.xlu0 %3230
      %vm3232 = vcmask 908288
      %v3233 = vsel %vm3232, %v3225, %v3227
      %v3234 = vsel %vm3232, %v3227, %v3229
      %v3235 = vsel %vm3232, %v3229, %v3231
      %v3240 = vadd.f32 %v3233, 0.0
      %v3241 = vadd.f32 %v3081, %v3234
      %v3242 = vadd.f32 %v3082, %v3235
      %v3243 = vadd.f32 %v3083, %v3231
      %v3244 = vmul.f32 %v3081, -4.0
      %v3245 = vmul.f32 %v3082, -4.0
      %v3246 = vmul.f32 %v3083, -4.0
      %3250 = vrot.lane.b32.xlu0 %v3244, 110
      %v3251 = vpop.permute.xlu0 %3250
      %3252 = vrot.lane.b32.xlu0 %v3245, 110
      %v3253 = vpop.permute.xlu0 %3252
      %3254 = vrot.lane.b32.xlu0 %v3246, 110
      %v3255 = vpop.permute.xlu0 %3254
      %v3256 = vsel %vm3212, %v3251, %v3253
      %v3257 = vsel %vm3212, %v3253, %v3255
      %v3262 = vadd.f32 %v3240, %v3251
      %v3263 = vadd.f32 %v3241, %v3256
      %v3264 = vadd.f32 %v3242, %v3257
      %v3265 = vadd.f32 %v3243, %v3255
      %v3266 = vmul.f32 %v3081, 2.0
      %v3267 = vmul.f32 %v3082, 2.0
      %v3268 = vmul.f32 %v3083, 2.0
      %3272 = vrot.lane.b32.xlu0 %v3266, 108
      %v3273 = vpop.permute.xlu0 %3272
      %3274 = vrot.lane.b32.xlu0 %v3267, 108
      %v3275 = vpop.permute.xlu0 %3274
      %3276 = vrot.lane.b32.xlu0 %v3268, 108
      %v3277 = vpop.permute.xlu0 %3276
      %3278 = vrot.lane.b32.xlu0 0.0, 108
      %v3279 = vpop.permute.xlu0 %3278
      %vm3280 = vcmask 883712
      %v3281 = vsel %vm3280, %v3273, %v3275
      %v3282 = vsel %vm3280, %v3275, %v3277
      %v3283 = vsel %vm3280, %v3277, %v3279
      %v3288 = vadd.f32 %v3220, %v3273
      %v3289 = vadd.f32 %v3221, %v3281
      %v3290 = vadd.f32 %v3222, %v3282
      %v3291 = vadd.f32 %v3223, %v3283
      %3292 = vrot.lane.b32.xlu0 %v3081, 109
      %v3293 = vpop.permute.xlu0 %3292
      %3294 = vrot.lane.b32.xlu0 %v3082, 109
      %v3295 = vpop.permute.xlu0 %3294
      %3296 = vrot.lane.b32.xlu0 %v3083, 109
      %v3297 = vpop.permute.xlu0 %3296
      %3298 = vrot.lane.b32.xlu0 0.0, 109
      %v3299 = vpop.permute.xlu0 %3298
      %vm3300 = vcmask 891904
      %v3301 = vsel %vm3300, %v3293, %v3295
      %v3302 = vsel %vm3300, %v3295, %v3297
      %v3303 = vsel %vm3300, %v3297, %v3299
      %v3308 = vadd.f32 %v3262, %v3293
      %v3309 = vadd.f32 %v3263, %v3301
      %v3310 = vadd.f32 %v3264, %v3302
      %v3311 = vadd.f32 %v3265, %v3303
      %3312 = vrot.lane.b32.xlu0 %v3130, 92
      %v3313 = vpop.permute.xlu0 %3312
      %3314 = vrot.lane.b32.xlu0 %v3131, 92
      %v3315 = vpop.permute.xlu0 %3314
      %3316 = vrot.lane.b32.xlu0 %v3132, 92
      %v3317 = vpop.permute.xlu0 %3316
      %3318 = vrot.lane.b32.xlu0 -0.0, 92
      %v3319 = vpop.permute.xlu0 %3318
      %vm3320 = vcmask 752640
      %v3321 = vsel %vm3320, %v3313, %v3315
      %v3322 = vsel %vm3320, %v3315, %v3317
      %v3323 = vsel %vm3320, %v3317, %v3319
      %v3328 = vadd.f32 %v3288, %v3313
      %v3329 = vadd.f32 %v3289, %v3321
      %v3330 = vadd.f32 %v3290, %v3322
      %v3331 = vadd.f32 %v3291, %v3323
      %3332 = vrot.lane.b32.xlu0 %v3081, 92
      %v3333 = vpop.permute.xlu0 %3332
      %3334 = vrot.lane.b32.xlu0 %v3082, 92
      %v3335 = vpop.permute.xlu0 %3334
      %3336 = vrot.lane.b32.xlu0 %v3083, 92
      %v3337 = vpop.permute.xlu0 %3336
      %3338 = vrot.lane.b32.xlu0 0.0, 92
      %v3339 = vpop.permute.xlu0 %3338
      %v3340 = vsel %vm3320, %v3333, %v3335
      %v3341 = vsel %vm3320, %v3335, %v3337
      %v3342 = vsel %vm3320, %v3337, %v3339
      %v3347 = vadd.f32 %v3200, %v3333
      %v3348 = vadd.f32 %v3201, %v3340
      %v3349 = vadd.f32 %v3202, %v3341
      %v3350 = vadd.f32 %v3203, %v3342
      %3351 = vrot.lane.b32.xlu0 %v3266, 91
      %v3352 = vpop.permute.xlu0 %3351
      %3353 = vrot.lane.b32.xlu0 %v3267, 91
      %v3354 = vpop.permute.xlu0 %3353
      %3355 = vrot.lane.b32.xlu0 %v3268, 91
      %v3356 = vpop.permute.xlu0 %3355
      %3357 = vrot.lane.b32.xlu0 0.0, 91
      %v3358 = vpop.permute.xlu0 %3357
      %vm3359 = vcmask 744448
      %v3360 = vsel %vm3359, %v3352, %v3354
      %v3361 = vsel %vm3359, %v3354, %v3356
      %v3362 = vsel %vm3359, %v3356, %v3358
      %v3367 = vadd.f32 %v3347, %v3352
      %v3368 = vadd.f32 %v3348, %v3360
      %v3369 = vadd.f32 %v3349, %v3361
      %v3370 = vadd.f32 %v3350, %v3362
      %v3371 = vadd.f32 %v3308, %v3333
      %v3372 = vadd.f32 %v3309, %v3340
      %v3373 = vadd.f32 %v3310, %v3341
      %v3374 = vadd.f32 %v3311, %v3342
      %3375 = vrot.lane.b32.xlu0 %v3081, 90
      %v3376 = vpop.permute.xlu0 %3375
      %3377 = vrot.lane.b32.xlu0 %v3082, 90
      %v3378 = vpop.permute.xlu0 %3377
      %3379 = vrot.lane.b32.xlu0 %v3083, 90
      %v3380 = vpop.permute.xlu0 %3379
      %3381 = vrot.lane.b32.xlu0 0.0, 90
      %v3382 = vpop.permute.xlu0 %3381
      %vm3383 = vcmask 736256
      %v3384 = vsel %vm3383, %v3376, %v3378
      %v3385 = vsel %vm3383, %v3378, %v3380
      %v3386 = vsel %vm3383, %v3380, %v3382
      %v3391 = vadd.f32 %v3328, %v3376
      %v3392 = vadd.f32 %v3329, %v3384
      %v3393 = vadd.f32 %v3330, %v3385
      %v3394 = vadd.f32 %v3331, %v3386
      %v3395 = vadd.f32 %v3367, %v3376
      %v3396 = vadd.f32 %v3368, %v3384
      %v3397 = vadd.f32 %v3369, %v3385
      %v3398 = vadd.f32 %v3370, %v3386
      %v3399 = vand.u32 2147483647, %v3391
      %v3400 = vand.u32 2147483647, %v3392
      %v3401 = vand.u32 2147483647, %v3393
      %v3402 = vand.u32 2147483647, %v3394
      %v3403 = vand.u32 2147483647, %v3395
      %v3404 = vand.u32 2147483647, %v3396
      %v3405 = vand.u32 2147483647, %v3397
      %v3406 = vand.u32 2147483647, %v3398
      %v3407 = vand.u32 2147483647, %v3371
      %v3408 = vand.u32 2147483647, %v3372
      %v3409 = vand.u32 2147483647, %v3373
      %v3410 = vand.u32 2147483647, %v3374
      %v3411 = vmul.f32 %v3125, -1.0
      %v3412 = vmul.f32 %v3126, -1.0
      %v3413 = vmul.f32 %v3127, -1.0
      %v3414 = vmul.f32 %v3128, -1.0
      %v3415 = vmul.f32 %v3125, -2.0
      %v3416 = vmul.f32 %v3126, -2.0
      %v3417 = vmul.f32 %v3127, -2.0
      %v3418 = vmul.f32 %v3128, -2.0
      %3423 = vrot.lane.b32.xlu0 %v3415, 127
      %v3424 = vpop.permute.xlu0 %3423
      %3425 = vrot.lane.b32.xlu0 %v3416, 127
      %v3426 = vpop.permute.xlu0 %3425
      %3427 = vrot.lane.b32.xlu0 %v3417, 127
      %v3428 = vpop.permute.xlu0 %3427
      %3429 = vrot.lane.b32.xlu0 %v3418, 127
      %v3430 = vpop.permute.xlu0 %3429
      %v3431 = vsel %vm3148, %v3424, %v3426
      %v3432 = vsel %vm3148, %v3426, %v3428
      %v3433 = vsel %vm3148, %v3428, %v3430
      %v3438 = vadd.f32 %v3411, %v3431
      %v3439 = vadd.f32 %v3412, %v3432
      %v3440 = vadd.f32 %v3413, %v3433
      %v3441 = vadd.f32 %v3414, %v3430
      %3446 = vrot.lane.b32.xlu0 %v3125, 126
      %v3447 = vpop.permute.xlu0 %3446
      %3448 = vrot.lane.b32.xlu0 %v3126, 126
      %v3449 = vpop.permute.xlu0 %3448
      %3450 = vrot.lane.b32.xlu0 %v3127, 126
      %v3451 = vpop.permute.xlu0 %3450
      %3452 = vrot.lane.b32.xlu0 %v3128, 126
      %v3453 = vpop.permute.xlu0 %3452
      %v3454 = vsel %vm3171, %v3447, %v3449
      %v3455 = vsel %vm3171, %v3449, %v3451
      %v3456 = vsel %vm3171, %v3451, %v3453
      %v3461 = vadd.f32 %v3411, %v3454
      %v3462 = vadd.f32 %v3412, %v3455
      %v3463 = vadd.f32 %v3413, %v3456
      %v3464 = vadd.f32 %v3414, %v3453
      %3469 = vrot.lane.b32.xlu0 %v3411, 126
      %v3470 = vpop.permute.xlu0 %3469
      %3471 = vrot.lane.b32.xlu0 %v3412, 126
      %v3472 = vpop.permute.xlu0 %3471
      %3473 = vrot.lane.b32.xlu0 %v3413, 126
      %v3474 = vpop.permute.xlu0 %3473
      %3475 = vrot.lane.b32.xlu0 %v3414, 126
      %v3476 = vpop.permute.xlu0 %3475
      %v3477 = vsel %vm3171, %v3470, %v3472
      %v3478 = vsel %vm3171, %v3472, %v3474
      %v3479 = vsel %vm3171, %v3474, %v3476
      %v3484 = vadd.f32 %v3438, %v3477
      %v3485 = vadd.f32 %v3439, %v3478
      %v3486 = vadd.f32 %v3440, %v3479
      %v3487 = vadd.f32 %v3441, %v3476
      %3488 = vrot.lane.b32.xlu0 %v3415, 110
      %v3489 = vpop.permute.xlu0 %3488
      %3490 = vrot.lane.b32.xlu0 %v3416, 110
      %v3491 = vpop.permute.xlu0 %3490
      %3492 = vrot.lane.b32.xlu0 %v3417, 110
      %v3493 = vpop.permute.xlu0 %3492
      %3494 = vrot.lane.b32.xlu0 %v3418, 110
      %v3495 = vpop.permute.xlu0 %3494
      %v3496 = vsel %vm3212, %v3489, %v3491
      %v3497 = vsel %vm3212, %v3491, %v3493
      %v3498 = vsel %vm3212, %v3493, %v3495
      %v3503 = vadd.f32 %v3461, %v3496
      %v3504 = vadd.f32 %v3462, %v3497
      %v3505 = vadd.f32 %v3463, %v3498
      %v3506 = vadd.f32 %v3464, %v3495
      %3507 = vrot.lane.b32.xlu0 %v3125, 111
      %v3508 = vpop.permute.xlu0 %3507
      %3509 = vrot.lane.b32.xlu0 %v3126, 111
      %v3510 = vpop.permute.xlu0 %3509
      %3511 = vrot.lane.b32.xlu0 %v3127, 111
      %v3512 = vpop.permute.xlu0 %3511
      %3513 = vrot.lane.b32.xlu0 %v3128, 111
      %v3514 = vpop.permute.xlu0 %3513
      %v3515 = vsel %vm3232, %v3508, %v3510
      %v3516 = vsel %vm3232, %v3510, %v3512
      %v3517 = vsel %vm3232, %v3512, %v3514
      %v3522 = vadd.f32 %v3125, %v3515
      %v3523 = vadd.f32 %v3126, %v3516
      %v3524 = vadd.f32 %v3127, %v3517
      %v3525 = vadd.f32 %v3128, %v3514
      %v3526 = vmul.f32 %v3126, -4.0
      %v3527 = vmul.f32 %v3127, -4.0
      %v3528 = vmul.f32 %v3128, -4.0
      %3532 = vrot.lane.b32.xlu0 %v3526, 110
      %v3533 = vpop.permute.xlu0 %3532
      %3534 = vrot.lane.b32.xlu0 %v3527, 110
      %v3535 = vpop.permute.xlu0 %3534
      %3536 = vrot.lane.b32.xlu0 %v3528, 110
      %v3537 = vpop.permute.xlu0 %3536
      %v3538 = vsel %vm3212, %v3533, %v3535
      %v3539 = vsel %vm3212, %v3535, %v3537
      %v3544 = vadd.f32 %v3522, %v3533
      %v3545 = vadd.f32 %v3523, %v3538
      %v3546 = vadd.f32 %v3524, %v3539
      %v3547 = vadd.f32 %v3525, %v3537
      %v3548 = vmul.f32 %v3126, 2.0
      %v3549 = vmul.f32 %v3127, 2.0
      %v3550 = vmul.f32 %v3128, 2.0
      %v3551 = vmul.f32 %v3129, 2.0
      %3556 = vrot.lane.b32.xlu0 %v3548, 108
      %v3557 = vpop.permute.xlu0 %3556
      %3558 = vrot.lane.b32.xlu0 %v3549, 108
      %v3559 = vpop.permute.xlu0 %3558
      %3560 = vrot.lane.b32.xlu0 %v3550, 108
      %v3561 = vpop.permute.xlu0 %3560
      %3562 = vrot.lane.b32.xlu0 %v3551, 108
      %v3563 = vpop.permute.xlu0 %3562
      %v3564 = vsel %vm3280, %v3557, %v3559
      %v3565 = vsel %vm3280, %v3559, %v3561
      %v3566 = vsel %vm3280, %v3561, %v3563
      %v3571 = vadd.f32 %v3503, %v3557
      %v3572 = vadd.f32 %v3504, %v3564
      %v3573 = vadd.f32 %v3505, %v3565
      %v3574 = vadd.f32 %v3506, %v3566
      %3576 = vrot.lane.b32.xlu0 %v3126, 109
      %v3577 = vpop.permute.xlu0 %3576
      %3578 = vrot.lane.b32.xlu0 %v3127, 109
      %v3579 = vpop.permute.xlu0 %3578
      %3580 = vrot.lane.b32.xlu0 %v3128, 109
      %v3581 = vpop.permute.xlu0 %3580
      %3582 = vrot.lane.b32.xlu0 %v3129, 109
      %v3583 = vpop.permute.xlu0 %3582
      %v3584 = vsel %vm3300, %v3577, %v3579
      %v3585 = vsel %vm3300, %v3579, %v3581
      %v3586 = vsel %vm3300, %v3581, %v3583
      %v3591 = vadd.f32 %v3544, %v3577
      %v3592 = vadd.f32 %v3545, %v3584
      %v3593 = vadd.f32 %v3546, %v3585
      %v3594 = vadd.f32 %v3547, %v3586
      %v3595 = vmul.f32 %v3129, -1.0
      %3597 = vrot.lane.b32.xlu0 %v3412, 92
      %v3598 = vpop.permute.xlu0 %3597
      %3599 = vrot.lane.b32.xlu0 %v3413, 92
      %v3600 = vpop.permute.xlu0 %3599
      %3601 = vrot.lane.b32.xlu0 %v3414, 92
      %v3602 = vpop.permute.xlu0 %3601
      %3603 = vrot.lane.b32.xlu0 %v3595, 92
      %v3604 = vpop.permute.xlu0 %3603
      %v3605 = vsel %vm3320, %v3598, %v3600
      %v3606 = vsel %vm3320, %v3600, %v3602
      %v3607 = vsel %vm3320, %v3602, %v3604
      %v3612 = vadd.f32 %v3571, %v3598
      %v3613 = vadd.f32 %v3572, %v3605
      %v3614 = vadd.f32 %v3573, %v3606
      %v3615 = vadd.f32 %v3574, %v3607
      %3616 = vrot.lane.b32.xlu0 %v3126, 92
      %v3617 = vpop.permute.xlu0 %3616
      %3618 = vrot.lane.b32.xlu0 %v3127, 92
      %v3619 = vpop.permute.xlu0 %3618
      %3620 = vrot.lane.b32.xlu0 %v3128, 92
      %v3621 = vpop.permute.xlu0 %3620
      %3622 = vrot.lane.b32.xlu0 %v3129, 92
      %v3623 = vpop.permute.xlu0 %3622
      %v3624 = vsel %vm3320, %v3617, %v3619
      %v3625 = vsel %vm3320, %v3619, %v3621
      %v3626 = vsel %vm3320, %v3621, %v3623
      %v3631 = vadd.f32 %v3484, %v3617
      %v3632 = vadd.f32 %v3485, %v3624
      %v3633 = vadd.f32 %v3486, %v3625
      %v3634 = vadd.f32 %v3487, %v3626
      %3635 = vrot.lane.b32.xlu0 %v3548, 91
      %v3636 = vpop.permute.xlu0 %3635
      %3637 = vrot.lane.b32.xlu0 %v3549, 91
      %v3638 = vpop.permute.xlu0 %3637
      %3639 = vrot.lane.b32.xlu0 %v3550, 91
      %v3640 = vpop.permute.xlu0 %3639
      %3641 = vrot.lane.b32.xlu0 %v3551, 91
      %v3642 = vpop.permute.xlu0 %3641
      %v3643 = vsel %vm3359, %v3636, %v3638
      %v3644 = vsel %vm3359, %v3638, %v3640
      %v3645 = vsel %vm3359, %v3640, %v3642
      %v3650 = vadd.f32 %v3631, %v3636
      %v3651 = vadd.f32 %v3632, %v3643
      %v3652 = vadd.f32 %v3633, %v3644
      %v3653 = vadd.f32 %v3634, %v3645
      %v3654 = vadd.f32 %v3591, %v3617
      %v3655 = vadd.f32 %v3592, %v3624
      %v3656 = vadd.f32 %v3593, %v3625
      %v3657 = vadd.f32 %v3594, %v3626
      %3658 = vrot.lane.b32.xlu0 %v3126, 90
      %v3659 = vpop.permute.xlu0 %3658
      %3660 = vrot.lane.b32.xlu0 %v3127, 90
      %v3661 = vpop.permute.xlu0 %3660
      %3662 = vrot.lane.b32.xlu0 %v3128, 90
      %v3663 = vpop.permute.xlu0 %3662
      %3664 = vrot.lane.b32.xlu0 %v3129, 90
      %v3665 = vpop.permute.xlu0 %3664
      %v3666 = vsel %vm3383, %v3659, %v3661
      %v3667 = vsel %vm3383, %v3661, %v3663
      %v3668 = vsel %vm3383, %v3663, %v3665
      %v3673 = vadd.f32 %v3612, %v3659
      %v3674 = vadd.f32 %v3613, %v3666
      %v3675 = vadd.f32 %v3614, %v3667
      %v3676 = vadd.f32 %v3615, %v3668
      %v3677 = vadd.f32 %v3650, %v3659
      %v3678 = vadd.f32 %v3651, %v3666
      %v3679 = vadd.f32 %v3652, %v3667
      %v3680 = vadd.f32 %v3653, %v3668
      %v3681 = vand.u32 2147483647, %v3673
      %v3682 = vand.u32 2147483647, %v3674
      %v3683 = vand.u32 2147483647, %v3675
      %v3684 = vand.u32 2147483647, %v3676
      %v3685 = vand.u32 2147483647, %v3677
      %v3686 = vand.u32 2147483647, %v3678
      %v3687 = vand.u32 2147483647, %v3679
      %v3688 = vand.u32 2147483647, %v3680
      %v3689 = vand.u32 2147483647, %v3654
      %v3690 = vand.u32 2147483647, %v3655
      %v3691 = vand.u32 2147483647, %v3656
      %v3692 = vand.u32 2147483647, %v3657
      %vm3693 = vcmp.gt.f32.partialorder %v3399, 0.1
      %vm3694 = vcmp.gt.f32.partialorder %v3400, 0.1
      %vm3695 = vcmp.gt.f32.partialorder %v3401, 0.1
      %vm3696 = vcmp.gt.f32.partialorder %v3402, 0.1
      %v3697 = vadd.f32 %v3399, 0.0001
      %v3698 = vadd.f32 %v3400, 0.0001
      %v3699 = vadd.f32 %v3401, 0.0001
      %v3700 = vadd.f32 %v3402, 0.0001
      %v3701 = vsel %vm3693, 0.99, %v3697
      %v3702 = vsel %vm3694, 0.99, %v3698
      %v3703 = vsel %vm3695, 0.99, %v3699
      %v3704 = vsel %vm3696, 0.99, %v3700
      %vm3705 = vcmp.gt.f32.partialorder %v3403, 0.1
      %vm3706 = vcmp.gt.f32.partialorder %v3404, 0.1
      %vm3707 = vcmp.gt.f32.partialorder %v3405, 0.1
      %vm3708 = vcmp.gt.f32.partialorder %v3406, 0.1
      %v3709 = vadd.f32 %v3403, 0.0001
      %v3710 = vadd.f32 %v3404, 0.0001
      %v3711 = vadd.f32 %v3405, 0.0001
      %v3712 = vadd.f32 %v3406, 0.0001
      %v3713 = vsel %vm3705, 0.99, %v3709
      %v3714 = vsel %vm3706, 0.99, %v3710
      %v3715 = vsel %vm3707, 0.99, %v3711
      %v3716 = vsel %vm3708, 0.99, %v3712
      %vm3717 = vcmp.gt.f32.partialorder %v3407, 0.1
      %vm3718 = vcmp.gt.f32.partialorder %v3408, 0.1
      %vm3719 = vcmp.gt.f32.partialorder %v3409, 0.1
      %vm3720 = vcmp.gt.f32.partialorder %v3410, 0.1
      %v3721 = vadd.f32 %v3407, 0.0001
      %v3722 = vadd.f32 %v3408, 0.0001
      %v3723 = vadd.f32 %v3409, 0.0001
      %v3724 = vadd.f32 %v3410, 0.0001
      %v3725 = vsel %vm3717, 0.99, %v3721
      %v3726 = vsel %vm3718, 0.99, %v3722
      %v3727 = vsel %vm3719, 0.99, %v3723
      %v3728 = vsel %vm3720, 0.99, %v3724
      %vm3729 = vcmp.gt.f32.partialorder %v3681, 0.1
      %vm3730 = vcmp.gt.f32.partialorder %v3682, 0.1
      %vm3731 = vcmp.gt.f32.partialorder %v3683, 0.1
      %vm3732 = vcmp.gt.f32.partialorder %v3684, 0.1
      %v3733 = vsel %vm3729, 1.0, 0.0
      %v3734 = vsel %vm3730, 1.0, 0.0
      %v3735 = vsel %vm3731, 1.0, 0.0
      %v3736 = vsel %vm3732, 1.0, 0.0
      %vm3737 = vcmp.gt.f32.partialorder %v3685, 0.1
      %vm3738 = vcmp.gt.f32.partialorder %v3686, 0.1
      %vm3739 = vcmp.gt.f32.partialorder %v3687, 0.1
      %vm3740 = vcmp.gt.f32.partialorder %v3688, 0.1
      %v3741 = vsel %vm3737, 1.0, 0.0
      %v3742 = vsel %vm3738, 1.0, 0.0
      %v3743 = vsel %vm3739, 1.0, 0.0
      %v3744 = vsel %vm3740, 1.0, 0.0
      %vm3745 = vcmp.gt.f32.partialorder %v3689, 0.1
      %vm3746 = vcmp.gt.f32.partialorder %v3690, 0.1
      %vm3747 = vcmp.gt.f32.partialorder %v3691, 0.1
      %vm3748 = vcmp.gt.f32.partialorder %v3692, 0.1
      %v3749 = vsel %vm3745, 1.0, 0.0
      %v3750 = vsel %vm3746, 1.0, 0.0
      %v3751 = vsel %vm3747, 1.0, 0.0
      %v3752 = vsel %vm3748, 1.0, 0.0
      %v3753 = vadd.f32 %v3701, %v3713
      %v3754 = vadd.f32 %v3702, %v3714
      %v3755 = vadd.f32 %v3703, %v3715
      %v3756 = vadd.f32 %v3704, %v3716
      %3761 = vrot.lane.b32.xlu0 %v3725, 127
      %v3762 = vpop.permute.xlu0 %3761
      %3763 = vrot.lane.b32.xlu0 %v3726, 127
      %v3764 = vpop.permute.xlu0 %3763
      %3765 = vrot.lane.b32.xlu0 %v3727, 127
      %v3766 = vpop.permute.xlu0 %3765
      %3767 = vrot.lane.b32.xlu0 %v3728, 127
      %v3768 = vpop.permute.xlu0 %3767
      %v3769 = vsel %vm3148, %v3762, %v3764
      %v3770 = vsel %vm3148, %v3764, %v3766
      %v3771 = vsel %vm3148, %v3766, %v3768
      %v3776 = vadd.f32 %v3753, %v3769
      %v3777 = vadd.f32 %v3754, %v3770
      %v3778 = vadd.f32 %v3755, %v3771
      %v3779 = vadd.f32 %v3756, %v3768
      %3780 = vrot.lane.b32.xlu0 %v976, 109
      %v3781 = vpop.permute.xlu0 %3780
      %3782 = vrot.lane.b32.xlu0 %v980, 109
      %v3783 = vpop.permute.xlu0 %3782
      %3784 = vrot.lane.b32.xlu0 %v984, 109
      %v3785 = vpop.permute.xlu0 %3784
      %v3786 = vsel %vm3300, %v3781, %v3783
      %v3787 = vsel %vm3300, %v3783, %v3785
      %v3792 = vmul.f32 %v3776, %v3781
      %v3793 = vmul.f32 %v3777, %v3786
      %v3794 = vmul.f32 %v3778, %v3787
      %v3795 = vmul.f32 %v3779, %v3785
      %v3800 = vcombine.low %v3792, %v3793
      %v3801 = vcombine.low %v3794, %v3795
      %v3803 = vunpack.c.l.s4 1966171168
      %v3804 = vunpack.c.0.s8 %v3803
      %v3805 = vlaneseq
      %v3806 = vshrl.u32 %v3805, 7
      %v3807 = vsub.s32 %v3804, %v3806
      %v3808 = vrot.slane %v3800, %v3807
      %v3810 = vunpack.c.l.s4 1966171168
      %v3811 = vunpack.c.0.s8 %v3810
      %v3812 = vlaneseq
      %v3813 = vshrl.u32 %v3812, 7
      %v3814 = vsub.s32 %v3811, %v3813
      %v3815 = vrot.slane %v3801, %v3814
      %v3816 = vcombine.low %v3808, %v3815
      %v3818 = vunpack.c.l.s4 1966171168
      %v3819 = vunpack.c.0.s8 %v3818
      %v3820 = vlaneseq
      %v3821 = vshrl.u32 %v3820, 7
      %v3822 = vsub.s32 %v3819, %v3821
      %v3823 = vrot.slane %v3816, %v3822
      %3824 = vrot.lane.b32.xlu0 %v3823, 19
      %v3825 = vpop.permute.xlu0 %3824
      %v3826 = vrot.slane %v3825, 1
      %vm3827 = vcmask 154624
      %v3828 = vsel %vm3827, %v3825, %v3826
      %v3830 = vlaneseq
      %vm3831 = vcmp.ge.s32.totalorder %v3830, 0
      %vm3832 = vcmp.lt.s32.totalorder %v3830, 384
      %vm3833 = vmand %vm3831, %vm3832
      %3834 = vst.msk [vmem:[%s590] sm:$0x7] %vm3833, %v3828
      %v3835 = vadd.f32 %v3733, %v3741
      %v3836 = vadd.f32 %v3734, %v3742
      %v3837 = vadd.f32 %v3735, %v3743
      %v3838 = vadd.f32 %v3736, %v3744
      %3843 = vrot.lane.b32.xlu0 %v3749, 127
      %v3844 = vpop.permute.xlu0 %3843
      %3845 = vrot.lane.b32.xlu0 %v3750, 127
      %v3846 = vpop.permute.xlu0 %3845
      %3847 = vrot.lane.b32.xlu0 %v3751, 127
      %v3848 = vpop.permute.xlu0 %3847
      %3849 = vrot.lane.b32.xlu0 %v3752, 127
      %v3850 = vpop.permute.xlu0 %3849
      %v3851 = vsel %vm3148, %v3844, %v3846
      %v3852 = vsel %vm3148, %v3846, %v3848
      %v3853 = vsel %vm3148, %v3848, %v3850
      %v3858 = vadd.f32 %v3835, %v3851
      %v3859 = vadd.f32 %v3836, %v3852
      %v3860 = vadd.f32 %v3837, %v3853
      %v3861 = vadd.f32 %v3838, %v3850
      %v3862 = vmul.f32 %v3858, %v3781
      %v3863 = vmul.f32 %v3859, %v3786
      %v3864 = vmul.f32 %v3860, %v3787
      %v3865 = vmul.f32 %v3861, %v3785
      %v3870 = vcombine.low %v3862, %v3863
      %v3871 = vcombine.low %v3864, %v3865
      %v3873 = vunpack.c.l.s4 1966171168
      %v3874 = vunpack.c.0.s8 %v3873
      %v3875 = vlaneseq
      %v3876 = vshrl.u32 %v3875, 7
      %v3877 = vsub.s32 %v3874, %v3876
      %v3878 = vrot.slane %v3870, %v3877
      %v3880 = vunpack.c.l.s4 1966171168
      %v3881 = vunpack.c.0.s8 %v3880
      %v3882 = vlaneseq
      %v3883 = vshrl.u32 %v3882, 7
      %v3884 = vsub.s32 %v3881, %v3883
      %v3885 = vrot.slane %v3871, %v3884
      %v3886 = vcombine.low %v3878, %v3885
      %v3888 = vunpack.c.l.s4 1966171168
      %v3889 = vunpack.c.0.s8 %v3888
      %v3890 = vlaneseq
      %v3891 = vshrl.u32 %v3890, 7
      %v3892 = vsub.s32 %v3889, %v3891
      %v3893 = vrot.slane %v3886, %v3892
      %3894 = vrot.lane.b32.xlu0 %v3893, 19
      %v3895 = vpop.permute.xlu0 %3894
      %v3896 = vrot.slane %v3895, 1
      %v3897 = vsel %vm3827, %v3895, %v3896
      %3899 = vst.msk [vmem:[%s594] sm:$0x7] %vm3833, %v3897
      %v3900 = vsub.f32 %v3047, %v3086
      %v3901 = vsub.f32 %v3048, %v3057
      %v3902 = vsub.f32 %v3049, %v3087
      %vm3903 = vcmp.gt.f32.partialorder %v3733, 0.5
      %vm3904 = vcmp.gt.f32.partialorder %v3734, 0.5
      %vm3905 = vcmp.gt.f32.partialorder %v3735, 0.5
      %vm3906 = vcmp.gt.f32.partialorder %v3736, 0.5
      %v3907 = vsub.f32 1.0, %v3701
      %v3908 = vsub.f32 1.0, %v3702
      %v3909 = vsub.f32 1.0, %v3703
      %v3910 = vsub.f32 1.0, %v3704
      %v3911 = vsel %vm3903, %v3701, %v3907
      %v3912 = vsel %vm3904, %v3702, %v3908
      %v3913 = vsel %vm3905, %v3703, %v3909
      %v3914 = vsel %vm3906, %v3704, %v3910
      %v3915 = vlog2.pop %v3911
      %v3916 = vmul.f32 %v3915, 0.6931472
      %v3917 = vlog2.pop %v3912
      %v3918 = vmul.f32 %v3917, 0.6931472
      %v3919 = vlog2.pop %v3913
      %v3920 = vmul.f32 %v3919, 0.6931472
      %v3921 = vlog2.pop %v3914
      %v3922 = vmul.f32 %v3921, 0.6931472
      %v3927 = vcombine.low %v3916, %v3918
      %v3928 = vcombine.low %v3920, %v3922
      %v3930 = vunpack.c.l.s4 1966171168
      %v3931 = vunpack.c.0.s8 %v3930
      %v3932 = vlaneseq
      %v3933 = vshrl.u32 %v3932, 7
      %v3934 = vsub.s32 %v3931, %v3933
      %v3935 = vrot.slane %v3927, %v3934
      %v3937 = vunpack.c.l.s4 1966171168
      %v3938 = vunpack.c.0.s8 %v3937
      %v3939 = vlaneseq
      %v3940 = vshrl.u32 %v3939, 7
      %v3941 = vsub.s32 %v3938, %v3940
      %v3942 = vrot.slane %v3928, %v3941
      %v3943 = vcombine.low %v3935, %v3942
      %v3945 = vunpack.c.l.s4 1966171168
      %v3946 = vunpack.c.0.s8 %v3945
      %v3947 = vlaneseq
      %v3948 = vshrl.u32 %v3947, 7
      %v3949 = vsub.s32 %v3946, %v3948
      %v3950 = vrot.slane %v3943, %v3949
      %3951 = vrot.lane.b32.xlu0 %v3950, 19
      %v3952 = vpop.permute.xlu0 %3951
      %v3953 = vrot.slane %v3952, 1
      %v3954 = vsel %vm3827, %v3952, %v3953
      %v3956 = vmul.f32 %v601, %v3954
      %v3958 = vlaneseq
      %v3959 = vshrl.u32 %v3958, 7
      %v3960 = vsub.s32 0, %v3959
      %v3961 = vrot.slane %v3956, %v3960
      %v3962 = vlaneseq
      %v3963 = vshrl.u32 %v3962, 7
      %v3964 = vsub.s32 1, %v3963
      %v3965 = vrot.slane %v3956, %v3964
      %v3966 = vlaneseq
      %v3967 = vshrl.u32 %v3966, 7
      %v3968 = vsub.s32 2, %v3967
      %v3969 = vrot.slane %v3956, %v3968
      %vm3973 = vcmask 1040384
      %v3974 = vsel %vm3973, %v3961, 0.0
      %v3975 = vsel %vm3973, %v3965, 0.0
      %v3976 = vadd.f32 %v3974, %v3975
      %v3977 = vsel %vm3973, %v3969, 0.0
      %v3978 = vadd.f32 %v3976, %v3977
      %3979 = vadd.xlane.f32.xlu0 %v3978
      %v3980 = vpop.xlane.xlu0 %3979
      %v3981 = vrot.slane %v3980, 4
      %v3982 = vadd.f32 %v3980, %v3981
      %v3983 = vrot.slane %v3982, 2
      %v3984 = vadd.f32 %v3982, %v3983
      %v3985 = vrot.slane %v3984, 1
      %v3986 = vadd.f32 %v3984, %v3985
      %s3987 = vtos %v3986
      %s3988 = ssub.f32 0.0, %s3987
      %vm3989 = vcmp.gt.f32.partialorder %v3741, 0.5
      %vm3990 = vcmp.gt.f32.partialorder %v3742, 0.5
      %vm3991 = vcmp.gt.f32.partialorder %v3743, 0.5
      %vm3992 = vcmp.gt.f32.partialorder %v3744, 0.5
      %v3993 = vsub.f32 1.0, %v3713
      %v3994 = vsub.f32 1.0, %v3714
      %v3995 = vsub.f32 1.0, %v3715
      %v3996 = vsub.f32 1.0, %v3716
      %v3997 = vsel %vm3989, %v3713, %v3993
      %v3998 = vsel %vm3990, %v3714, %v3994
      %v3999 = vsel %vm3991, %v3715, %v3995
      %v4000 = vsel %vm3992, %v3716, %v3996
      %v4001 = vlog2.pop %v3997
      %v4002 = vmul.f32 %v4001, 0.6931472
      %v4003 = vlog2.pop %v3998
      %v4004 = vmul.f32 %v4003, 0.6931472
      %v4005 = vlog2.pop %v3999
      %v4006 = vmul.f32 %v4005, 0.6931472
      %v4007 = vlog2.pop %v4000
      %v4008 = vmul.f32 %v4007, 0.6931472
      %v4013 = vcombine.low %v4002, %v4004
      %v4014 = vcombine.low %v4006, %v4008
      %v4016 = vunpack.c.l.s4 1966171168
      %v4017 = vunpack.c.0.s8 %v4016
      %v4018 = vlaneseq
      %v4019 = vshrl.u32 %v4018, 7
      %v4020 = vsub.s32 %v4017, %v4019
      %v4021 = vrot.slane %v4013, %v4020
      %v4023 = vunpack.c.l.s4 1966171168
      %v4024 = vunpack.c.0.s8 %v4023
      %v4025 = vlaneseq
      %v4026 = vshrl.u32 %v4025, 7
      %v4027 = vsub.s32 %v4024, %v4026
      %v4028 = vrot.slane %v4014, %v4027
      %v4029 = vcombine.low %v4021, %v4028
      %v4031 = vunpack.c.l.s4 1966171168
      %v4032 = vunpack.c.0.s8 %v4031
      %v4033 = vlaneseq
      %v4034 = vshrl.u32 %v4033, 7
      %v4035 = vsub.s32 %v4032, %v4034
      %v4036 = vrot.slane %v4029, %v4035
      %4037 = vrot.lane.b32.xlu0 %v4036, 19
      %v4038 = vpop.permute.xlu0 %4037
      %v4039 = vrot.slane %v4038, 1
      %v4040 = vsel %vm3827, %v4038, %v4039
      %v4042 = vmul.f32 %v601, %v4040
      %v4044 = vlaneseq
      %v4045 = vshrl.u32 %v4044, 7
      %v4046 = vsub.s32 0, %v4045
      %v4047 = vrot.slane %v4042, %v4046
      %v4048 = vlaneseq
      %v4049 = vshrl.u32 %v4048, 7
      %v4050 = vsub.s32 1, %v4049
      %v4051 = vrot.slane %v4042, %v4050
      %v4052 = vlaneseq
      %v4053 = vshrl.u32 %v4052, 7
      %v4054 = vsub.s32 2, %v4053
      %v4055 = vrot.slane %v4042, %v4054
      %v4059 = vsel %vm3973, %v4047, 0.0
      %v4060 = vsel %vm3973, %v4051, 0.0
      %v4061 = vadd.f32 %v4059, %v4060
      %v4062 = vsel %vm3973, %v4055, 0.0
      %v4063 = vadd.f32 %v4061, %v4062
      %4064 = vadd.xlane.f32.xlu0 %v4063
      %v4065 = vpop.xlane.xlu0 %4064
      %v4066 = vrot.slane %v4065, 4
      %v4067 = vadd.f32 %v4065, %v4066
      %v4068 = vrot.slane %v4067, 2
      %v4069 = vadd.f32 %v4067, %v4068
      %v4070 = vrot.slane %v4069, 1
      %v4071 = vadd.f32 %v4069, %v4070
      %s4072 = vtos %v4071
      %s4073 = ssub.f32 0.0, %s4072
      %vm4074 = vcmp.gt.f32.partialorder %v3749, 0.5
      %vm4075 = vcmp.gt.f32.partialorder %v3750, 0.5
      %vm4076 = vcmp.gt.f32.partialorder %v3751, 0.5
      %vm4077 = vcmp.gt.f32.partialorder %v3752, 0.5
      %v4078 = vsub.f32 1.0, %v3725
      %v4079 = vsub.f32 1.0, %v3726
      %v4080 = vsub.f32 1.0, %v3727
      %v4081 = vsub.f32 1.0, %v3728
      %v4082 = vsel %vm4074, %v3725, %v4078
      %v4083 = vsel %vm4075, %v3726, %v4079
      %v4084 = vsel %vm4076, %v3727, %v4080
      %v4085 = vsel %vm4077, %v3728, %v4081
      %v4086 = vlog2.pop %v4082
      %v4087 = vmul.f32 %v4086, 0.6931472
      %v4088 = vlog2.pop %v4083
      %v4089 = vmul.f32 %v4088, 0.6931472
      %v4090 = vlog2.pop %v4084
      %v4091 = vmul.f32 %v4090, 0.6931472
      %v4092 = vlog2.pop %v4085
      %v4093 = vmul.f32 %v4092, 0.6931472
      %v4098 = vcombine.low %v4087, %v4089
      %v4099 = vcombine.low %v4091, %v4093
      %v4101 = vunpack.c.l.s4 1966171168
      %v4102 = vunpack.c.0.s8 %v4101
      %v4103 = vlaneseq
      %v4104 = vshrl.u32 %v4103, 7
      %v4105 = vsub.s32 %v4102, %v4104
      %v4106 = vrot.slane %v4098, %v4105
      %v4108 = vunpack.c.l.s4 1966171168
      %v4109 = vunpack.c.0.s8 %v4108
      %v4110 = vlaneseq
      %v4111 = vshrl.u32 %v4110, 7
      %v4112 = vsub.s32 %v4109, %v4111
      %v4113 = vrot.slane %v4099, %v4112
      %v4114 = vcombine.low %v4106, %v4113
      %v4116 = vunpack.c.l.s4 1966171168
      %v4117 = vunpack.c.0.s8 %v4116
      %v4118 = vlaneseq
      %v4119 = vshrl.u32 %v4118, 7
      %v4120 = vsub.s32 %v4117, %v4119
      %v4121 = vrot.slane %v4114, %v4120
      %4122 = vrot.lane.b32.xlu0 %v4121, 18
      %v4123 = vpop.permute.xlu0 %4122
      %v4124 = vrot.slane %v4123, 1
      %vm4125 = vcmask 146432
      %v4126 = vsel %vm4125, %v4123, %v4124
      %v4128 = vmul.f32 %v601, %v4126
      %v4130 = vlaneseq
      %v4131 = vshrl.u32 %v4130, 7
      %v4132 = vsub.s32 0, %v4131
      %v4133 = vrot.slane %v4128, %v4132
      %v4134 = vlaneseq
      %v4135 = vshrl.u32 %v4134, 7
      %v4136 = vsub.s32 1, %v4135
      %v4137 = vrot.slane %v4128, %v4136
      %v4138 = vlaneseq
      %v4139 = vshrl.u32 %v4138, 7
      %v4140 = vsub.s32 2, %v4139
      %v4141 = vrot.slane %v4128, %v4140
      %v4145 = vsel %vm3973, %v4133, 0.0
      %v4146 = vsel %vm3973, %v4137, 0.0
      %v4147 = vadd.f32 %v4145, %v4146
      %v4148 = vsel %vm3973, %v4141, 0.0
      %v4149 = vadd.f32 %v4147, %v4148
      %4150 = vadd.xlane.f32.xlu0 %v4149
      %v4151 = vpop.xlane.xlu0 %4150
      %v4152 = vrot.slane %v4151, 4
      %v4153 = vadd.f32 %v4151, %v4152
      %v4154 = vrot.slane %v4153, 2
      %v4155 = vadd.f32 %v4153, %v4154
      %v4156 = vrot.slane %v4155, 1
      %v4157 = vadd.f32 %v4155, %v4156
      %s4158 = vtos %v4157
      %s4159 = ssub.f32 0.0, %s4158
      %v4160 = vmul.f32 %v3900, %v3900
      %v4161 = vmul.f32 %v3901, %v3901
      %v4162 = vmul.f32 %v3902, %v3902
      %v4163 = vsel %vm3059, %v4160, 0.0
      %v4164 = vsel %vm3059, %v4161, 0.0
      %v4165 = vadd.f32 %v4163, %v4164
      %v4166 = vsel %vm3059, %v4162, 0.0
      %v4167 = vadd.f32 %v4165, %v4166
      %4168 = vadd.xlane.f32.xlu0 %v4167
      %v4169 = vpop.xlane.xlu0 %4168
      %v4170 = vrot.slane %v4169, 4
      %v4171 = vadd.f32 %v4169, %v4170
      %v4172 = vrot.slane %v4171, 2
      %v4173 = vadd.f32 %v4171, %v4172
      %v4174 = vrot.slane %v4173, 1
      %v4175 = vadd.f32 %v4173, %v4174
      %s4176 = vtos %v4175
      %v4177 = vadd.f32 %v3060, %v3067
      %v4178 = vadd.f32 %v4177, %v3074
      %4179 = vadd.xlane.f32.xlu0 %v4178
      %v4180 = vpop.xlane.xlu0 %4179
      %v4181 = vrot.slane %v4180, 4
      %v4182 = vadd.f32 %v4180, %v4181
      %v4183 = vrot.slane %v4182, 2
      %v4184 = vadd.f32 %v4182, %v4183
      %v4185 = vrot.slane %v4184, 1
      %v4186 = vadd.f32 %v4184, %v4185
      %s4187 = vtos %v4186
      %v4188 = vrot.slane %v3056, 4
      %v4189 = vrot.slane %v3057, 4
      %v4190 = vsel %vm736, %v4188, %v4189
      %v4193 = vcombine.high %v4190, %v4190
      %v4195 = vsel %vm3059, %v4190, 0.0
      %v4196 = vsel %vm3059, %v4193, 0.0
      %v4197 = vadd.f32 %v4195, %v4196
      %v4198 = vsel %vm3059, %v4189, 0.0
      %v4199 = vadd.f32 %v4197, %v4198
      %4200 = vadd.xlane.f32.xlu0 %v4199
      %v4201 = vpop.xlane.xlu0 %4200
      %v4202 = vrot.slane %v4201, 4
      %v4203 = vadd.f32 %v4201, %v4202
      %v4204 = vrot.slane %v4203, 2
      %v4205 = vadd.f32 %v4203, %v4204
      %v4206 = vrot.slane %v4205, 1
      %v4207 = vadd.f32 %v4205, %v4206
      %s4208 = vtos %v4207
      %v4209 = vmul.f32 %v3047, %v3047
      %v4210 = vmul.f32 %v3048, %v3048
      %v4211 = vmul.f32 %v3049, %v3049
      %v4212 = vsel %vm3059, %v4209, 0.0
      %v4213 = vsel %vm3059, %v4210, 0.0
      %v4214 = vadd.f32 %v4212, %v4213
      %v4215 = vsel %vm3059, %v4211, 0.0
      %v4216 = vadd.f32 %v4214, %v4215
      %4217 = vadd.xlane.f32.xlu0 %v4216
      %v4218 = vpop.xlane.xlu0 %4217
      %v4219 = vrot.slane %v4218, 4
      %v4220 = vadd.f32 %v4218, %v4219
      %v4221 = vrot.slane %v4220, 2
      %v4222 = vadd.f32 %v4220, %v4221
      %v4223 = vrot.slane %v4222, 1
      %v4224 = vadd.f32 %v4222, %v4223
      %s4225 = vtos %v4224
      %v4226 = vmul.f32 %v4190, %v4190
      %v4227 = vmul.f32 %v4189, %v4189
      %v4229 = vcombine.high %v4226, %v4226
      %v4231 = vsel %vm3059, %v4226, 0.0
      %v4232 = vsel %vm3059, %v4229, 0.0
      %v4233 = vadd.f32 %v4231, %v4232
      %v4234 = vsel %vm3059, %v4227, 0.0
      %v4235 = vadd.f32 %v4233, %v4234
      %4236 = vadd.xlane.f32.xlu0 %v4235
      %v4237 = vpop.xlane.xlu0 %4236
      %v4238 = vrot.slane %v4237, 4
      %v4239 = vadd.f32 %v4237, %v4238
      %v4240 = vrot.slane %v4239, 2
      %v4241 = vadd.f32 %v4239, %v4240
      %v4242 = vrot.slane %v4241, 1
      %v4243 = vadd.f32 %v4241, %v4242
      %s4244 = vtos %v4243
      %v4245 = vmul.f32 %v3047, %v3086
      %v4246 = vmul.f32 %v3048, %v3057
      %v4247 = vmul.f32 %v3049, %v3087
      %v4248 = vsel %vm3059, %v4245, 0.0
      %v4249 = vsel %vm3059, %v4246, 0.0
      %v4250 = vadd.f32 %v4248, %v4249
      %v4251 = vsel %vm3059, %v4247, 0.0
      %v4252 = vadd.f32 %v4250, %v4251
      %4253 = vadd.xlane.f32.xlu0 %v4252
      %v4254 = vpop.xlane.xlu0 %4253
      %v4255 = vrot.slane %v4254, 4
      %v4256 = vadd.f32 %v4254, %v4255
      %v4257 = vrot.slane %v4256, 2
      %v4258 = vadd.f32 %v4256, %v4257
      %v4259 = vrot.slane %v4258, 1
      %v4260 = vadd.f32 %v4258, %v4259
      %s4261 = vtos %v4260
      %v4262 = vlaneseq
      %v4263 = vand.u32 %v4262, 127
      %vm4264 = vcmp.eq.s32.totalorder %v4263, 0
      %v4265 = vstv %s3988
      %v4266 = vsel %vm4264, %v4265, 0.0
      %v4267 = vadd.f32 %v4266, 0.0
      %vm4268 = vcmp.eq.s32.totalorder %v4263, 1
      %v4269 = vstv %s4073
      %v4270 = vsel %vm4268, %v4269, 0.0
      %v4271 = vadd.f32 %v4267, %v4270
      %vm4272 = vcmp.eq.s32.totalorder %v4263, 2
      %v4273 = vstv %s4159
      %v4274 = vsel %vm4272, %v4273, 0.0
      %v4275 = vadd.f32 %v4271, %v4274
      %vm4276 = vcmp.eq.s32.totalorder %v4263, 3
      %v4277 = vstv %s4176
      %v4278 = vsel %vm4276, %v4277, 0.0
      %v4279 = vadd.f32 %v4275, %v4278
      %vm4280 = vcmp.eq.s32.totalorder %v4263, 4
      %v4281 = vstv %s4187
      %v4282 = vsel %vm4280, %v4281, 0.0
      %v4283 = vadd.f32 %v4279, %v4282
      %vm4284 = vcmp.eq.s32.totalorder %v4263, 5
      %v4285 = vstv %s4208
      %v4286 = vsel %vm4284, %v4285, 0.0
      %v4287 = vadd.f32 %v4283, %v4286
      %vm4288 = vcmp.eq.s32.totalorder %v4263, 6
      %v4289 = vstv %s4225
      %v4290 = vsel %vm4288, %v4289, 0.0
      %v4291 = vadd.f32 %v4287, %v4290
      %vm4292 = vcmp.eq.s32.totalorder %v4263, 7
      %v4293 = vstv %s4244
      %v4294 = vsel %vm4292, %v4293, 0.0
      %v4295 = vadd.f32 %v4291, %v4294
      %vm4296 = vcmp.eq.s32.totalorder %v4263, 8
      %v4297 = vstv %s4261
      %v4298 = vsel %vm4296, %v4297, 0.0
      %v4299 = vadd.f32 %v4295, %v4298
      %4300 = vst [vmem:[%s597] sm:$0x1] %v4299
      %p4301 = scmp.lt.s32.totalorder %s29, 1
      %s4302 = scalar_select %p4301, %s29, 1
      %s4303 = smul.addr %s4302, 3
      %s4304 = smul.addr %s4303, 4
      %s4305 = scalar_lea.vmem %s14, %s4304
      %p4306 = scmp.lt.s32.totalorder %s29, 1
      %s4307 = scalar_select %p4306, %s29, 1
      %s4308 = smul.addr %s4307, 3
      %s4309 = scalar_lea.vmem %s15, %s4308
      %p4310 = scmp.lt.s32.totalorder %s29, 1
      %s4311 = scalar_select %p4310, %s29, 1
      %s4312 = smul.addr %s4311, 3
      %s4313 = scalar_lea.vmem %s16, %s4312
      %p4314 = scmp.lt.s32.totalorder %s29, 1
      %s4315 = scalar_select %p4314, %s29, 1
      %s4316 = scalar_lea.vmem %s17, %s4315
      // Predicated region
      $region77: #{_lambda_.1} parent=75 // pred_check
        %p4317 = pneg %p351
      $region78: #{_lambda_.1} parent=75 // pred_check_branch
        %4319 = sbr.rel (%p4317) target = $region80
      $region79: #{_lambda_.1} parent=75 // pred_region
        _
      $region80: #{_lambda_.1} parent=75 // pred_fallthru
        _
      // Predicated region
      $region81: #{_lambda_.1} parent=75 // pred_check
        %p4320 = pneg %p377
      $region82: #{_lambda_.1} parent=75 // pred_check_branch
        %4322 = sbr.rel (%p4320) target = $region84
      $region83: #{_lambda_.1} parent=75 // pred_region
        _
      $region84: #{_lambda_.1} parent=75 // pred_fallthru
        _
      // Predicated region
      $region85: #{_lambda_.1} parent=75 // pred_check
        %p4323 = pneg %p403
      $region86: #{_lambda_.1} parent=75 // pred_check_branch
        %4325 = sbr.rel (%p4323) target = $region88
      $region87: #{_lambda_.1} parent=75 // pred_region
        _
      $region88: #{_lambda_.1} parent=75 // pred_fallthru
        _
      // Predicated region
      $region89: #{_lambda_.1} parent=75 // pred_check
        %p4326 = pneg %p429
      $region90: #{_lambda_.1} parent=75 // pred_check_branch
        %4328 = sbr.rel (%p4326) target = $region92
      $region91: #{_lambda_.1} parent=75 // pred_region
        _
      $region92: #{_lambda_.1} parent=75 // pred_fallthru
        _
    $region76: #{_lambda_.1} parent=5 // pred_fallthru
      _
    %p4329 = scmp.le.s32.totalorder 2, %s24
    // Predicated region
    $region93: #{_lambda_.1} parent=5 // pred_check
      %p4330 = pneg %p4329
    $region94: #{_lambda_.1} parent=5 // pred_check_branch
      %4332 = sbr.rel (%p4330) target = $region96
    $region95: #{_lambda_.1} parent=5 // pred_region
      %s4333 = ssub.s32 %s24, 2
      // Predicated region
      $region97: #{_lambda_.1} parent=95 // pred_check
        %p4334 = pneg %p357
      $region98: #{_lambda_.1} parent=95 // pred_check_branch
        %4336 = sbr.rel (%p4334) target = $region100
      $region99: #{_lambda_.1} parent=95 // pred_region
        %p4337 = scmp.lt.s32.totalorder %s30, 1
        %s4338 = scalar_select %p4337, %s30, 1
        %s4339 = smul.addr %s4338, 3
        %s4340 = smul.addr %s4339, 4
        %s4341 = scalar_lea.vmem %s14, %s4340
      $region100: #{_lambda_.1} parent=95 // pred_fallthru
        _
      // Predicated region
      $region101: #{_lambda_.1} parent=95 // pred_check
        %p4342 = pneg %p383
      $region102: #{_lambda_.1} parent=95 // pred_check_branch
        %4344 = sbr.rel (%p4342) target = $region104
      $region103: #{_lambda_.1} parent=95 // pred_region
        %p4345 = scmp.lt.s32.totalorder %s30, 1
        %s4346 = scalar_select %p4345, %s30, 1
        %s4347 = smul.addr %s4346, 3
        %s4348 = scalar_lea.vmem %s15, %s4347
      $region104: #{_lambda_.1} parent=95 // pred_fallthru
        _
      // Predicated region
      $region105: #{_lambda_.1} parent=95 // pred_check
        %p4349 = pneg %p409
      $region106: #{_lambda_.1} parent=95 // pred_check_branch
        %4351 = sbr.rel (%p4349) target = $region108
      $region107: #{_lambda_.1} parent=95 // pred_region
        %p4352 = scmp.lt.s32.totalorder %s30, 1
        %s4353 = scalar_select %p4352, %s30, 1
        %s4354 = smul.addr %s4353, 3
        %s4355 = scalar_lea.vmem %s16, %s4354
      $region108: #{_lambda_.1} parent=95 // pred_fallthru
        _
      // Predicated region
      $region109: #{_lambda_.1} parent=95 // pred_check
        %p4356 = pneg %p435
      $region110: #{_lambda_.1} parent=95 // pred_check_branch
        %4358 = sbr.rel (%p4356) target = $region112
      $region111: #{_lambda_.1} parent=95 // pred_region
        %p4359 = scmp.lt.s32.totalorder %s30, 1
        %s4360 = scalar_select %p4359, %s30, 1
        %s4361 = scalar_lea.vmem %s17, %s4360
      $region112: #{_lambda_.1} parent=95 // pred_fallthru
        _
    $region96: #{_lambda_.1} parent=5 // pred_fallthru
      _
  $region6: #{_lambda_.1} parent=0 // loop_footer
    %s28 = sadd.s32 1, %s24
  $region7: #{_lambda_.1} parent=0 // loop_footer_branch
    %23 = sbr.rel target = $region3
  $region8: #{_lambda_.1} parent=0 // loop_exit
    _

</llo_original>
